<compile_context>
chip_gen: v7x
topology: tpu7x:2x2x1
jax: 0.10.0
libtpu: 0.0.40
codegen_flags: <defaults>
</compile_context>

<pallas_src>
import math

import jax
import jax.numpy as jnp
from jax.experimental import pallas as pl
from jax.experimental.pallas import tpu as pltpu


def _round_up(x, m):
    return ((x + m - 1) // m) * m


def _fourier_embed_kernel(cam_ref, const_ref, out_ref):
    # cam_ref:   [tile_n, 1]  camera ids (one scalar per row)
    # const_ref: [2, E]       row 0 = 2*pi*b, row 1 = a / ||a||
    # out_ref:   [tile_n, 2E]
    E = const_ref.shape[1]

    b2pi = const_ref[0:1, :]       # [1, E]
    a_scaled = const_ref[1:2, :]   # [1, E]

    # VPU broadcast multiply: [tile_n, 1] * [1, E] -> [tile_n, E] (no K=1 MXU).
    phase = cam_ref[...] * b2pi

    # sin/cos on the EUP; E % 128 == 0 => both half-stores are unmasked,
    # lane-dense vst.
    out_ref[:, :E] = (a_scaled * jnp.sin(phase)).astype(out_ref.dtype)
    out_ref[:, E:] = (a_scaled * jnp.cos(phase)).astype(out_ref.dtype)


def fourier_embedding(cam_id, b, a, *, tile_n_max=1024, out_dtype=jnp.float32,
                      min_pallas_rows=128):
    """cam_id: [..., 1] f32, b: [E, 1] f32, a: [E] f32 -> [..., 2E]."""
    cam_id = jnp.asarray(cam_id, jnp.float32)
    assert cam_id.shape[-1] == 1, "cam_id must have a trailing singleton dim"
    E = b.shape[0]
    assert E % 128 == 0, "embed_dim must be a multiple of 128 for lane-dense half-stores"

    lead_shape = cam_id.shape[:-1]
    N = math.prod(lead_shape) if lead_shape else 1
    cam_flat = cam_id.reshape(N, 1)

    # Fold all frozen-parameter work (2*pi*b, a/||a||) into a single [2, E]
    # constant slab -> one DMA / one BlockSpec.
    b2pi = ((2.0 * math.pi) * b.reshape(1, E)).astype(jnp.float32)           # [1, E]
    a_scaled = (a.reshape(1, E) / jnp.linalg.norm(a)).astype(jnp.float32)    # [1, E]

    if N < min_pallas_rows:
        # Launch-overhead-bound regime: plain jnp (fused by XLA / consumer).
        phase = cam_flat * b2pi
        out = jnp.concatenate(
            [a_scaled * jnp.sin(phase), a_scaled * jnp.cos(phase)], axis=-1
        ).astype(out_dtype)
        return out.reshape(*lead_shape, 2 * E)

    consts = jnp.concatenate([b2pi, a_scaled], axis=0)                       # [2, E]

    # Row tiling: >=2 grid steps when possible (v7x megacore), multiple of 8,
    # capped so double-buffered blocks stay inside the default scoped VMEM.
    tile_n = max(8, min(tile_n_max, _round_up(pl.cdiv(N, 2), 8)))
    grid = (pl.cdiv(N, tile_n),)

    out_bytes = jnp.dtype(out_dtype).itemsize
    cost = pl.CostEstimate(
        flops=6 * N * E,
        transcendentals=2 * N * E,
        bytes_accessed=4 * N + 8 * E + out_bytes * 2 * N * E,
    )

    out = pl.pallas_call(
        _fourier_embed_kernel,
        out_shape=jax.ShapeDtypeStruct((N, 2 * E), out_dtype),
        grid=grid,
        in_specs=[
            pl.BlockSpec((tile_n, 1), lambda i: (i, 0)),
            pl.BlockSpec((2, E), lambda i: (0, 0)),
        ],
        out_specs=pl.BlockSpec((tile_n, 2 * E), lambda i: (i, 0)),
        compiler_params=pltpu.CompilerParams(
            dimension_semantics=("parallel",),
        ),
        cost_estimate=cost,
    )(cam_flat, consts)

    return out.reshape(*lead_shape, 2 * E)


def fourier_embedding_ref(cam_id, b, a):
    proj = cam_id @ b.T  # [N, E]
    phase = 2.0 * math.pi * proj
    out = jnp.concatenate([a * jnp.sin(phase), a * jnp.cos(phase)], axis=-1)
    return out / jnp.linalg.norm(a)


if __name__ == "__main__":
    embed_dim = 256
    scale = 10.0

    key = jax.random.PRNGKey(0)
    kb, kc1, kc2 = jax.random.split(key, 3)

    # Deterministic parameter init (matches shapes of the PyTorch module).
    b = (scale * jax.random.normal(kb, (embed_dim, 1))).astype(jnp.float32)
    a = jnp.ones((embed_dim,), dtype=jnp.float32)

    # Pallas path: N not tile-aligned -> 2 grid steps, ragged last block.
    N_big = 200
    cam_big = jax.random.uniform(kc1, (N_big, 1), dtype=jnp.float32)
    out_big = jax.block_until_ready(fourier_embedding(cam_big, b, a))
    ref_big = fourier_embedding_ref(cam_big, b, a)
    assert out_big.shape == (N_big, 2 * embed_dim)
    assert jnp.allclose(out_big, ref_big, atol=1e-5, rtol=1e-5)

    # Tiny-N fallback path (launch-overhead bound -> plain jnp).
    N_small = 8
    cam_small = jax.random.uniform(kc2, (N_small, 1), dtype=jnp.float32)
    out_small = jax.block_until_ready(fourier_embedding(cam_small, b, a))
    ref_small = fourier_embedding_ref(cam_small, b, a)
    assert out_small.shape == (N_small, 2 * embed_dim)
    assert jnp.allclose(out_small, ref_small, atol=1e-5, rtol=1e-5)

    print("KERNEL_OK")
</pallas_src>

<mosaic_0001>
module attributes {stable_mosaic.version = 11 : i64} {
  func.func @_fourier_embed_kernel(%arg0: i32, %arg1: memref<104x1xf32, #tpu.memory_space<vmem>>, %arg2: memref<2x256xf32, #tpu.memory_space<vmem>>, %arg3: memref<104x512xf32, #tpu.memory_space<vmem>>) attributes {dimension_semantics = [#tpu.dimension_semantics<parallel>], iteration_bounds = array<i64: 2>, scalar_prefetch = 0 : i64, scratch_operands = 0 : i64, tpu.core_type = #tpu.core_type<tc>, window_params = [{transform_indices = @transform_0, window_bounds = array<i64: 104, 1>}, {pipeline_mode = #tpu.pipeline_mode<synchronous>, transform_indices = @transform_1, window_bounds = array<i64: 2, 256>}, {transform_indices = @transform_2, window_bounds = array<i64: 104, 512>}]} {
    %c0 = arith.constant 0 : index
    %c0_0 = arith.constant 0 : index
    %0 = vector.load %arg2[%c0, %c0_0] : memref<2x256xf32, #tpu.memory_space<vmem>>, vector<1x256xf32>
    %c1 = arith.constant 1 : index
    %c0_1 = arith.constant 0 : index
    %1 = vector.load %arg2[%c1, %c0_1] : memref<2x256xf32, #tpu.memory_space<vmem>>, vector<1x256xf32>
    %c0_2 = arith.constant 0 : index
    %c0_3 = arith.constant 0 : index
    %2 = vector.load %arg1[%c0_2, %c0_3] : memref<104x1xf32, #tpu.memory_space<vmem>>, vector<104x1xf32>
    %3 = vector.broadcast %2 : vector<104x1xf32> to vector<104x256xf32>
    %4 = vector.broadcast %0 : vector<1x256xf32> to vector<104x256xf32>
    %5 = arith.mulf %3, %4 : vector<104x256xf32>
    %6 = math.sin %5 : vector<104x256xf32>
    %7 = vector.broadcast %1 : vector<1x256xf32> to vector<104x256xf32>
    %8 = arith.mulf %7, %6 : vector<104x256xf32>
    %c0_4 = arith.constant 0 : index
    %c0_5 = arith.constant 0 : index
    %9 = vector.load %arg3[%c0_4, %c0_5] : memref<104x512xf32, #tpu.memory_space<vmem>>, vector<104x256xf32>
    tpu.vector_store %arg3[%c0_4, %c0_5], %8 {strides = array<i32>} : memref<104x512xf32, #tpu.memory_space<vmem>>, vector<104x256xf32>,
    %10 = math.cos %5 : vector<104x256xf32>
    %11 = vector.broadcast %1 : vector<1x256xf32> to vector<104x256xf32>
    %12 = arith.mulf %11, %10 : vector<104x256xf32>
    %c0_6 = arith.constant 0 : index
    %c256 = arith.constant 256 : index
    %13 = vector.load %arg3[%c0_6, %c256] : memref<104x512xf32, #tpu.memory_space<vmem>>, vector<104x256xf32>
    tpu.vector_store %arg3[%c0_6, %c256], %12 {strides = array<i32>} : memref<104x512xf32, #tpu.memory_space<vmem>>, vector<104x256xf32>,
    return
  }
  func.func @transform_0(%arg0: i32) -> (i32, i32) {
    %c0_i32 = arith.constant 0 : i32
    %c0_i32_0 = arith.constant 0 : i32
    return %arg0, %c0_i32 : i32, i32
  }
  func.func @transform_1(%arg0: i32) -> (i32, i32) {
    %c0_i32 = arith.constant 0 : i32
    %c0_i32_0 = arith.constant 0 : i32
    %c0_i32_1 = arith.constant 0 : i32
    return %c0_i32, %c0_i32_0 : i32, i32
  }
  func.func @transform_2(%arg0: i32) -> (i32, i32) {
    %c0_i32 = arith.constant 0 : i32
    %c0_i32_0 = arith.constant 0 : i32
    return %arg0, %c0_i32 : i32, i32
  }
}

</mosaic_0001>

<llo_original>
// kernel: tpu_custom_call.1
$region0: #{tpu_custom_call.1}
  #allocation0 [shape = 'u32[]', space=smem, size = 0x4, offset = 0x4, fixed_abs, tag = 'smem constant byte address 0x4 - core index']
  #allocation1 [shape = 'u32[144,128]{1,0:T(1,128)}', space=vmem, size = 0x12000, scoped, tag = 'internal scratch']
  %s0 = inlined_call_operand.vmem [shape: f32[200,1], index: 0, kind: input, shape index: {}]
  %s1 = inlined_call_operand.vmem [shape: f32[2,256], index: 1, kind: input, shape index: {}]
  %s2 = inlined_call_operand.hbm [shape: f32[200,512], index: 2, kind: output, shape index: {}]
  %s3 = sld [smem:[#allocation0]]
  $region41: #{tpu_custom_call.1} parent=0
    _
  %s5 = ssub.s32 1, %s3
  %s6 = scalar_select 0, %s5, %s3
  $region1: #{tpu_custom_call.1} parent=0
    #allocation2 [shape = 'u8[425984]{0}', space=vmem, size = 0x68000, scoped, tag = 'output window, operand 0']
    #allocation3 [shape = 's32[2]{0}', space=sflag, size = 0x8, scoped, tag = 'scoped memory for tpu_custom_call.1']
    %7 = vsyncpa [#allocation3], 0
    %s8 = scalar_lea.sflag [#allocation3], 1
    %9 = vsyncpa %s8, 0
    loop: start=0, step=1, limit=4
    $region2: #{tpu_custom_call.1} parent=1 // loop_pre_header
      _
    $region3: #{tpu_custom_call.1} parent=1 // loop_header
      %s11 = sphi 0, %s15
      %p12 = scmp.ge.s32.totalorder %s11, 4
      %s21 = sphi 0, %s23
      %s24 = sphi 0, %s21
      %s25 = sphi 0, %s24
      %s41 = sphi 0, %s25
      %s45 = sphi 0, %s45
      %s47 = sphi 0, %s45
      %s48 = sphi 0, %s47
      %s62 = sphi 0, %s48
      %s68 = sphi 0, %s70
      %s71 = sphi 0, %s68
      %s72 = sphi 0, %s71
      %s88 = sphi 0, %s72
    $region4: #{tpu_custom_call.1} parent=1 // loop_header_branch
      %14 = sbr.rel (%p12) target = $region8
    $region5: #{tpu_custom_call.1} parent=1 // loop_body
      %s16 = ssub.s32 %s11, 1
      %s17 = ssub.s32 %s11, 2
      %s18 = sadd.s32 %s11, 1
      %s19 = ssub.s32 %s11, %s18
      %p20 = scmp.eq.s32.totalorder %s19, 0
      %s22 = sadd.s32 %s21, 1
      %s23 = scalar_select %p20, %s21, %s22
      %p26 = pneg %p20
      %p27 = scmp.eq.s32.totalorder %s11, 1
      %p28 = por %p26, %p27
      %p29 = scmp.ne.s32.totalorder %s21, %s24
      %p30 = scmp.eq.s32.totalorder %s11, 0
      %p31 = por %p29, %p30
      %p32 = scmp.ne.s32.totalorder %s21, %s24
      %p33 = scmp.eq.s32.totalorder %s16, 1
      %p34 = por %p32, %p33
      %p35 = scmp.ne.s32.totalorder %s24, %s25
      %p36 = scmp.eq.s32.totalorder %s16, 0
      %p37 = por %p35, %p36
      %p38 = scmp.ne.s32.totalorder %s24, %s25
      %p39 = scmp.eq.s32.totalorder %s17, 1
      %p40 = por %p38, %p39
      %p42 = scmp.ne.s32.totalorder %s25, %s41
      %p43 = scmp.eq.s32.totalorder %s17, 0
      %p44 = por %p42, %p43
      %s46 = sadd.s32 %s45, 1
      %p49 = scmp.eq.s32.totalorder %s11, 1
      %p50 = scmp.ne.s32.totalorder %s45, %s47
      %p51 = scmp.eq.s32.totalorder %s11, 0
      %p52 = por %p50, %p51
      %p53 = scmp.ne.s32.totalorder %s45, %s47
      %p54 = scmp.eq.s32.totalorder %s16, 1
      %p55 = por %p53, %p54
      %p56 = scmp.ne.s32.totalorder %s47, %s48
      %p57 = scmp.eq.s32.totalorder %s16, 0
      %p58 = por %p56, %p57
      %p59 = scmp.ne.s32.totalorder %s47, %s48
      %p60 = scmp.eq.s32.totalorder %s17, 1
      %p61 = por %p59, %p60
      %p63 = scmp.ne.s32.totalorder %s48, %s62
      %p64 = scmp.eq.s32.totalorder %s17, 0
      %p65 = por %p63, %p64
      %s66 = ssub.s32 %s11, %s18
      %p67 = scmp.eq.s32.totalorder %s66, 0
      %s69 = sadd.s32 %s68, 1
      %s70 = scalar_select %p67, %s68, %s69
      %p73 = pneg %p67
      %p74 = scmp.eq.s32.totalorder %s11, 1
      %p75 = por %p73, %p74
      %p76 = scmp.ne.s32.totalorder %s68, %s71
      %p77 = scmp.eq.s32.totalorder %s11, 0
      %p78 = por %p76, %p77
      %p79 = scmp.ne.s32.totalorder %s68, %s71
      %p80 = scmp.eq.s32.totalorder %s16, 1
      %p81 = por %p79, %p80
      %p82 = scmp.ne.s32.totalorder %s71, %s72
      %p83 = scmp.eq.s32.totalorder %s16, 0
      %p84 = por %p82, %p83
      %p85 = scmp.ne.s32.totalorder %s71, %s72
      %p86 = scmp.eq.s32.totalorder %s17, 1
      %p87 = por %p85, %p86
      %p89 = scmp.ne.s32.totalorder %s72, %s88
      %p90 = scmp.eq.s32.totalorder %s17, 0
      %p91 = por %p89, %p90
      %p92 = scmp.le.s32.totalorder 1, %s11
      %p93 = scmp.lt.s32.totalorder %s11, 3
      %p94 = pnand %p92, %p93
      %p95 = pneg %p94
      // Predicated region
      $region9: #{tpu_custom_call.1} parent=5 // pred_check
        _
      $region10: #{tpu_custom_call.1} parent=5 // pred_check_branch
        %97 = sbr.rel (%p94) target = $region12
      $region11: #{tpu_custom_call.1} parent=5 // pred_region
        %s98 = ssub.s32 %s11, 1
        // Predicated region
        $region13: #{tpu_custom_call.1} parent=11 // pred_check
          %p99 = pneg %p58
        $region14: #{tpu_custom_call.1} parent=11 // pred_check_branch
          %101 = sbr.rel (%p99) target = $region16
        $region15: #{tpu_custom_call.1} parent=11 // pred_region
          _
        $region16: #{tpu_custom_call.1} parent=11 // pred_fallthru
          _
      $region12: #{tpu_custom_call.1} parent=5 // pred_fallthru
        _
      %p102 = scmp.lt.s32.totalorder %s11, 2
      // Predicated region
      $region17: #{tpu_custom_call.1} parent=5 // pred_check
        %p103 = pneg %p102
      $region18: #{tpu_custom_call.1} parent=5 // pred_check_branch
        %105 = sbr.rel (%p103) target = $region20
      $region19: #{tpu_custom_call.1} parent=5 // pred_region
        // Predicated region
        $region21: #{tpu_custom_call.1} parent=19 // pred_check
          %p106 = pneg %p31
        $region22: #{tpu_custom_call.1} parent=19 // pred_check_branch
          %108 = sbr.rel (%p106) target = $region24
        $region23: #{tpu_custom_call.1} parent=19 // pred_region
          %s109 = smul.u32 13, %s11
          %s110 = ssub.s32 25, %s109
          %p111 = scmp.lt.s32.totalorder %s110, 13
          %s112 = scalar_select %p111, %s110, 13
          %s113 = smul.u32 128, %s112
          %p114 = scmp.lt.s32.totalorder %s109, 24
          %s115 = scalar_select %p114, %s109, 24
          %s116 = smul.addr %s115, 8
          %s117 = scalar_lea.vmem %s0, %s116
          %s118 = smul.u32 13, %s11
          %s119 = ssub.s32 25, %s118
          %p120 = scmp.lt.s32.totalorder %s119, 13
          %s121 = scalar_select %p120, %s119, 13
          %s122 = smul.u32 128, %s121
        $region24: #{tpu_custom_call.1} parent=19 // pred_fallthru
          _
      $region20: #{tpu_custom_call.1} parent=5 // pred_fallthru
        _
      %p123 = scmp.le.s32.totalorder 1, %s11
      %p124 = scmp.lt.s32.totalorder %s11, 3
      %p125 = pnand %p123, %p124
      %p126 = pneg %p125
      // Predicated region
      $region25: #{tpu_custom_call.1} parent=5 // pred_check
        _
      $region26: #{tpu_custom_call.1} parent=5 // pred_check_branch
        %128 = sbr.rel (%p125) target = $region28
      $region27: #{tpu_custom_call.1} parent=5 // pred_region
        %s129 = ssub.s32 %s11, 1
        %s130 = smul.u32 13, %s16
        %s131 = ssub.s32 25, %s130
        %p132 = scmp.lt.s32.totalorder %s131, 13
        %s133 = scalar_select %p132, %s131, 13
        %s134 = smul.u32 128, %s133
        %p135 = scmp.lt.s32.totalorder %s130, 24
        %s136 = scalar_select %p135, %s130, 24
        %s137 = smul.addr %s136, 8
        %s138 = scalar_lea.vmem %s0, %s137
        %p139 = pneg %p37
        %p140 = pneg %p34
        %p141 = pneg %p58
        %p142 = pneg %p55
        %p143 = pneg %p84
        %p144 = pneg %p81
        %s145 = sand.u32 %s71, 1
        %s146 = scalar_lea.sflag [#allocation3], %s145
        %s147 = sand.u32 %s71, 1
        %s148 = smul.addr %s147, 416
        %s149 = scalar_lea.vmem [#allocation2], %s148
        %s150 = smul.u32 13, %s16
        %s151 = ssub.s32 25, %s150
        %p152 = scmp.lt.s32.totalorder %s151, 13
        %s153 = scalar_select %p152, %s151, 13
        %s154 = smul.u32 128, %s153
        %p155 = scmp.lt.s32.totalorder %s150, 24
        %s156 = scalar_select %p155, %s150, 24
        %s157 = smul.addr %s156, 8
        %s158 = scalar_lea.vmem %s0, %s157
        %s159 = smul.u32 13, %s16
        %s160 = ssub.s32 25, %s159
        %p161 = scmp.lt.s32.totalorder %s160, 13
        %s162 = scalar_select %p161, %s160, 13
        %s163 = smul.u32 128, %s162
        %s164 = smul.u32 13, %s16
        %s165 = ssub.s32 25, %s164
        %p166 = scmp.lt.s32.totalorder %s165, 13
        %s167 = scalar_select %p166, %s165, 13
        %s168 = smul.u32 128, %s167
        %s169 = smul.u32 %s168, 4
        %v170 = vld [vmem:[%s1] ss:$2 sm:$0x3]
        %s171 = scalar_lea.vmem %s1, 1
        %v172 = vld [vmem:[%s171] ss:$2 sm:$0x3]
        %v173 = vld [vmem:[%s158] sm:$0xff]
        %v174 = vld [vmem:[%s158 + $0x8] sm:$0xff]
        %v175 = vld [vmem:[%s158 + $0x10] sm:$0xff]
        %v176 = vld [vmem:[%s158 + $0x18] sm:$0xff]
        %v177 = vld [vmem:[%s158 + $0x20] sm:$0xff]
        %v178 = vld [vmem:[%s158 + $0x28] sm:$0xff]
        %v179 = vld [vmem:[%s158 + $0x30] sm:$0xff]
        %v180 = vld [vmem:[%s158 + $0x38] sm:$0xff]
        %v181 = vld [vmem:[%s158 + $0x40] sm:$0xff]
        %v182 = vld [vmem:[%s158 + $0x48] sm:$0xff]
        %v183 = vld [vmem:[%s158 + $0x50] sm:$0xff]
        %v184 = vld [vmem:[%s158 + $0x58] sm:$0xff]
        %v185 = vld [vmem:[%s158 + $0x60] sm:$0xff]
        %187 = vset.pattern.permute.xlu0 0
        %188 = vperm.xlu0 %187, %v173
        %v189 = vpop.permute.xlu0 %188
        %192 = vset.pattern.permute.xlu0 0
        %193 = vperm.xlu0 %192, %v174
        %v194 = vpop.permute.xlu0 %193
        %197 = vset.pattern.permute.xlu0 0
        %198 = vperm.xlu0 %197, %v175
        %v199 = vpop.permute.xlu0 %198
        %202 = vset.pattern.permute.xlu0 0
        %203 = vperm.xlu0 %202, %v176
        %v204 = vpop.permute.xlu0 %203
        %207 = vset.pattern.permute.xlu0 0
        %208 = vperm.xlu0 %207, %v177
        %v209 = vpop.permute.xlu0 %208
        %212 = vset.pattern.permute.xlu0 0
        %213 = vperm.xlu0 %212, %v178
        %v214 = vpop.permute.xlu0 %213
        %217 = vset.pattern.permute.xlu0 0
        %218 = vperm.xlu0 %217, %v179
        %v219 = vpop.permute.xlu0 %218
        %222 = vset.pattern.permute.xlu0 0
        %223 = vperm.xlu0 %222, %v180
        %v224 = vpop.permute.xlu0 %223
        %227 = vset.pattern.permute.xlu0 0
        %228 = vperm.xlu0 %227, %v181
        %v229 = vpop.permute.xlu0 %228
        %232 = vset.pattern.permute.xlu0 0
        %233 = vperm.xlu0 %232, %v182
        %v234 = vpop.permute.xlu0 %233
        %237 = vset.pattern.permute.xlu0 0
        %238 = vperm.xlu0 %237, %v183
        %v239 = vpop.permute.xlu0 %238
        %242 = vset.pattern.permute.xlu0 0
        %243 = vperm.xlu0 %242, %v184
        %v244 = vpop.permute.xlu0 %243
        %247 = vset.pattern.permute.xlu0 0
        %248 = vperm.xlu0 %247, %v185
        %v249 = vpop.permute.xlu0 %248
        %v252 = vlaneseq
        %v253 = vshrl.u32 %v252, 7
        %v254 = vsub.s32 0, %v253
        %v255 = vrot.slane %v170, %v254
        %v256 = vlaneseq
        %v257 = vshrl.u32 %v256, 7
        %v258 = vsub.s32 1, %v257
        %v259 = vrot.slane %v170, %v258
        %v262 = vmul.f32 %v189, %v255
        %v263 = vmul.f32 %v189, %v259
        %v264 = vmul.f32 %v194, %v255
        %v265 = vmul.f32 %v194, %v259
        %v266 = vmul.f32 %v199, %v255
        %v267 = vmul.f32 %v199, %v259
        %v268 = vmul.f32 %v204, %v255
        %v269 = vmul.f32 %v204, %v259
        %v270 = vmul.f32 %v209, %v255
        %v271 = vmul.f32 %v209, %v259
        %v272 = vmul.f32 %v214, %v255
        %v273 = vmul.f32 %v214, %v259
        %v274 = vmul.f32 %v219, %v255
        %v275 = vmul.f32 %v219, %v259
        %v276 = vmul.f32 %v224, %v255
        %v277 = vmul.f32 %v224, %v259
        %v278 = vmul.f32 %v229, %v255
        %v279 = vmul.f32 %v229, %v259
        %v280 = vmul.f32 %v234, %v255
        %v281 = vmul.f32 %v234, %v259
        %v282 = vmul.f32 %v239, %v255
        %v283 = vmul.f32 %v239, %v259
        %v284 = vmul.f32 %v244, %v255
        %v285 = vmul.f32 %v244, %v259
        %v286 = vmul.f32 %v249, %v255
        %v287 = vmul.f32 %v249, %v259
        %v288 = vand.u32 2147483647, %v262
        %vm289 = vcmp.le.f32.partialorder %v288, 0.7853982
        %vm290 = vcmp.lt.s32.totalorder %v262, 0
        %v291 = vand.u32 %v262, 2139095040
        %v292 = vshrl.u32 %v291, 23
        %v293 = vsub.s32 %v292, 127
        %v294 = vand.u32 2147483647, %v262
        %v295 = vand.u32 %v294, 8388607
        %v296 = vor.u32 %v295, 8388608
        %v297 = vsub.s32 0, %v296
        %v298 = vadd.s32 %v293, 1
        %vm299 = vcmp.gt.s32.totalorder %v298, 0
        %v300 = vsel %vm299, %v298, 0
        %v301 = vshrl.u32 %v300, 5
        %v302 = vand.u32 %v300, 31
        %v303 = vsub.s32 32, %v302
        %v304 = vshrl.u32 683565275, %v303
        %v305 = vshll.u32 683565275, %v302
        %v306 = vshrl.u32 2475754826, %v303
        %v307 = vor.u32 %v305, %v306
        %v308 = vshll.u32 2475754826, %v302
        %v309 = vshrl.u32 2131351028, %v303
        %v310 = vor.u32 %v308, %v309
        %v311 = vshll.u32 2131351028, %v302
        %v312 = vshrl.u32 2102212464, %v303
        %v313 = vor.u32 %v311, %v312
        %v314 = vshll.u32 2102212464, %v302
        %v315 = vshrl.u32 920167782, %v303
        %v316 = vor.u32 %v314, %v315
        %v317 = vshll.u32 920167782, %v302
        %v318 = vshrl.u32 1326507024, %v303
        %v319 = vor.u32 %v317, %v318
        %vm320 = vcmp.lt.s32.totalorder %v301, 1
        %vm321 = vcmp.lt.s32.totalorder %v301, 2
        %vm322 = vcmp.lt.s32.totalorder %v301, 3
        %vm323 = vcmp.lt.s32.totalorder %v301, 4
        %v324 = vsel %vm320, %v304, %v307
        %v325 = vsel %vm323, %v313, 2102212464
        %v326 = vsel %vm322, %v310, %v325
        %v327 = vsel %vm321, %v324, %v326
        %v328 = vsel %vm320, %v307, %v310
        %v329 = vsel %vm323, %v316, 920167782
        %v330 = vsel %vm322, %v313, %v329
        %v331 = vsel %vm321, %v328, %v330
        %v332 = vsel %vm320, %v310, %v313
        %v333 = vsel %vm323, %v319, 1326507024
        %v334 = vsel %vm322, %v316, %v333
        %v335 = vsel %vm321, %v332, %v334
        %v336 = vshll.u32 %v296, 8
        %v337 = vmul.u32.u64.compose %v336, %v335
        %v338 = vextract.low.u32 %v337
        %v339 = vextract.high.u32 %v337
        %v340 = vmul.u32.u64.compose %v336, %v331
        %v341 = vextract.low.u32 %v340
        %v342 = vextract.high.u32 %v340
        %v343 = vmul.u32 %v336, %v327
        %v344 = vadd.s32 %v339, %v341
        %vm345 = vc.u32 %v339, %v341
        %v346 = vadd.s32 %v342, 1
        %v347 = vsel %vm345, %v346, %v342
        %v348 = vadd.s32 %v343, %v347
        %v349 = vadd.s32 %v348, 536870912
        %v350 = vshrl.u32 %v349, 30
        %v351 = vshll.u32 %v350, 30
        %v352 = vsub.s32 %v348, %v351
        %vm353 = vcmp.lt.s32.totalorder %v352, 0
        %v354 = vsub.s32 0, %v352
        %v355 = vsel %vm353, %v354, %v352
        %v356 = vclz %v355
        %v357 = vsub.s32 %v356, 2
        %vm358 = vcmp.gt.s32.totalorder 0, %v357
        %v359 = vsel %vm358, 0, %v357
        %v360 = vsub.s32 32, %v359
        %v361 = vshll.u32 %v352, %v359
        %v362 = vshrl.u32 %v344, %v360
        %v363 = vor.u32 %v361, %v362
        %v364 = vsub.s32 4294967266, %v359
        %v365 = vadd.s32 %v364, 127
        %v366 = vshll.u32 %v365, 23
        %v367 = vor.u32 4788187, %v366
        %v368 = vand.u32 2147483647, %v367
        %v370 = vcvt.s32.f32 %v363
        %v371 = vmul.f32 %v370, %v368
        %v372 = vxor.u32 %v371, 2147483648
        %v373 = vsel %vm290, %v372, %v371
        %v374 = vsub.s32 4, %v350
        %v375 = vsel %vm290, %v374, %v350
        %v376 = vsel %vm289, %v262, %v373
        %v377 = vsel %vm289, 0, %v375
        %v378 = vcosq.f32.pop %v376
        %v379 = vsinq.f32.pop %v376
        %vm380 = vweird.f32 %v262
        %v381 = vadd.s32 %v377, 3
        %v382 = vand.u32 %v381, 3
        %vm383 = vcmp.lt.s32.totalorder %v382, 2
        %vm384 = vcmp.eq.s32.totalorder %v382, 0
        %v385 = vxor.u32 %v379, 2147483648
        %v386 = vsel %vm384, %v378, %v385
        %vm387 = vcmp.eq.s32.totalorder %v382, 2
        %v388 = vxor.u32 %v378, 2147483648
        %v389 = vsel %vm387, %v388, %v379
        %v390 = vsel %vm383, %v386, %v389
        %v391 = vsel %vm380, nan, %v390
        %v392 = vand.u32 2147483647, %v263
        %vm393 = vcmp.le.f32.partialorder %v392, 0.7853982
        %vm394 = vcmp.lt.s32.totalorder %v263, 0
        %v395 = vand.u32 %v263, 2139095040
        %v396 = vshrl.u32 %v395, 23
        %v397 = vsub.s32 %v396, 127
        %v398 = vand.u32 2147483647, %v263
        %v399 = vand.u32 %v398, 8388607
        %v400 = vor.u32 %v399, 8388608
        %v401 = vsub.s32 0, %v400
        %v402 = vadd.s32 %v397, 1
        %vm403 = vcmp.gt.s32.totalorder %v402, 0
        %v404 = vsel %vm403, %v402, 0
        %v405 = vshrl.u32 %v404, 5
        %v406 = vand.u32 %v404, 31
        %v407 = vsub.s32 32, %v406
        %v408 = vshrl.u32 683565275, %v407
        %v409 = vshll.u32 683565275, %v406
        %v410 = vshrl.u32 2475754826, %v407
        %v411 = vor.u32 %v409, %v410
        %v412 = vshll.u32 2475754826, %v406
        %v413 = vshrl.u32 2131351028, %v407
        %v414 = vor.u32 %v412, %v413
        %v415 = vshll.u32 2131351028, %v406
        %v416 = vshrl.u32 2102212464, %v407
        %v417 = vor.u32 %v415, %v416
        %v418 = vshll.u32 2102212464, %v406
        %v419 = vshrl.u32 920167782, %v407
        %v420 = vor.u32 %v418, %v419
        %v421 = vshll.u32 920167782, %v406
        %v422 = vshrl.u32 1326507024, %v407
        %v423 = vor.u32 %v421, %v422
        %vm424 = vcmp.lt.s32.totalorder %v405, 1
        %vm425 = vcmp.lt.s32.totalorder %v405, 2
        %vm426 = vcmp.lt.s32.totalorder %v405, 3
        %vm427 = vcmp.lt.s32.totalorder %v405, 4
        %v428 = vsel %vm424, %v408, %v411
        %v429 = vsel %vm427, %v417, 2102212464
        %v430 = vsel %vm426, %v414, %v429
        %v431 = vsel %vm425, %v428, %v430
        %v432 = vsel %vm424, %v411, %v414
        %v433 = vsel %vm427, %v420, 920167782
        %v434 = vsel %vm426, %v417, %v433
        %v435 = vsel %vm425, %v432, %v434
        %v436 = vsel %vm424, %v414, %v417
        %v437 = vsel %vm427, %v423, 1326507024
        %v438 = vsel %vm426, %v420, %v437
        %v439 = vsel %vm425, %v436, %v438
        %v440 = vshll.u32 %v400, 8
        %v441 = vmul.u32.u64.compose %v440, %v439
        %v442 = vextract.low.u32 %v441
        %v443 = vextract.high.u32 %v441
        %v444 = vmul.u32.u64.compose %v440, %v435
        %v445 = vextract.low.u32 %v444
        %v446 = vextract.high.u32 %v444
        %v447 = vmul.u32 %v440, %v431
        %v448 = vadd.s32 %v443, %v445
        %vm449 = vc.u32 %v443, %v445
        %v450 = vadd.s32 %v446, 1
        %v451 = vsel %vm449, %v450, %v446
        %v452 = vadd.s32 %v447, %v451
        %v453 = vadd.s32 %v452, 536870912
        %v454 = vshrl.u32 %v453, 30
        %v455 = vshll.u32 %v454, 30
        %v456 = vsub.s32 %v452, %v455
        %vm457 = vcmp.lt.s32.totalorder %v456, 0
        %v458 = vsub.s32 0, %v456
        %v459 = vsel %vm457, %v458, %v456
        %v460 = vclz %v459
        %v461 = vsub.s32 %v460, 2
        %vm462 = vcmp.gt.s32.totalorder 0, %v461
        %v463 = vsel %vm462, 0, %v461
        %v464 = vsub.s32 32, %v463
        %v465 = vshll.u32 %v456, %v463
        %v466 = vshrl.u32 %v448, %v464
        %v467 = vor.u32 %v465, %v466
        %v468 = vsub.s32 4294967266, %v463
        %v469 = vadd.s32 %v468, 127
        %v470 = vshll.u32 %v469, 23
        %v471 = vor.u32 4788187, %v470
        %v472 = vand.u32 2147483647, %v471
        %v474 = vcvt.s32.f32 %v467
        %v475 = vmul.f32 %v474, %v472
        %v476 = vxor.u32 %v475, 2147483648
        %v477 = vsel %vm394, %v476, %v475
        %v478 = vsub.s32 4, %v454
        %v479 = vsel %vm394, %v478, %v454
        %v480 = vsel %vm393, %v263, %v477
        %v481 = vsel %vm393, 0, %v479
        %v482 = vcosq.f32.pop %v480
        %v483 = vsinq.f32.pop %v480
        %vm484 = vweird.f32 %v263
        %v485 = vadd.s32 %v481, 3
        %v486 = vand.u32 %v485, 3
        %vm487 = vcmp.lt.s32.totalorder %v486, 2
        %vm488 = vcmp.eq.s32.totalorder %v486, 0
        %v489 = vxor.u32 %v483, 2147483648
        %v490 = vsel %vm488, %v482, %v489
        %vm491 = vcmp.eq.s32.totalorder %v486, 2
        %v492 = vxor.u32 %v482, 2147483648
        %v493 = vsel %vm491, %v492, %v483
        %v494 = vsel %vm487, %v490, %v493
        %v495 = vsel %vm484, nan, %v494
        %v496 = vand.u32 2147483647, %v264
        %vm497 = vcmp.le.f32.partialorder %v496, 0.7853982
        %vm498 = vcmp.lt.s32.totalorder %v264, 0
        %v499 = vand.u32 %v264, 2139095040
        %v500 = vshrl.u32 %v499, 23
        %v501 = vsub.s32 %v500, 127
        %v502 = vand.u32 2147483647, %v264
        %v503 = vand.u32 %v502, 8388607
        %v504 = vor.u32 %v503, 8388608
        %v505 = vsub.s32 0, %v504
        %v506 = vadd.s32 %v501, 1
        %vm507 = vcmp.gt.s32.totalorder %v506, 0
        %v508 = vsel %vm507, %v506, 0
        %v509 = vshrl.u32 %v508, 5
        %v510 = vand.u32 %v508, 31
        %v511 = vsub.s32 32, %v510
        %v512 = vshrl.u32 683565275, %v511
        %v513 = vshll.u32 683565275, %v510
        %v514 = vshrl.u32 2475754826, %v511
        %v515 = vor.u32 %v513, %v514
        %v516 = vshll.u32 2475754826, %v510
        %v517 = vshrl.u32 2131351028, %v511
        %v518 = vor.u32 %v516, %v517
        %v519 = vshll.u32 2131351028, %v510
        %v520 = vshrl.u32 2102212464, %v511
        %v521 = vor.u32 %v519, %v520
        %v522 = vshll.u32 2102212464, %v510
        %v523 = vshrl.u32 920167782, %v511
        %v524 = vor.u32 %v522, %v523
        %v525 = vshll.u32 920167782, %v510
        %v526 = vshrl.u32 1326507024, %v511
        %v527 = vor.u32 %v525, %v526
        %vm528 = vcmp.lt.s32.totalorder %v509, 1
        %vm529 = vcmp.lt.s32.totalorder %v509, 2
        %vm530 = vcmp.lt.s32.totalorder %v509, 3
        %vm531 = vcmp.lt.s32.totalorder %v509, 4
        %v532 = vsel %vm528, %v512, %v515
        %v533 = vsel %vm531, %v521, 2102212464
        %v534 = vsel %vm530, %v518, %v533
        %v535 = vsel %vm529, %v532, %v534
        %v536 = vsel %vm528, %v515, %v518
        %v537 = vsel %vm531, %v524, 920167782
        %v538 = vsel %vm530, %v521, %v537
        %v539 = vsel %vm529, %v536, %v538
        %v540 = vsel %vm528, %v518, %v521
        %v541 = vsel %vm531, %v527, 1326507024
        %v542 = vsel %vm530, %v524, %v541
        %v543 = vsel %vm529, %v540, %v542
        %v544 = vshll.u32 %v504, 8
        %v545 = vmul.u32.u64.compose %v544, %v543
        %v546 = vextract.low.u32 %v545
        %v547 = vextract.high.u32 %v545
        %v548 = vmul.u32.u64.compose %v544, %v539
        %v549 = vextract.low.u32 %v548
        %v550 = vextract.high.u32 %v548
        %v551 = vmul.u32 %v544, %v535
        %v552 = vadd.s32 %v547, %v549
        %vm553 = vc.u32 %v547, %v549
        %v554 = vadd.s32 %v550, 1
        %v555 = vsel %vm553, %v554, %v550
        %v556 = vadd.s32 %v551, %v555
        %v557 = vadd.s32 %v556, 536870912
        %v558 = vshrl.u32 %v557, 30
        %v559 = vshll.u32 %v558, 30
        %v560 = vsub.s32 %v556, %v559
        %vm561 = vcmp.lt.s32.totalorder %v560, 0
        %v562 = vsub.s32 0, %v560
        %v563 = vsel %vm561, %v562, %v560
        %v564 = vclz %v563
        %v565 = vsub.s32 %v564, 2
        %vm566 = vcmp.gt.s32.totalorder 0, %v565
        %v567 = vsel %vm566, 0, %v565
        %v568 = vsub.s32 32, %v567
        %v569 = vshll.u32 %v560, %v567
        %v570 = vshrl.u32 %v552, %v568
        %v571 = vor.u32 %v569, %v570
        %v572 = vsub.s32 4294967266, %v567
        %v573 = vadd.s32 %v572, 127
        %v574 = vshll.u32 %v573, 23
        %v575 = vor.u32 4788187, %v574
        %v576 = vand.u32 2147483647, %v575
        %v578 = vcvt.s32.f32 %v571
        %v579 = vmul.f32 %v578, %v576
        %v580 = vxor.u32 %v579, 2147483648
        %v581 = vsel %vm498, %v580, %v579
        %v582 = vsub.s32 4, %v558
        %v583 = vsel %vm498, %v582, %v558
        %v584 = vsel %vm497, %v264, %v581
        %v585 = vsel %vm497, 0, %v583
        %v586 = vcosq.f32.pop %v584
        %v587 = vsinq.f32.pop %v584
        %vm588 = vweird.f32 %v264
        %v589 = vadd.s32 %v585, 3
        %v590 = vand.u32 %v589, 3
        %vm591 = vcmp.lt.s32.totalorder %v590, 2
        %vm592 = vcmp.eq.s32.totalorder %v590, 0
        %v593 = vxor.u32 %v587, 2147483648
        %v594 = vsel %vm592, %v586, %v593
        %vm595 = vcmp.eq.s32.totalorder %v590, 2
        %v596 = vxor.u32 %v586, 2147483648
        %v597 = vsel %vm595, %v596, %v587
        %v598 = vsel %vm591, %v594, %v597
        %v599 = vsel %vm588, nan, %v598
        %v600 = vand.u32 2147483647, %v265
        %vm601 = vcmp.le.f32.partialorder %v600, 0.7853982
        %vm602 = vcmp.lt.s32.totalorder %v265, 0
        %v603 = vand.u32 %v265, 2139095040
        %v604 = vshrl.u32 %v603, 23
        %v605 = vsub.s32 %v604, 127
        %v606 = vand.u32 2147483647, %v265
        %v607 = vand.u32 %v606, 8388607
        %v608 = vor.u32 %v607, 8388608
        %v609 = vsub.s32 0, %v608
        %v610 = vadd.s32 %v605, 1
        %vm611 = vcmp.gt.s32.totalorder %v610, 0
        %v612 = vsel %vm611, %v610, 0
        %v613 = vshrl.u32 %v612, 5
        %v614 = vand.u32 %v612, 31
        %v615 = vsub.s32 32, %v614
        %v616 = vshrl.u32 683565275, %v615
        %v617 = vshll.u32 683565275, %v614
        %v618 = vshrl.u32 2475754826, %v615
        %v619 = vor.u32 %v617, %v618
        %v620 = vshll.u32 2475754826, %v614
        %v621 = vshrl.u32 2131351028, %v615
        %v622 = vor.u32 %v620, %v621
        %v623 = vshll.u32 2131351028, %v614
        %v624 = vshrl.u32 2102212464, %v615
        %v625 = vor.u32 %v623, %v624
        %v626 = vshll.u32 2102212464, %v614
        %v627 = vshrl.u32 920167782, %v615
        %v628 = vor.u32 %v626, %v627
        %v629 = vshll.u32 920167782, %v614
        %v630 = vshrl.u32 1326507024, %v615
        %v631 = vor.u32 %v629, %v630
        %vm632 = vcmp.lt.s32.totalorder %v613, 1
        %vm633 = vcmp.lt.s32.totalorder %v613, 2
        %vm634 = vcmp.lt.s32.totalorder %v613, 3
        %vm635 = vcmp.lt.s32.totalorder %v613, 4
        %v636 = vsel %vm632, %v616, %v619
        %v637 = vsel %vm635, %v625, 2102212464
        %v638 = vsel %vm634, %v622, %v637
        %v639 = vsel %vm633, %v636, %v638
        %v640 = vsel %vm632, %v619, %v622
        %v641 = vsel %vm635, %v628, 920167782
        %v642 = vsel %vm634, %v625, %v641
        %v643 = vsel %vm633, %v640, %v642
        %v644 = vsel %vm632, %v622, %v625
        %v645 = vsel %vm635, %v631, 1326507024
        %v646 = vsel %vm634, %v628, %v645
        %v647 = vsel %vm633, %v644, %v646
        %v648 = vshll.u32 %v608, 8
        %v649 = vmul.u32.u64.compose %v648, %v647
        %v650 = vextract.low.u32 %v649
        %v651 = vextract.high.u32 %v649
        %v652 = vmul.u32.u64.compose %v648, %v643
        %v653 = vextract.low.u32 %v652
        %v654 = vextract.high.u32 %v652
        %v655 = vmul.u32 %v648, %v639
        %v656 = vadd.s32 %v651, %v653
        %vm657 = vc.u32 %v651, %v653
        %v658 = vadd.s32 %v654, 1
        %v659 = vsel %vm657, %v658, %v654
        %v660 = vadd.s32 %v655, %v659
        %v661 = vadd.s32 %v660, 536870912
        %v662 = vshrl.u32 %v661, 30
        %v663 = vshll.u32 %v662, 30
        %v664 = vsub.s32 %v660, %v663
        %vm665 = vcmp.lt.s32.totalorder %v664, 0
        %v666 = vsub.s32 0, %v664
        %v667 = vsel %vm665, %v666, %v664
        %v668 = vclz %v667
        %v669 = vsub.s32 %v668, 2
        %vm670 = vcmp.gt.s32.totalorder 0, %v669
        %v671 = vsel %vm670, 0, %v669
        %v672 = vsub.s32 32, %v671
        %v673 = vshll.u32 %v664, %v671
        %v674 = vshrl.u32 %v656, %v672
        %v675 = vor.u32 %v673, %v674
        %v676 = vsub.s32 4294967266, %v671
        %v677 = vadd.s32 %v676, 127
        %v678 = vshll.u32 %v677, 23
        %v679 = vor.u32 4788187, %v678
        %v680 = vand.u32 2147483647, %v679
        %v682 = vcvt.s32.f32 %v675
        %v683 = vmul.f32 %v682, %v680
        %v684 = vxor.u32 %v683, 2147483648
        %v685 = vsel %vm602, %v684, %v683
        %v686 = vsub.s32 4, %v662
        %v687 = vsel %vm602, %v686, %v662
        %v688 = vsel %vm601, %v265, %v685
        %v689 = vsel %vm601, 0, %v687
        %v690 = vcosq.f32.pop %v688
        %v691 = vsinq.f32.pop %v688
        %vm692 = vweird.f32 %v265
        %v693 = vadd.s32 %v689, 3
        %v694 = vand.u32 %v693, 3
        %vm695 = vcmp.lt.s32.totalorder %v694, 2
        %vm696 = vcmp.eq.s32.totalorder %v694, 0
        %v697 = vxor.u32 %v691, 2147483648
        %v698 = vsel %vm696, %v690, %v697
        %vm699 = vcmp.eq.s32.totalorder %v694, 2
        %v700 = vxor.u32 %v690, 2147483648
        %v701 = vsel %vm699, %v700, %v691
        %v702 = vsel %vm695, %v698, %v701
        %v703 = vsel %vm692, nan, %v702
        %v704 = vand.u32 2147483647, %v266
        %vm705 = vcmp.le.f32.partialorder %v704, 0.7853982
        %vm706 = vcmp.lt.s32.totalorder %v266, 0
        %v707 = vand.u32 %v266, 2139095040
        %v708 = vshrl.u32 %v707, 23
        %v709 = vsub.s32 %v708, 127
        %v710 = vand.u32 2147483647, %v266
        %v711 = vand.u32 %v710, 8388607
        %v712 = vor.u32 %v711, 8388608
        %v713 = vsub.s32 0, %v712
        %v714 = vadd.s32 %v709, 1
        %vm715 = vcmp.gt.s32.totalorder %v714, 0
        %v716 = vsel %vm715, %v714, 0
        %v717 = vshrl.u32 %v716, 5
        %v718 = vand.u32 %v716, 31
        %v719 = vsub.s32 32, %v718
        %v720 = vshrl.u32 683565275, %v719
        %v721 = vshll.u32 683565275, %v718
        %v722 = vshrl.u32 2475754826, %v719
        %v723 = vor.u32 %v721, %v722
        %v724 = vshll.u32 2475754826, %v718
        %v725 = vshrl.u32 2131351028, %v719
        %v726 = vor.u32 %v724, %v725
        %v727 = vshll.u32 2131351028, %v718
        %v728 = vshrl.u32 2102212464, %v719
        %v729 = vor.u32 %v727, %v728
        %v730 = vshll.u32 2102212464, %v718
        %v731 = vshrl.u32 920167782, %v719
        %v732 = vor.u32 %v730, %v731
        %v733 = vshll.u32 920167782, %v718
        %v734 = vshrl.u32 1326507024, %v719
        %v735 = vor.u32 %v733, %v734
        %vm736 = vcmp.lt.s32.totalorder %v717, 1
        %vm737 = vcmp.lt.s32.totalorder %v717, 2
        %vm738 = vcmp.lt.s32.totalorder %v717, 3
        %vm739 = vcmp.lt.s32.totalorder %v717, 4
        %v740 = vsel %vm736, %v720, %v723
        %v741 = vsel %vm739, %v729, 2102212464
        %v742 = vsel %vm738, %v726, %v741
        %v743 = vsel %vm737, %v740, %v742
        %v744 = vsel %vm736, %v723, %v726
        %v745 = vsel %vm739, %v732, 920167782
        %v746 = vsel %vm738, %v729, %v745
        %v747 = vsel %vm737, %v744, %v746
        %v748 = vsel %vm736, %v726, %v729
        %v749 = vsel %vm739, %v735, 1326507024
        %v750 = vsel %vm738, %v732, %v749
        %v751 = vsel %vm737, %v748, %v750
        %v752 = vshll.u32 %v712, 8
        %v753 = vmul.u32.u64.compose %v752, %v751
        %v754 = vextract.low.u32 %v753
        %v755 = vextract.high.u32 %v753
        %v756 = vmul.u32.u64.compose %v752, %v747
        %v757 = vextract.low.u32 %v756
        %v758 = vextract.high.u32 %v756
        %v759 = vmul.u32 %v752, %v743
        %v760 = vadd.s32 %v755, %v757
        %vm761 = vc.u32 %v755, %v757
        %v762 = vadd.s32 %v758, 1
        %v763 = vsel %vm761, %v762, %v758
        %v764 = vadd.s32 %v759, %v763
        %v765 = vadd.s32 %v764, 536870912
        %v766 = vshrl.u32 %v765, 30
        %v767 = vshll.u32 %v766, 30
        %v768 = vsub.s32 %v764, %v767
        %vm769 = vcmp.lt.s32.totalorder %v768, 0
        %v770 = vsub.s32 0, %v768
        %v771 = vsel %vm769, %v770, %v768
        %v772 = vclz %v771
        %v773 = vsub.s32 %v772, 2
        %vm774 = vcmp.gt.s32.totalorder 0, %v773
        %v775 = vsel %vm774, 0, %v773
        %v776 = vsub.s32 32, %v775
        %v777 = vshll.u32 %v768, %v775
        %v778 = vshrl.u32 %v760, %v776
        %v779 = vor.u32 %v777, %v778
        %v780 = vsub.s32 4294967266, %v775
        %v781 = vadd.s32 %v780, 127
        %v782 = vshll.u32 %v781, 23
        %v783 = vor.u32 4788187, %v782
        %v784 = vand.u32 2147483647, %v783
        %v786 = vcvt.s32.f32 %v779
        %v787 = vmul.f32 %v786, %v784
        %v788 = vxor.u32 %v787, 2147483648
        %v789 = vsel %vm706, %v788, %v787
        %v790 = vsub.s32 4, %v766
        %v791 = vsel %vm706, %v790, %v766
        %v792 = vsel %vm705, %v266, %v789
        %v793 = vsel %vm705, 0, %v791
        %v794 = vcosq.f32.pop %v792
        %v795 = vsinq.f32.pop %v792
        %vm796 = vweird.f32 %v266
        %v797 = vadd.s32 %v793, 3
        %v798 = vand.u32 %v797, 3
        %vm799 = vcmp.lt.s32.totalorder %v798, 2
        %vm800 = vcmp.eq.s32.totalorder %v798, 0
        %v801 = vxor.u32 %v795, 2147483648
        %v802 = vsel %vm800, %v794, %v801
        %vm803 = vcmp.eq.s32.totalorder %v798, 2
        %v804 = vxor.u32 %v794, 2147483648
        %v805 = vsel %vm803, %v804, %v795
        %v806 = vsel %vm799, %v802, %v805
        %v807 = vsel %vm796, nan, %v806
        %v808 = vand.u32 2147483647, %v267
        %vm809 = vcmp.le.f32.partialorder %v808, 0.7853982
        %vm810 = vcmp.lt.s32.totalorder %v267, 0
        %v811 = vand.u32 %v267, 2139095040
        %v812 = vshrl.u32 %v811, 23
        %v813 = vsub.s32 %v812, 127
        %v814 = vand.u32 2147483647, %v267
        %v815 = vand.u32 %v814, 8388607
        %v816 = vor.u32 %v815, 8388608
        %v817 = vsub.s32 0, %v816
        %v818 = vadd.s32 %v813, 1
        %vm819 = vcmp.gt.s32.totalorder %v818, 0
        %v820 = vsel %vm819, %v818, 0
        %v821 = vshrl.u32 %v820, 5
        %v822 = vand.u32 %v820, 31
        %v823 = vsub.s32 32, %v822
        %v824 = vshrl.u32 683565275, %v823
        %v825 = vshll.u32 683565275, %v822
        %v826 = vshrl.u32 2475754826, %v823
        %v827 = vor.u32 %v825, %v826
        %v828 = vshll.u32 2475754826, %v822
        %v829 = vshrl.u32 2131351028, %v823
        %v830 = vor.u32 %v828, %v829
        %v831 = vshll.u32 2131351028, %v822
        %v832 = vshrl.u32 2102212464, %v823
        %v833 = vor.u32 %v831, %v832
        %v834 = vshll.u32 2102212464, %v822
        %v835 = vshrl.u32 920167782, %v823
        %v836 = vor.u32 %v834, %v835
        %v837 = vshll.u32 920167782, %v822
        %v838 = vshrl.u32 1326507024, %v823
        %v839 = vor.u32 %v837, %v838
        %vm840 = vcmp.lt.s32.totalorder %v821, 1
        %vm841 = vcmp.lt.s32.totalorder %v821, 2
        %vm842 = vcmp.lt.s32.totalorder %v821, 3
        %vm843 = vcmp.lt.s32.totalorder %v821, 4
        %v844 = vsel %vm840, %v824, %v827
        %v845 = vsel %vm843, %v833, 2102212464
        %v846 = vsel %vm842, %v830, %v845
        %v847 = vsel %vm841, %v844, %v846
        %v848 = vsel %vm840, %v827, %v830
        %v849 = vsel %vm843, %v836, 920167782
        %v850 = vsel %vm842, %v833, %v849
        %v851 = vsel %vm841, %v848, %v850
        %v852 = vsel %vm840, %v830, %v833
        %v853 = vsel %vm843, %v839, 1326507024
        %v854 = vsel %vm842, %v836, %v853
        %v855 = vsel %vm841, %v852, %v854
        %v856 = vshll.u32 %v816, 8
        %v857 = vmul.u32.u64.compose %v856, %v855
        %v858 = vextract.low.u32 %v857
        %v859 = vextract.high.u32 %v857
        %v860 = vmul.u32.u64.compose %v856, %v851
        %v861 = vextract.low.u32 %v860
        %v862 = vextract.high.u32 %v860
        %v863 = vmul.u32 %v856, %v847
        %v864 = vadd.s32 %v859, %v861
        %vm865 = vc.u32 %v859, %v861
        %v866 = vadd.s32 %v862, 1
        %v867 = vsel %vm865, %v866, %v862
        %v868 = vadd.s32 %v863, %v867
        %v869 = vadd.s32 %v868, 536870912
        %v870 = vshrl.u32 %v869, 30
        %v871 = vshll.u32 %v870, 30
        %v872 = vsub.s32 %v868, %v871
        %vm873 = vcmp.lt.s32.totalorder %v872, 0
        %v874 = vsub.s32 0, %v872
        %v875 = vsel %vm873, %v874, %v872
        %v876 = vclz %v875
        %v877 = vsub.s32 %v876, 2
        %vm878 = vcmp.gt.s32.totalorder 0, %v877
        %v879 = vsel %vm878, 0, %v877
        %v880 = vsub.s32 32, %v879
        %v881 = vshll.u32 %v872, %v879
        %v882 = vshrl.u32 %v864, %v880
        %v883 = vor.u32 %v881, %v882
        %v884 = vsub.s32 4294967266, %v879
        %v885 = vadd.s32 %v884, 127
        %v886 = vshll.u32 %v885, 23
        %v887 = vor.u32 4788187, %v886
        %v888 = vand.u32 2147483647, %v887
        %v890 = vcvt.s32.f32 %v883
        %v891 = vmul.f32 %v890, %v888
        %v892 = vxor.u32 %v891, 2147483648
        %v893 = vsel %vm810, %v892, %v891
        %v894 = vsub.s32 4, %v870
        %v895 = vsel %vm810, %v894, %v870
        %v896 = vsel %vm809, %v267, %v893
        %v897 = vsel %vm809, 0, %v895
        %v898 = vcosq.f32.pop %v896
        %v899 = vsinq.f32.pop %v896
        %vm900 = vweird.f32 %v267
        %v901 = vadd.s32 %v897, 3
        %v902 = vand.u32 %v901, 3
        %vm903 = vcmp.lt.s32.totalorder %v902, 2
        %vm904 = vcmp.eq.s32.totalorder %v902, 0
        %v905 = vxor.u32 %v899, 2147483648
        %v906 = vsel %vm904, %v898, %v905
        %vm907 = vcmp.eq.s32.totalorder %v902, 2
        %v908 = vxor.u32 %v898, 2147483648
        %v909 = vsel %vm907, %v908, %v899
        %v910 = vsel %vm903, %v906, %v909
        %v911 = vsel %vm900, nan, %v910
        %v912 = vand.u32 2147483647, %v268
        %vm913 = vcmp.le.f32.partialorder %v912, 0.7853982
        %vm914 = vcmp.lt.s32.totalorder %v268, 0
        %v915 = vand.u32 %v268, 2139095040
        %v916 = vshrl.u32 %v915, 23
        %v917 = vsub.s32 %v916, 127
        %v918 = vand.u32 2147483647, %v268
        %v919 = vand.u32 %v918, 8388607
        %v920 = vor.u32 %v919, 8388608
        %v921 = vsub.s32 0, %v920
        %v922 = vadd.s32 %v917, 1
        %vm923 = vcmp.gt.s32.totalorder %v922, 0
        %v924 = vsel %vm923, %v922, 0
        %v925 = vshrl.u32 %v924, 5
        %v926 = vand.u32 %v924, 31
        %v927 = vsub.s32 32, %v926
        %v928 = vshrl.u32 683565275, %v927
        %v929 = vshll.u32 683565275, %v926
        %v930 = vshrl.u32 2475754826, %v927
        %v931 = vor.u32 %v929, %v930
        %v932 = vshll.u32 2475754826, %v926
        %v933 = vshrl.u32 2131351028, %v927
        %v934 = vor.u32 %v932, %v933
        %v935 = vshll.u32 2131351028, %v926
        %v936 = vshrl.u32 2102212464, %v927
        %v937 = vor.u32 %v935, %v936
        %v938 = vshll.u32 2102212464, %v926
        %v939 = vshrl.u32 920167782, %v927
        %v940 = vor.u32 %v938, %v939
        %v941 = vshll.u32 920167782, %v926
        %v942 = vshrl.u32 1326507024, %v927
        %v943 = vor.u32 %v941, %v942
        %vm944 = vcmp.lt.s32.totalorder %v925, 1
        %vm945 = vcmp.lt.s32.totalorder %v925, 2
        %vm946 = vcmp.lt.s32.totalorder %v925, 3
        %vm947 = vcmp.lt.s32.totalorder %v925, 4
        %v948 = vsel %vm944, %v928, %v931
        %v949 = vsel %vm947, %v937, 2102212464
        %v950 = vsel %vm946, %v934, %v949
        %v951 = vsel %vm945, %v948, %v950
        %v952 = vsel %vm944, %v931, %v934
        %v953 = vsel %vm947, %v940, 920167782
        %v954 = vsel %vm946, %v937, %v953
        %v955 = vsel %vm945, %v952, %v954
        %v956 = vsel %vm944, %v934, %v937
        %v957 = vsel %vm947, %v943, 1326507024
        %v958 = vsel %vm946, %v940, %v957
        %v959 = vsel %vm945, %v956, %v958
        %v960 = vshll.u32 %v920, 8
        %v961 = vmul.u32.u64.compose %v960, %v959
        %v962 = vextract.low.u32 %v961
        %v963 = vextract.high.u32 %v961
        %v964 = vmul.u32.u64.compose %v960, %v955
        %v965 = vextract.low.u32 %v964
        %v966 = vextract.high.u32 %v964
        %v967 = vmul.u32 %v960, %v951
        %v968 = vadd.s32 %v963, %v965
        %vm969 = vc.u32 %v963, %v965
        %v970 = vadd.s32 %v966, 1
        %v971 = vsel %vm969, %v970, %v966
        %v972 = vadd.s32 %v967, %v971
        %v973 = vadd.s32 %v972, 536870912
        %v974 = vshrl.u32 %v973, 30
        %v975 = vshll.u32 %v974, 30
        %v976 = vsub.s32 %v972, %v975
        %vm977 = vcmp.lt.s32.totalorder %v976, 0
        %v978 = vsub.s32 0, %v976
        %v979 = vsel %vm977, %v978, %v976
        %v980 = vclz %v979
        %v981 = vsub.s32 %v980, 2
        %vm982 = vcmp.gt.s32.totalorder 0, %v981
        %v983 = vsel %vm982, 0, %v981
        %v984 = vsub.s32 32, %v983
        %v985 = vshll.u32 %v976, %v983
        %v986 = vshrl.u32 %v968, %v984
        %v987 = vor.u32 %v985, %v986
        %v988 = vsub.s32 4294967266, %v983
        %v989 = vadd.s32 %v988, 127
        %v990 = vshll.u32 %v989, 23
        %v991 = vor.u32 4788187, %v990
        %v992 = vand.u32 2147483647, %v991
        %v994 = vcvt.s32.f32 %v987
        %v995 = vmul.f32 %v994, %v992
        %v996 = vxor.u32 %v995, 2147483648
        %v997 = vsel %vm914, %v996, %v995
        %v998 = vsub.s32 4, %v974
        %v999 = vsel %vm914, %v998, %v974
        %v1000 = vsel %vm913, %v268, %v997
        %v1001 = vsel %vm913, 0, %v999
        %v1002 = vcosq.f32.pop %v1000
        %v1003 = vsinq.f32.pop %v1000
        %vm1004 = vweird.f32 %v268
        %v1005 = vadd.s32 %v1001, 3
        %v1006 = vand.u32 %v1005, 3
        %vm1007 = vcmp.lt.s32.totalorder %v1006, 2
        %vm1008 = vcmp.eq.s32.totalorder %v1006, 0
        %v1009 = vxor.u32 %v1003, 2147483648
        %v1010 = vsel %vm1008, %v1002, %v1009
        %vm1011 = vcmp.eq.s32.totalorder %v1006, 2
        %v1012 = vxor.u32 %v1002, 2147483648
        %v1013 = vsel %vm1011, %v1012, %v1003
        %v1014 = vsel %vm1007, %v1010, %v1013
        %v1015 = vsel %vm1004, nan, %v1014
        %v1016 = vand.u32 2147483647, %v269
        %vm1017 = vcmp.le.f32.partialorder %v1016, 0.7853982
        %vm1018 = vcmp.lt.s32.totalorder %v269, 0
        %v1019 = vand.u32 %v269, 2139095040
        %v1020 = vshrl.u32 %v1019, 23
        %v1021 = vsub.s32 %v1020, 127
        %v1022 = vand.u32 2147483647, %v269
        %v1023 = vand.u32 %v1022, 8388607
        %v1024 = vor.u32 %v1023, 8388608
        %v1025 = vsub.s32 0, %v1024
        %v1026 = vadd.s32 %v1021, 1
        %vm1027 = vcmp.gt.s32.totalorder %v1026, 0
        %v1028 = vsel %vm1027, %v1026, 0
        %v1029 = vshrl.u32 %v1028, 5
        %v1030 = vand.u32 %v1028, 31
        %v1031 = vsub.s32 32, %v1030
        %v1032 = vshrl.u32 683565275, %v1031
        %v1033 = vshll.u32 683565275, %v1030
        %v1034 = vshrl.u32 2475754826, %v1031
        %v1035 = vor.u32 %v1033, %v1034
        %v1036 = vshll.u32 2475754826, %v1030
        %v1037 = vshrl.u32 2131351028, %v1031
        %v1038 = vor.u32 %v1036, %v1037
        %v1039 = vshll.u32 2131351028, %v1030
        %v1040 = vshrl.u32 2102212464, %v1031
        %v1041 = vor.u32 %v1039, %v1040
        %v1042 = vshll.u32 2102212464, %v1030
        %v1043 = vshrl.u32 920167782, %v1031
        %v1044 = vor.u32 %v1042, %v1043
        %v1045 = vshll.u32 920167782, %v1030
        %v1046 = vshrl.u32 1326507024, %v1031
        %v1047 = vor.u32 %v1045, %v1046
        %vm1048 = vcmp.lt.s32.totalorder %v1029, 1
        %vm1049 = vcmp.lt.s32.totalorder %v1029, 2
        %vm1050 = vcmp.lt.s32.totalorder %v1029, 3
        %vm1051 = vcmp.lt.s32.totalorder %v1029, 4
        %v1052 = vsel %vm1048, %v1032, %v1035
        %v1053 = vsel %vm1051, %v1041, 2102212464
        %v1054 = vsel %vm1050, %v1038, %v1053
        %v1055 = vsel %vm1049, %v1052, %v1054
        %v1056 = vsel %vm1048, %v1035, %v1038
        %v1057 = vsel %vm1051, %v1044, 920167782
        %v1058 = vsel %vm1050, %v1041, %v1057
        %v1059 = vsel %vm1049, %v1056, %v1058
        %v1060 = vsel %vm1048, %v1038, %v1041
        %v1061 = vsel %vm1051, %v1047, 1326507024
        %v1062 = vsel %vm1050, %v1044, %v1061
        %v1063 = vsel %vm1049, %v1060, %v1062
        %v1064 = vshll.u32 %v1024, 8
        %v1065 = vmul.u32.u64.compose %v1064, %v1063
        %v1066 = vextract.low.u32 %v1065
        %v1067 = vextract.high.u32 %v1065
        %v1068 = vmul.u32.u64.compose %v1064, %v1059
        %v1069 = vextract.low.u32 %v1068
        %v1070 = vextract.high.u32 %v1068
        %v1071 = vmul.u32 %v1064, %v1055
        %v1072 = vadd.s32 %v1067, %v1069
        %vm1073 = vc.u32 %v1067, %v1069
        %v1074 = vadd.s32 %v1070, 1
        %v1075 = vsel %vm1073, %v1074, %v1070
        %v1076 = vadd.s32 %v1071, %v1075
        %v1077 = vadd.s32 %v1076, 536870912
        %v1078 = vshrl.u32 %v1077, 30
        %v1079 = vshll.u32 %v1078, 30
        %v1080 = vsub.s32 %v1076, %v1079
        %vm1081 = vcmp.lt.s32.totalorder %v1080, 0
        %v1082 = vsub.s32 0, %v1080
        %v1083 = vsel %vm1081, %v1082, %v1080
        %v1084 = vclz %v1083
        %v1085 = vsub.s32 %v1084, 2
        %vm1086 = vcmp.gt.s32.totalorder 0, %v1085
        %v1087 = vsel %vm1086, 0, %v1085
        %v1088 = vsub.s32 32, %v1087
        %v1089 = vshll.u32 %v1080, %v1087
        %v1090 = vshrl.u32 %v1072, %v1088
        %v1091 = vor.u32 %v1089, %v1090
        %v1092 = vsub.s32 4294967266, %v1087
        %v1093 = vadd.s32 %v1092, 127
        %v1094 = vshll.u32 %v1093, 23
        %v1095 = vor.u32 4788187, %v1094
        %v1096 = vand.u32 2147483647, %v1095
        %v1098 = vcvt.s32.f32 %v1091
        %v1099 = vmul.f32 %v1098, %v1096
        %v1100 = vxor.u32 %v1099, 2147483648
        %v1101 = vsel %vm1018, %v1100, %v1099
        %v1102 = vsub.s32 4, %v1078
        %v1103 = vsel %vm1018, %v1102, %v1078
        %v1104 = vsel %vm1017, %v269, %v1101
        %v1105 = vsel %vm1017, 0, %v1103
        %v1106 = vcosq.f32.pop %v1104
        %v1107 = vsinq.f32.pop %v1104
        %vm1108 = vweird.f32 %v269
        %v1109 = vadd.s32 %v1105, 3
        %v1110 = vand.u32 %v1109, 3
        %vm1111 = vcmp.lt.s32.totalorder %v1110, 2
        %vm1112 = vcmp.eq.s32.totalorder %v1110, 0
        %v1113 = vxor.u32 %v1107, 2147483648
        %v1114 = vsel %vm1112, %v1106, %v1113
        %vm1115 = vcmp.eq.s32.totalorder %v1110, 2
        %v1116 = vxor.u32 %v1106, 2147483648
        %v1117 = vsel %vm1115, %v1116, %v1107
        %v1118 = vsel %vm1111, %v1114, %v1117
        %v1119 = vsel %vm1108, nan, %v1118
        %v1120 = vand.u32 2147483647, %v270
        %vm1121 = vcmp.le.f32.partialorder %v1120, 0.7853982
        %vm1122 = vcmp.lt.s32.totalorder %v270, 0
        %v1123 = vand.u32 %v270, 2139095040
        %v1124 = vshrl.u32 %v1123, 23
        %v1125 = vsub.s32 %v1124, 127
        %v1126 = vand.u32 2147483647, %v270
        %v1127 = vand.u32 %v1126, 8388607
        %v1128 = vor.u32 %v1127, 8388608
        %v1129 = vsub.s32 0, %v1128
        %v1130 = vadd.s32 %v1125, 1
        %vm1131 = vcmp.gt.s32.totalorder %v1130, 0
        %v1132 = vsel %vm1131, %v1130, 0
        %v1133 = vshrl.u32 %v1132, 5
        %v1134 = vand.u32 %v1132, 31
        %v1135 = vsub.s32 32, %v1134
        %v1136 = vshrl.u32 683565275, %v1135
        %v1137 = vshll.u32 683565275, %v1134
        %v1138 = vshrl.u32 2475754826, %v1135
        %v1139 = vor.u32 %v1137, %v1138
        %v1140 = vshll.u32 2475754826, %v1134
        %v1141 = vshrl.u32 2131351028, %v1135
        %v1142 = vor.u32 %v1140, %v1141
        %v1143 = vshll.u32 2131351028, %v1134
        %v1144 = vshrl.u32 2102212464, %v1135
        %v1145 = vor.u32 %v1143, %v1144
        %v1146 = vshll.u32 2102212464, %v1134
        %v1147 = vshrl.u32 920167782, %v1135
        %v1148 = vor.u32 %v1146, %v1147
        %v1149 = vshll.u32 920167782, %v1134
        %v1150 = vshrl.u32 1326507024, %v1135
        %v1151 = vor.u32 %v1149, %v1150
        %vm1152 = vcmp.lt.s32.totalorder %v1133, 1
        %vm1153 = vcmp.lt.s32.totalorder %v1133, 2
        %vm1154 = vcmp.lt.s32.totalorder %v1133, 3
        %vm1155 = vcmp.lt.s32.totalorder %v1133, 4
        %v1156 = vsel %vm1152, %v1136, %v1139
        %v1157 = vsel %vm1155, %v1145, 2102212464
        %v1158 = vsel %vm1154, %v1142, %v1157
        %v1159 = vsel %vm1153, %v1156, %v1158
        %v1160 = vsel %vm1152, %v1139, %v1142
        %v1161 = vsel %vm1155, %v1148, 920167782
        %v1162 = vsel %vm1154, %v1145, %v1161
        %v1163 = vsel %vm1153, %v1160, %v1162
        %v1164 = vsel %vm1152, %v1142, %v1145
        %v1165 = vsel %vm1155, %v1151, 1326507024
        %v1166 = vsel %vm1154, %v1148, %v1165
        %v1167 = vsel %vm1153, %v1164, %v1166
        %v1168 = vshll.u32 %v1128, 8
        %v1169 = vmul.u32.u64.compose %v1168, %v1167
        %v1170 = vextract.low.u32 %v1169
        %v1171 = vextract.high.u32 %v1169
        %v1172 = vmul.u32.u64.compose %v1168, %v1163
        %v1173 = vextract.low.u32 %v1172
        %v1174 = vextract.high.u32 %v1172
        %v1175 = vmul.u32 %v1168, %v1159
        %v1176 = vadd.s32 %v1171, %v1173
        %vm1177 = vc.u32 %v1171, %v1173
        %v1178 = vadd.s32 %v1174, 1
        %v1179 = vsel %vm1177, %v1178, %v1174
        %v1180 = vadd.s32 %v1175, %v1179
        %v1181 = vadd.s32 %v1180, 536870912
        %v1182 = vshrl.u32 %v1181, 30
        %v1183 = vshll.u32 %v1182, 30
        %v1184 = vsub.s32 %v1180, %v1183
        %vm1185 = vcmp.lt.s32.totalorder %v1184, 0
        %v1186 = vsub.s32 0, %v1184
        %v1187 = vsel %vm1185, %v1186, %v1184
        %v1188 = vclz %v1187
        %v1189 = vsub.s32 %v1188, 2
        %vm1190 = vcmp.gt.s32.totalorder 0, %v1189
        %v1191 = vsel %vm1190, 0, %v1189
        %v1192 = vsub.s32 32, %v1191
        %v1193 = vshll.u32 %v1184, %v1191
        %v1194 = vshrl.u32 %v1176, %v1192
        %v1195 = vor.u32 %v1193, %v1194
        %v1196 = vsub.s32 4294967266, %v1191
        %v1197 = vadd.s32 %v1196, 127
        %v1198 = vshll.u32 %v1197, 23
        %v1199 = vor.u32 4788187, %v1198
        %v1200 = vand.u32 2147483647, %v1199
        %v1202 = vcvt.s32.f32 %v1195
        %v1203 = vmul.f32 %v1202, %v1200
        %v1204 = vxor.u32 %v1203, 2147483648
        %v1205 = vsel %vm1122, %v1204, %v1203
        %v1206 = vsub.s32 4, %v1182
        %v1207 = vsel %vm1122, %v1206, %v1182
        %v1208 = vsel %vm1121, %v270, %v1205
        %v1209 = vsel %vm1121, 0, %v1207
        %v1210 = vcosq.f32.pop %v1208
        %v1211 = vsinq.f32.pop %v1208
        %vm1212 = vweird.f32 %v270
        %v1213 = vadd.s32 %v1209, 3
        %v1214 = vand.u32 %v1213, 3
        %vm1215 = vcmp.lt.s32.totalorder %v1214, 2
        %vm1216 = vcmp.eq.s32.totalorder %v1214, 0
        %v1217 = vxor.u32 %v1211, 2147483648
        %v1218 = vsel %vm1216, %v1210, %v1217
        %vm1219 = vcmp.eq.s32.totalorder %v1214, 2
        %v1220 = vxor.u32 %v1210, 2147483648
        %v1221 = vsel %vm1219, %v1220, %v1211
        %v1222 = vsel %vm1215, %v1218, %v1221
        %v1223 = vsel %vm1212, nan, %v1222
        %v1224 = vand.u32 2147483647, %v271
        %vm1225 = vcmp.le.f32.partialorder %v1224, 0.7853982
        %vm1226 = vcmp.lt.s32.totalorder %v271, 0
        %v1227 = vand.u32 %v271, 2139095040
        %v1228 = vshrl.u32 %v1227, 23
        %v1229 = vsub.s32 %v1228, 127
        %v1230 = vand.u32 2147483647, %v271
        %v1231 = vand.u32 %v1230, 8388607
        %v1232 = vor.u32 %v1231, 8388608
        %v1233 = vsub.s32 0, %v1232
        %v1234 = vadd.s32 %v1229, 1
        %vm1235 = vcmp.gt.s32.totalorder %v1234, 0
        %v1236 = vsel %vm1235, %v1234, 0
        %v1237 = vshrl.u32 %v1236, 5
        %v1238 = vand.u32 %v1236, 31
        %v1239 = vsub.s32 32, %v1238
        %v1240 = vshrl.u32 683565275, %v1239
        %v1241 = vshll.u32 683565275, %v1238
        %v1242 = vshrl.u32 2475754826, %v1239
        %v1243 = vor.u32 %v1241, %v1242
        %v1244 = vshll.u32 2475754826, %v1238
        %v1245 = vshrl.u32 2131351028, %v1239
        %v1246 = vor.u32 %v1244, %v1245
        %v1247 = vshll.u32 2131351028, %v1238
        %v1248 = vshrl.u32 2102212464, %v1239
        %v1249 = vor.u32 %v1247, %v1248
        %v1250 = vshll.u32 2102212464, %v1238
        %v1251 = vshrl.u32 920167782, %v1239
        %v1252 = vor.u32 %v1250, %v1251
        %v1253 = vshll.u32 920167782, %v1238
        %v1254 = vshrl.u32 1326507024, %v1239
        %v1255 = vor.u32 %v1253, %v1254
        %vm1256 = vcmp.lt.s32.totalorder %v1237, 1
        %vm1257 = vcmp.lt.s32.totalorder %v1237, 2
        %vm1258 = vcmp.lt.s32.totalorder %v1237, 3
        %vm1259 = vcmp.lt.s32.totalorder %v1237, 4
        %v1260 = vsel %vm1256, %v1240, %v1243
        %v1261 = vsel %vm1259, %v1249, 2102212464
        %v1262 = vsel %vm1258, %v1246, %v1261
        %v1263 = vsel %vm1257, %v1260, %v1262
        %v1264 = vsel %vm1256, %v1243, %v1246
        %v1265 = vsel %vm1259, %v1252, 920167782
        %v1266 = vsel %vm1258, %v1249, %v1265
        %v1267 = vsel %vm1257, %v1264, %v1266
        %v1268 = vsel %vm1256, %v1246, %v1249
        %v1269 = vsel %vm1259, %v1255, 1326507024
        %v1270 = vsel %vm1258, %v1252, %v1269
        %v1271 = vsel %vm1257, %v1268, %v1270
        %v1272 = vshll.u32 %v1232, 8
        %v1273 = vmul.u32.u64.compose %v1272, %v1271
        %v1274 = vextract.low.u32 %v1273
        %v1275 = vextract.high.u32 %v1273
        %v1276 = vmul.u32.u64.compose %v1272, %v1267
        %v1277 = vextract.low.u32 %v1276
        %v1278 = vextract.high.u32 %v1276
        %v1279 = vmul.u32 %v1272, %v1263
        %v1280 = vadd.s32 %v1275, %v1277
        %vm1281 = vc.u32 %v1275, %v1277
        %v1282 = vadd.s32 %v1278, 1
        %v1283 = vsel %vm1281, %v1282, %v1278
        %v1284 = vadd.s32 %v1279, %v1283
        %v1285 = vadd.s32 %v1284, 536870912
        %v1286 = vshrl.u32 %v1285, 30
        %v1287 = vshll.u32 %v1286, 30
        %v1288 = vsub.s32 %v1284, %v1287
        %vm1289 = vcmp.lt.s32.totalorder %v1288, 0
        %v1290 = vsub.s32 0, %v1288
        %v1291 = vsel %vm1289, %v1290, %v1288
        %v1292 = vclz %v1291
        %v1293 = vsub.s32 %v1292, 2
        %vm1294 = vcmp.gt.s32.totalorder 0, %v1293
        %v1295 = vsel %vm1294, 0, %v1293
        %v1296 = vsub.s32 32, %v1295
        %v1297 = vshll.u32 %v1288, %v1295
        %v1298 = vshrl.u32 %v1280, %v1296
        %v1299 = vor.u32 %v1297, %v1298
        %v1300 = vsub.s32 4294967266, %v1295
        %v1301 = vadd.s32 %v1300, 127
        %v1302 = vshll.u32 %v1301, 23
        %v1303 = vor.u32 4788187, %v1302
        %v1304 = vand.u32 2147483647, %v1303
        %v1306 = vcvt.s32.f32 %v1299
        %v1307 = vmul.f32 %v1306, %v1304
        %v1308 = vxor.u32 %v1307, 2147483648
        %v1309 = vsel %vm1226, %v1308, %v1307
        %v1310 = vsub.s32 4, %v1286
        %v1311 = vsel %vm1226, %v1310, %v1286
        %v1312 = vsel %vm1225, %v271, %v1309
        %v1313 = vsel %vm1225, 0, %v1311
        %v1314 = vcosq.f32.pop %v1312
        %v1315 = vsinq.f32.pop %v1312
        %vm1316 = vweird.f32 %v271
        %v1317 = vadd.s32 %v1313, 3
        %v1318 = vand.u32 %v1317, 3
        %vm1319 = vcmp.lt.s32.totalorder %v1318, 2
        %vm1320 = vcmp.eq.s32.totalorder %v1318, 0
        %v1321 = vxor.u32 %v1315, 2147483648
        %v1322 = vsel %vm1320, %v1314, %v1321
        %vm1323 = vcmp.eq.s32.totalorder %v1318, 2
        %v1324 = vxor.u32 %v1314, 2147483648
        %v1325 = vsel %vm1323, %v1324, %v1315
        %v1326 = vsel %vm1319, %v1322, %v1325
        %v1327 = vsel %vm1316, nan, %v1326
        %v1328 = vand.u32 2147483647, %v272
        %vm1329 = vcmp.le.f32.partialorder %v1328, 0.7853982
        %vm1330 = vcmp.lt.s32.totalorder %v272, 0
        %v1331 = vand.u32 %v272, 2139095040
        %v1332 = vshrl.u32 %v1331, 23
        %v1333 = vsub.s32 %v1332, 127
        %v1334 = vand.u32 2147483647, %v272
        %v1335 = vand.u32 %v1334, 8388607
        %v1336 = vor.u32 %v1335, 8388608
        %v1337 = vsub.s32 0, %v1336
        %v1338 = vadd.s32 %v1333, 1
        %vm1339 = vcmp.gt.s32.totalorder %v1338, 0
        %v1340 = vsel %vm1339, %v1338, 0
        %v1341 = vshrl.u32 %v1340, 5
        %v1342 = vand.u32 %v1340, 31
        %v1343 = vsub.s32 32, %v1342
        %v1344 = vshrl.u32 683565275, %v1343
        %v1345 = vshll.u32 683565275, %v1342
        %v1346 = vshrl.u32 2475754826, %v1343
        %v1347 = vor.u32 %v1345, %v1346
        %v1348 = vshll.u32 2475754826, %v1342
        %v1349 = vshrl.u32 2131351028, %v1343
        %v1350 = vor.u32 %v1348, %v1349
        %v1351 = vshll.u32 2131351028, %v1342
        %v1352 = vshrl.u32 2102212464, %v1343
        %v1353 = vor.u32 %v1351, %v1352
        %v1354 = vshll.u32 2102212464, %v1342
        %v1355 = vshrl.u32 920167782, %v1343
        %v1356 = vor.u32 %v1354, %v1355
        %v1357 = vshll.u32 920167782, %v1342
        %v1358 = vshrl.u32 1326507024, %v1343
        %v1359 = vor.u32 %v1357, %v1358
        %vm1360 = vcmp.lt.s32.totalorder %v1341, 1
        %vm1361 = vcmp.lt.s32.totalorder %v1341, 2
        %vm1362 = vcmp.lt.s32.totalorder %v1341, 3
        %vm1363 = vcmp.lt.s32.totalorder %v1341, 4
        %v1364 = vsel %vm1360, %v1344, %v1347
        %v1365 = vsel %vm1363, %v1353, 2102212464
        %v1366 = vsel %vm1362, %v1350, %v1365
        %v1367 = vsel %vm1361, %v1364, %v1366
        %v1368 = vsel %vm1360, %v1347, %v1350
        %v1369 = vsel %vm1363, %v1356, 920167782
        %v1370 = vsel %vm1362, %v1353, %v1369
        %v1371 = vsel %vm1361, %v1368, %v1370
        %v1372 = vsel %vm1360, %v1350, %v1353
        %v1373 = vsel %vm1363, %v1359, 1326507024
        %v1374 = vsel %vm1362, %v1356, %v1373
        %v1375 = vsel %vm1361, %v1372, %v1374
        %v1376 = vshll.u32 %v1336, 8
        %v1377 = vmul.u32.u64.compose %v1376, %v1375
        %v1378 = vextract.low.u32 %v1377
        %v1379 = vextract.high.u32 %v1377
        %v1380 = vmul.u32.u64.compose %v1376, %v1371
        %v1381 = vextract.low.u32 %v1380
        %v1382 = vextract.high.u32 %v1380
        %v1383 = vmul.u32 %v1376, %v1367
        %v1384 = vadd.s32 %v1379, %v1381
        %vm1385 = vc.u32 %v1379, %v1381
        %v1386 = vadd.s32 %v1382, 1
        %v1387 = vsel %vm1385, %v1386, %v1382
        %v1388 = vadd.s32 %v1383, %v1387
        %v1389 = vadd.s32 %v1388, 536870912
        %v1390 = vshrl.u32 %v1389, 30
        %v1391 = vshll.u32 %v1390, 30
        %v1392 = vsub.s32 %v1388, %v1391
        %vm1393 = vcmp.lt.s32.totalorder %v1392, 0
        %v1394 = vsub.s32 0, %v1392
        %v1395 = vsel %vm1393, %v1394, %v1392
        %v1396 = vclz %v1395
        %v1397 = vsub.s32 %v1396, 2
        %vm1398 = vcmp.gt.s32.totalorder 0, %v1397
        %v1399 = vsel %vm1398, 0, %v1397
        %v1400 = vsub.s32 32, %v1399
        %v1401 = vshll.u32 %v1392, %v1399
        %v1402 = vshrl.u32 %v1384, %v1400
        %v1403 = vor.u32 %v1401, %v1402
        %v1404 = vsub.s32 4294967266, %v1399
        %v1405 = vadd.s32 %v1404, 127
        %v1406 = vshll.u32 %v1405, 23
        %v1407 = vor.u32 4788187, %v1406
        %v1408 = vand.u32 2147483647, %v1407
        %v1410 = vcvt.s32.f32 %v1403
        %v1411 = vmul.f32 %v1410, %v1408
        %v1412 = vxor.u32 %v1411, 2147483648
        %v1413 = vsel %vm1330, %v1412, %v1411
        %v1414 = vsub.s32 4, %v1390
        %v1415 = vsel %vm1330, %v1414, %v1390
        %v1416 = vsel %vm1329, %v272, %v1413
        %v1417 = vsel %vm1329, 0, %v1415
        %v1418 = vcosq.f32.pop %v1416
        %v1419 = vsinq.f32.pop %v1416
        %vm1420 = vweird.f32 %v272
        %v1421 = vadd.s32 %v1417, 3
        %v1422 = vand.u32 %v1421, 3
        %vm1423 = vcmp.lt.s32.totalorder %v1422, 2
        %vm1424 = vcmp.eq.s32.totalorder %v1422, 0
        %v1425 = vxor.u32 %v1419, 2147483648
        %v1426 = vsel %vm1424, %v1418, %v1425
        %vm1427 = vcmp.eq.s32.totalorder %v1422, 2
        %v1428 = vxor.u32 %v1418, 2147483648
        %v1429 = vsel %vm1427, %v1428, %v1419
        %v1430 = vsel %vm1423, %v1426, %v1429
        %v1431 = vsel %vm1420, nan, %v1430
        %v1432 = vand.u32 2147483647, %v273
        %vm1433 = vcmp.le.f32.partialorder %v1432, 0.7853982
        %vm1434 = vcmp.lt.s32.totalorder %v273, 0
        %v1435 = vand.u32 %v273, 2139095040
        %v1436 = vshrl.u32 %v1435, 23
        %v1437 = vsub.s32 %v1436, 127
        %v1438 = vand.u32 2147483647, %v273
        %v1439 = vand.u32 %v1438, 8388607
        %v1440 = vor.u32 %v1439, 8388608
        %v1441 = vsub.s32 0, %v1440
        %v1442 = vadd.s32 %v1437, 1
        %vm1443 = vcmp.gt.s32.totalorder %v1442, 0
        %v1444 = vsel %vm1443, %v1442, 0
        %v1445 = vshrl.u32 %v1444, 5
        %v1446 = vand.u32 %v1444, 31
        %v1447 = vsub.s32 32, %v1446
        %v1448 = vshrl.u32 683565275, %v1447
        %v1449 = vshll.u32 683565275, %v1446
        %v1450 = vshrl.u32 2475754826, %v1447
        %v1451 = vor.u32 %v1449, %v1450
        %v1452 = vshll.u32 2475754826, %v1446
        %v1453 = vshrl.u32 2131351028, %v1447
        %v1454 = vor.u32 %v1452, %v1453
        %v1455 = vshll.u32 2131351028, %v1446
        %v1456 = vshrl.u32 2102212464, %v1447
        %v1457 = vor.u32 %v1455, %v1456
        %v1458 = vshll.u32 2102212464, %v1446
        %v1459 = vshrl.u32 920167782, %v1447
        %v1460 = vor.u32 %v1458, %v1459
        %v1461 = vshll.u32 920167782, %v1446
        %v1462 = vshrl.u32 1326507024, %v1447
        %v1463 = vor.u32 %v1461, %v1462
        %vm1464 = vcmp.lt.s32.totalorder %v1445, 1
        %vm1465 = vcmp.lt.s32.totalorder %v1445, 2
        %vm1466 = vcmp.lt.s32.totalorder %v1445, 3
        %vm1467 = vcmp.lt.s32.totalorder %v1445, 4
        %v1468 = vsel %vm1464, %v1448, %v1451
        %v1469 = vsel %vm1467, %v1457, 2102212464
        %v1470 = vsel %vm1466, %v1454, %v1469
        %v1471 = vsel %vm1465, %v1468, %v1470
        %v1472 = vsel %vm1464, %v1451, %v1454
        %v1473 = vsel %vm1467, %v1460, 920167782
        %v1474 = vsel %vm1466, %v1457, %v1473
        %v1475 = vsel %vm1465, %v1472, %v1474
        %v1476 = vsel %vm1464, %v1454, %v1457
        %v1477 = vsel %vm1467, %v1463, 1326507024
        %v1478 = vsel %vm1466, %v1460, %v1477
        %v1479 = vsel %vm1465, %v1476, %v1478
        %v1480 = vshll.u32 %v1440, 8
        %v1481 = vmul.u32.u64.compose %v1480, %v1479
        %v1482 = vextract.low.u32 %v1481
        %v1483 = vextract.high.u32 %v1481
        %v1484 = vmul.u32.u64.compose %v1480, %v1475
        %v1485 = vextract.low.u32 %v1484
        %v1486 = vextract.high.u32 %v1484
        %v1487 = vmul.u32 %v1480, %v1471
        %v1488 = vadd.s32 %v1483, %v1485
        %vm1489 = vc.u32 %v1483, %v1485
        %v1490 = vadd.s32 %v1486, 1
        %v1491 = vsel %vm1489, %v1490, %v1486
        %v1492 = vadd.s32 %v1487, %v1491
        %v1493 = vadd.s32 %v1492, 536870912
        %v1494 = vshrl.u32 %v1493, 30
        %v1495 = vshll.u32 %v1494, 30
        %v1496 = vsub.s32 %v1492, %v1495
        %vm1497 = vcmp.lt.s32.totalorder %v1496, 0
        %v1498 = vsub.s32 0, %v1496
        %v1499 = vsel %vm1497, %v1498, %v1496
        %v1500 = vclz %v1499
        %v1501 = vsub.s32 %v1500, 2
        %vm1502 = vcmp.gt.s32.totalorder 0, %v1501
        %v1503 = vsel %vm1502, 0, %v1501
        %v1504 = vsub.s32 32, %v1503
        %v1505 = vshll.u32 %v1496, %v1503
        %v1506 = vshrl.u32 %v1488, %v1504
        %v1507 = vor.u32 %v1505, %v1506
        %v1508 = vsub.s32 4294967266, %v1503
        %v1509 = vadd.s32 %v1508, 127
        %v1510 = vshll.u32 %v1509, 23
        %v1511 = vor.u32 4788187, %v1510
        %v1512 = vand.u32 2147483647, %v1511
        %v1514 = vcvt.s32.f32 %v1507
        %v1515 = vmul.f32 %v1514, %v1512
        %v1516 = vxor.u32 %v1515, 2147483648
        %v1517 = vsel %vm1434, %v1516, %v1515
        %v1518 = vsub.s32 4, %v1494
        %v1519 = vsel %vm1434, %v1518, %v1494
        %v1520 = vsel %vm1433, %v273, %v1517
        %v1521 = vsel %vm1433, 0, %v1519
        %v1522 = vcosq.f32.pop %v1520
        %v1523 = vsinq.f32.pop %v1520
        %vm1524 = vweird.f32 %v273
        %v1525 = vadd.s32 %v1521, 3
        %v1526 = vand.u32 %v1525, 3
        %vm1527 = vcmp.lt.s32.totalorder %v1526, 2
        %vm1528 = vcmp.eq.s32.totalorder %v1526, 0
        %v1529 = vxor.u32 %v1523, 2147483648
        %v1530 = vsel %vm1528, %v1522, %v1529
        %vm1531 = vcmp.eq.s32.totalorder %v1526, 2
        %v1532 = vxor.u32 %v1522, 2147483648
        %v1533 = vsel %vm1531, %v1532, %v1523
        %v1534 = vsel %vm1527, %v1530, %v1533
        %v1535 = vsel %vm1524, nan, %v1534
        %v1536 = vand.u32 2147483647, %v274
        %vm1537 = vcmp.le.f32.partialorder %v1536, 0.7853982
        %vm1538 = vcmp.lt.s32.totalorder %v274, 0
        %v1539 = vand.u32 %v274, 2139095040
        %v1540 = vshrl.u32 %v1539, 23
        %v1541 = vsub.s32 %v1540, 127
        %v1542 = vand.u32 2147483647, %v274
        %v1543 = vand.u32 %v1542, 8388607
        %v1544 = vor.u32 %v1543, 8388608
        %v1545 = vsub.s32 0, %v1544
        %v1546 = vadd.s32 %v1541, 1
        %vm1547 = vcmp.gt.s32.totalorder %v1546, 0
        %v1548 = vsel %vm1547, %v1546, 0
        %v1549 = vshrl.u32 %v1548, 5
        %v1550 = vand.u32 %v1548, 31
        %v1551 = vsub.s32 32, %v1550
        %v1552 = vshrl.u32 683565275, %v1551
        %v1553 = vshll.u32 683565275, %v1550
        %v1554 = vshrl.u32 2475754826, %v1551
        %v1555 = vor.u32 %v1553, %v1554
        %v1556 = vshll.u32 2475754826, %v1550
        %v1557 = vshrl.u32 2131351028, %v1551
        %v1558 = vor.u32 %v1556, %v1557
        %v1559 = vshll.u32 2131351028, %v1550
        %v1560 = vshrl.u32 2102212464, %v1551
        %v1561 = vor.u32 %v1559, %v1560
        %v1562 = vshll.u32 2102212464, %v1550
        %v1563 = vshrl.u32 920167782, %v1551
        %v1564 = vor.u32 %v1562, %v1563
        %v1565 = vshll.u32 920167782, %v1550
        %v1566 = vshrl.u32 1326507024, %v1551
        %v1567 = vor.u32 %v1565, %v1566
        %vm1568 = vcmp.lt.s32.totalorder %v1549, 1
        %vm1569 = vcmp.lt.s32.totalorder %v1549, 2
        %vm1570 = vcmp.lt.s32.totalorder %v1549, 3
        %vm1571 = vcmp.lt.s32.totalorder %v1549, 4
        %v1572 = vsel %vm1568, %v1552, %v1555
        %v1573 = vsel %vm1571, %v1561, 2102212464
        %v1574 = vsel %vm1570, %v1558, %v1573
        %v1575 = vsel %vm1569, %v1572, %v1574
        %v1576 = vsel %vm1568, %v1555, %v1558
        %v1577 = vsel %vm1571, %v1564, 920167782
        %v1578 = vsel %vm1570, %v1561, %v1577
        %v1579 = vsel %vm1569, %v1576, %v1578
        %v1580 = vsel %vm1568, %v1558, %v1561
        %v1581 = vsel %vm1571, %v1567, 1326507024
        %v1582 = vsel %vm1570, %v1564, %v1581
        %v1583 = vsel %vm1569, %v1580, %v1582
        %v1584 = vshll.u32 %v1544, 8
        %v1585 = vmul.u32.u64.compose %v1584, %v1583
        %v1586 = vextract.low.u32 %v1585
        %v1587 = vextract.high.u32 %v1585
        %v1588 = vmul.u32.u64.compose %v1584, %v1579
        %v1589 = vextract.low.u32 %v1588
        %v1590 = vextract.high.u32 %v1588
        %v1591 = vmul.u32 %v1584, %v1575
        %v1592 = vadd.s32 %v1587, %v1589
        %vm1593 = vc.u32 %v1587, %v1589
        %v1594 = vadd.s32 %v1590, 1
        %v1595 = vsel %vm1593, %v1594, %v1590
        %v1596 = vadd.s32 %v1591, %v1595
        %v1597 = vadd.s32 %v1596, 536870912
        %v1598 = vshrl.u32 %v1597, 30
        %v1599 = vshll.u32 %v1598, 30
        %v1600 = vsub.s32 %v1596, %v1599
        %vm1601 = vcmp.lt.s32.totalorder %v1600, 0
        %v1602 = vsub.s32 0, %v1600
        %v1603 = vsel %vm1601, %v1602, %v1600
        %v1604 = vclz %v1603
        %v1605 = vsub.s32 %v1604, 2
        %vm1606 = vcmp.gt.s32.totalorder 0, %v1605
        %v1607 = vsel %vm1606, 0, %v1605
        %v1608 = vsub.s32 32, %v1607
        %v1609 = vshll.u32 %v1600, %v1607
        %v1610 = vshrl.u32 %v1592, %v1608
        %v1611 = vor.u32 %v1609, %v1610
        %v1612 = vsub.s32 4294967266, %v1607
        %v1613 = vadd.s32 %v1612, 127
        %v1614 = vshll.u32 %v1613, 23
        %v1615 = vor.u32 4788187, %v1614
        %v1616 = vand.u32 2147483647, %v1615
        %v1618 = vcvt.s32.f32 %v1611
        %v1619 = vmul.f32 %v1618, %v1616
        %v1620 = vxor.u32 %v1619, 2147483648
        %v1621 = vsel %vm1538, %v1620, %v1619
        %v1622 = vsub.s32 4, %v1598
        %v1623 = vsel %vm1538, %v1622, %v1598
        %v1624 = vsel %vm1537, %v274, %v1621
        %v1625 = vsel %vm1537, 0, %v1623
        %v1626 = vcosq.f32.pop %v1624
        %v1627 = vsinq.f32.pop %v1624
        %vm1628 = vweird.f32 %v274
        %v1629 = vadd.s32 %v1625, 3
        %v1630 = vand.u32 %v1629, 3
        %vm1631 = vcmp.lt.s32.totalorder %v1630, 2
        %vm1632 = vcmp.eq.s32.totalorder %v1630, 0
        %v1633 = vxor.u32 %v1627, 2147483648
        %v1634 = vsel %vm1632, %v1626, %v1633
        %vm1635 = vcmp.eq.s32.totalorder %v1630, 2
        %v1636 = vxor.u32 %v1626, 2147483648
        %v1637 = vsel %vm1635, %v1636, %v1627
        %v1638 = vsel %vm1631, %v1634, %v1637
        %v1639 = vsel %vm1628, nan, %v1638
        %v1640 = vand.u32 2147483647, %v275
        %vm1641 = vcmp.le.f32.partialorder %v1640, 0.7853982
        %vm1642 = vcmp.lt.s32.totalorder %v275, 0
        %v1643 = vand.u32 %v275, 2139095040
        %v1644 = vshrl.u32 %v1643, 23
        %v1645 = vsub.s32 %v1644, 127
        %v1646 = vand.u32 2147483647, %v275
        %v1647 = vand.u32 %v1646, 8388607
        %v1648 = vor.u32 %v1647, 8388608
        %v1649 = vsub.s32 0, %v1648
        %v1650 = vadd.s32 %v1645, 1
        %vm1651 = vcmp.gt.s32.totalorder %v1650, 0
        %v1652 = vsel %vm1651, %v1650, 0
        %v1653 = vshrl.u32 %v1652, 5
        %v1654 = vand.u32 %v1652, 31
        %v1655 = vsub.s32 32, %v1654
        %v1656 = vshrl.u32 683565275, %v1655
        %v1657 = vshll.u32 683565275, %v1654
        %v1658 = vshrl.u32 2475754826, %v1655
        %v1659 = vor.u32 %v1657, %v1658
        %v1660 = vshll.u32 2475754826, %v1654
        %v1661 = vshrl.u32 2131351028, %v1655
        %v1662 = vor.u32 %v1660, %v1661
        %v1663 = vshll.u32 2131351028, %v1654
        %v1664 = vshrl.u32 2102212464, %v1655
        %v1665 = vor.u32 %v1663, %v1664
        %v1666 = vshll.u32 2102212464, %v1654
        %v1667 = vshrl.u32 920167782, %v1655
        %v1668 = vor.u32 %v1666, %v1667
        %v1669 = vshll.u32 920167782, %v1654
        %v1670 = vshrl.u32 1326507024, %v1655
        %v1671 = vor.u32 %v1669, %v1670
        %vm1672 = vcmp.lt.s32.totalorder %v1653, 1
        %vm1673 = vcmp.lt.s32.totalorder %v1653, 2
        %vm1674 = vcmp.lt.s32.totalorder %v1653, 3
        %vm1675 = vcmp.lt.s32.totalorder %v1653, 4
        %v1676 = vsel %vm1672, %v1656, %v1659
        %v1677 = vsel %vm1675, %v1665, 2102212464
        %v1678 = vsel %vm1674, %v1662, %v1677
        %v1679 = vsel %vm1673, %v1676, %v1678
        %v1680 = vsel %vm1672, %v1659, %v1662
        %v1681 = vsel %vm1675, %v1668, 920167782
        %v1682 = vsel %vm1674, %v1665, %v1681
        %v1683 = vsel %vm1673, %v1680, %v1682
        %v1684 = vsel %vm1672, %v1662, %v1665
        %v1685 = vsel %vm1675, %v1671, 1326507024
        %v1686 = vsel %vm1674, %v1668, %v1685
        %v1687 = vsel %vm1673, %v1684, %v1686
        %v1688 = vshll.u32 %v1648, 8
        %v1689 = vmul.u32.u64.compose %v1688, %v1687
        %v1690 = vextract.low.u32 %v1689
        %v1691 = vextract.high.u32 %v1689
        %v1692 = vmul.u32.u64.compose %v1688, %v1683
        %v1693 = vextract.low.u32 %v1692
        %v1694 = vextract.high.u32 %v1692
        %v1695 = vmul.u32 %v1688, %v1679
        %v1696 = vadd.s32 %v1691, %v1693
        %vm1697 = vc.u32 %v1691, %v1693
        %v1698 = vadd.s32 %v1694, 1
        %v1699 = vsel %vm1697, %v1698, %v1694
        %v1700 = vadd.s32 %v1695, %v1699
        %v1701 = vadd.s32 %v1700, 536870912
        %v1702 = vshrl.u32 %v1701, 30
        %v1703 = vshll.u32 %v1702, 30
        %v1704 = vsub.s32 %v1700, %v1703
        %vm1705 = vcmp.lt.s32.totalorder %v1704, 0
        %v1706 = vsub.s32 0, %v1704
        %v1707 = vsel %vm1705, %v1706, %v1704
        %v1708 = vclz %v1707
        %v1709 = vsub.s32 %v1708, 2
        %vm1710 = vcmp.gt.s32.totalorder 0, %v1709
        %v1711 = vsel %vm1710, 0, %v1709
        %v1712 = vsub.s32 32, %v1711
        %v1713 = vshll.u32 %v1704, %v1711
        %v1714 = vshrl.u32 %v1696, %v1712
        %v1715 = vor.u32 %v1713, %v1714
        %v1716 = vsub.s32 4294967266, %v1711
        %v1717 = vadd.s32 %v1716, 127
        %v1718 = vshll.u32 %v1717, 23
        %v1719 = vor.u32 4788187, %v1718
        %v1720 = vand.u32 2147483647, %v1719
        %v1722 = vcvt.s32.f32 %v1715
        %v1723 = vmul.f32 %v1722, %v1720
        %v1724 = vxor.u32 %v1723, 2147483648
        %v1725 = vsel %vm1642, %v1724, %v1723
        %v1726 = vsub.s32 4, %v1702
        %v1727 = vsel %vm1642, %v1726, %v1702
        %v1728 = vsel %vm1641, %v275, %v1725
        %v1729 = vsel %vm1641, 0, %v1727
        %v1730 = vcosq.f32.pop %v1728
        %v1731 = vsinq.f32.pop %v1728
        %vm1732 = vweird.f32 %v275
        %v1733 = vadd.s32 %v1729, 3
        %v1734 = vand.u32 %v1733, 3
        %vm1735 = vcmp.lt.s32.totalorder %v1734, 2
        %vm1736 = vcmp.eq.s32.totalorder %v1734, 0
        %v1737 = vxor.u32 %v1731, 2147483648
        %v1738 = vsel %vm1736, %v1730, %v1737
        %vm1739 = vcmp.eq.s32.totalorder %v1734, 2
        %v1740 = vxor.u32 %v1730, 2147483648
        %v1741 = vsel %vm1739, %v1740, %v1731
        %v1742 = vsel %vm1735, %v1738, %v1741
        %v1743 = vsel %vm1732, nan, %v1742
        %v1744 = vand.u32 2147483647, %v276
        %vm1745 = vcmp.le.f32.partialorder %v1744, 0.7853982
        %vm1746 = vcmp.lt.s32.totalorder %v276, 0
        %v1747 = vand.u32 %v276, 2139095040
        %v1748 = vshrl.u32 %v1747, 23
        %v1749 = vsub.s32 %v1748, 127
        %v1750 = vand.u32 2147483647, %v276
        %v1751 = vand.u32 %v1750, 8388607
        %v1752 = vor.u32 %v1751, 8388608
        %v1753 = vsub.s32 0, %v1752
        %v1754 = vadd.s32 %v1749, 1
        %vm1755 = vcmp.gt.s32.totalorder %v1754, 0
        %v1756 = vsel %vm1755, %v1754, 0
        %v1757 = vshrl.u32 %v1756, 5
        %v1758 = vand.u32 %v1756, 31
        %v1759 = vsub.s32 32, %v1758
        %v1760 = vshrl.u32 683565275, %v1759
        %v1761 = vshll.u32 683565275, %v1758
        %v1762 = vshrl.u32 2475754826, %v1759
        %v1763 = vor.u32 %v1761, %v1762
        %v1764 = vshll.u32 2475754826, %v1758
        %v1765 = vshrl.u32 2131351028, %v1759
        %v1766 = vor.u32 %v1764, %v1765
        %v1767 = vshll.u32 2131351028, %v1758
        %v1768 = vshrl.u32 2102212464, %v1759
        %v1769 = vor.u32 %v1767, %v1768
        %v1770 = vshll.u32 2102212464, %v1758
        %v1771 = vshrl.u32 920167782, %v1759
        %v1772 = vor.u32 %v1770, %v1771
        %v1773 = vshll.u32 920167782, %v1758
        %v1774 = vshrl.u32 1326507024, %v1759
        %v1775 = vor.u32 %v1773, %v1774
        %vm1776 = vcmp.lt.s32.totalorder %v1757, 1
        %vm1777 = vcmp.lt.s32.totalorder %v1757, 2
        %vm1778 = vcmp.lt.s32.totalorder %v1757, 3
        %vm1779 = vcmp.lt.s32.totalorder %v1757, 4
        %v1780 = vsel %vm1776, %v1760, %v1763
        %v1781 = vsel %vm1779, %v1769, 2102212464
        %v1782 = vsel %vm1778, %v1766, %v1781
        %v1783 = vsel %vm1777, %v1780, %v1782
        %v1784 = vsel %vm1776, %v1763, %v1766
        %v1785 = vsel %vm1779, %v1772, 920167782
        %v1786 = vsel %vm1778, %v1769, %v1785
        %v1787 = vsel %vm1777, %v1784, %v1786
        %v1788 = vsel %vm1776, %v1766, %v1769
        %v1789 = vsel %vm1779, %v1775, 1326507024
        %v1790 = vsel %vm1778, %v1772, %v1789
        %v1791 = vsel %vm1777, %v1788, %v1790
        %v1792 = vshll.u32 %v1752, 8
        %v1793 = vmul.u32.u64.compose %v1792, %v1791
        %v1794 = vextract.low.u32 %v1793
        %v1795 = vextract.high.u32 %v1793
        %v1796 = vmul.u32.u64.compose %v1792, %v1787
        %v1797 = vextract.low.u32 %v1796
        %v1798 = vextract.high.u32 %v1796
        %v1799 = vmul.u32 %v1792, %v1783
        %v1800 = vadd.s32 %v1795, %v1797
        %vm1801 = vc.u32 %v1795, %v1797
        %v1802 = vadd.s32 %v1798, 1
        %v1803 = vsel %vm1801, %v1802, %v1798
        %v1804 = vadd.s32 %v1799, %v1803
        %v1805 = vadd.s32 %v1804, 536870912
        %v1806 = vshrl.u32 %v1805, 30
        %v1807 = vshll.u32 %v1806, 30
        %v1808 = vsub.s32 %v1804, %v1807
        %vm1809 = vcmp.lt.s32.totalorder %v1808, 0
        %v1810 = vsub.s32 0, %v1808
        %v1811 = vsel %vm1809, %v1810, %v1808
        %v1812 = vclz %v1811
        %v1813 = vsub.s32 %v1812, 2
        %vm1814 = vcmp.gt.s32.totalorder 0, %v1813
        %v1815 = vsel %vm1814, 0, %v1813
        %v1816 = vsub.s32 32, %v1815
        %v1817 = vshll.u32 %v1808, %v1815
        %v1818 = vshrl.u32 %v1800, %v1816
        %v1819 = vor.u32 %v1817, %v1818
        %v1820 = vsub.s32 4294967266, %v1815
        %v1821 = vadd.s32 %v1820, 127
        %v1822 = vshll.u32 %v1821, 23
        %v1823 = vor.u32 4788187, %v1822
        %v1824 = vand.u32 2147483647, %v1823
        %v1826 = vcvt.s32.f32 %v1819
        %v1827 = vmul.f32 %v1826, %v1824
        %v1828 = vxor.u32 %v1827, 2147483648
        %v1829 = vsel %vm1746, %v1828, %v1827
        %v1830 = vsub.s32 4, %v1806
        %v1831 = vsel %vm1746, %v1830, %v1806
        %v1832 = vsel %vm1745, %v276, %v1829
        %v1833 = vsel %vm1745, 0, %v1831
        %v1834 = vcosq.f32.pop %v1832
        %v1835 = vsinq.f32.pop %v1832
        %vm1836 = vweird.f32 %v276
        %v1837 = vadd.s32 %v1833, 3
        %v1838 = vand.u32 %v1837, 3
        %vm1839 = vcmp.lt.s32.totalorder %v1838, 2
        %vm1840 = vcmp.eq.s32.totalorder %v1838, 0
        %v1841 = vxor.u32 %v1835, 2147483648
        %v1842 = vsel %vm1840, %v1834, %v1841
        %vm1843 = vcmp.eq.s32.totalorder %v1838, 2
        %v1844 = vxor.u32 %v1834, 2147483648
        %v1845 = vsel %vm1843, %v1844, %v1835
        %v1846 = vsel %vm1839, %v1842, %v1845
        %v1847 = vsel %vm1836, nan, %v1846
        %v1848 = vand.u32 2147483647, %v277
        %vm1849 = vcmp.le.f32.partialorder %v1848, 0.7853982
        %vm1850 = vcmp.lt.s32.totalorder %v277, 0
        %v1851 = vand.u32 %v277, 2139095040
        %v1852 = vshrl.u32 %v1851, 23
        %v1853 = vsub.s32 %v1852, 127
        %v1854 = vand.u32 2147483647, %v277
        %v1855 = vand.u32 %v1854, 8388607
        %v1856 = vor.u32 %v1855, 8388608
        %v1857 = vsub.s32 0, %v1856
        %v1858 = vadd.s32 %v1853, 1
        %vm1859 = vcmp.gt.s32.totalorder %v1858, 0
        %v1860 = vsel %vm1859, %v1858, 0
        %v1861 = vshrl.u32 %v1860, 5
        %v1862 = vand.u32 %v1860, 31
        %v1863 = vsub.s32 32, %v1862
        %v1864 = vshrl.u32 683565275, %v1863
        %v1865 = vshll.u32 683565275, %v1862
        %v1866 = vshrl.u32 2475754826, %v1863
        %v1867 = vor.u32 %v1865, %v1866
        %v1868 = vshll.u32 2475754826, %v1862
        %v1869 = vshrl.u32 2131351028, %v1863
        %v1870 = vor.u32 %v1868, %v1869
        %v1871 = vshll.u32 2131351028, %v1862
        %v1872 = vshrl.u32 2102212464, %v1863
        %v1873 = vor.u32 %v1871, %v1872
        %v1874 = vshll.u32 2102212464, %v1862
        %v1875 = vshrl.u32 920167782, %v1863
        %v1876 = vor.u32 %v1874, %v1875
        %v1877 = vshll.u32 920167782, %v1862
        %v1878 = vshrl.u32 1326507024, %v1863
        %v1879 = vor.u32 %v1877, %v1878
        %vm1880 = vcmp.lt.s32.totalorder %v1861, 1
        %vm1881 = vcmp.lt.s32.totalorder %v1861, 2
        %vm1882 = vcmp.lt.s32.totalorder %v1861, 3
        %vm1883 = vcmp.lt.s32.totalorder %v1861, 4
        %v1884 = vsel %vm1880, %v1864, %v1867
        %v1885 = vsel %vm1883, %v1873, 2102212464
        %v1886 = vsel %vm1882, %v1870, %v1885
        %v1887 = vsel %vm1881, %v1884, %v1886
        %v1888 = vsel %vm1880, %v1867, %v1870
        %v1889 = vsel %vm1883, %v1876, 920167782
        %v1890 = vsel %vm1882, %v1873, %v1889
        %v1891 = vsel %vm1881, %v1888, %v1890
        %v1892 = vsel %vm1880, %v1870, %v1873
        %v1893 = vsel %vm1883, %v1879, 1326507024
        %v1894 = vsel %vm1882, %v1876, %v1893
        %v1895 = vsel %vm1881, %v1892, %v1894
        %v1896 = vshll.u32 %v1856, 8
        %v1897 = vmul.u32.u64.compose %v1896, %v1895
        %v1898 = vextract.low.u32 %v1897
        %v1899 = vextract.high.u32 %v1897
        %v1900 = vmul.u32.u64.compose %v1896, %v1891
        %v1901 = vextract.low.u32 %v1900
        %v1902 = vextract.high.u32 %v1900
        %v1903 = vmul.u32 %v1896, %v1887
        %v1904 = vadd.s32 %v1899, %v1901
        %vm1905 = vc.u32 %v1899, %v1901
        %v1906 = vadd.s32 %v1902, 1
        %v1907 = vsel %vm1905, %v1906, %v1902
        %v1908 = vadd.s32 %v1903, %v1907
        %v1909 = vadd.s32 %v1908, 536870912
        %v1910 = vshrl.u32 %v1909, 30
        %v1911 = vshll.u32 %v1910, 30
        %v1912 = vsub.s32 %v1908, %v1911
        %vm1913 = vcmp.lt.s32.totalorder %v1912, 0
        %v1914 = vsub.s32 0, %v1912
        %v1915 = vsel %vm1913, %v1914, %v1912
        %v1916 = vclz %v1915
        %v1917 = vsub.s32 %v1916, 2
        %vm1918 = vcmp.gt.s32.totalorder 0, %v1917
        %v1919 = vsel %vm1918, 0, %v1917
        %v1920 = vsub.s32 32, %v1919
        %v1921 = vshll.u32 %v1912, %v1919
        %v1922 = vshrl.u32 %v1904, %v1920
        %v1923 = vor.u32 %v1921, %v1922
        %v1924 = vsub.s32 4294967266, %v1919
        %v1925 = vadd.s32 %v1924, 127
        %v1926 = vshll.u32 %v1925, 23
        %v1927 = vor.u32 4788187, %v1926
        %v1928 = vand.u32 2147483647, %v1927
        %v1930 = vcvt.s32.f32 %v1923
        %v1931 = vmul.f32 %v1930, %v1928
        %v1932 = vxor.u32 %v1931, 2147483648
        %v1933 = vsel %vm1850, %v1932, %v1931
        %v1934 = vsub.s32 4, %v1910
        %v1935 = vsel %vm1850, %v1934, %v1910
        %v1936 = vsel %vm1849, %v277, %v1933
        %v1937 = vsel %vm1849, 0, %v1935
        %v1938 = vcosq.f32.pop %v1936
        %v1939 = vsinq.f32.pop %v1936
        %vm1940 = vweird.f32 %v277
        %v1941 = vadd.s32 %v1937, 3
        %v1942 = vand.u32 %v1941, 3
        %vm1943 = vcmp.lt.s32.totalorder %v1942, 2
        %vm1944 = vcmp.eq.s32.totalorder %v1942, 0
        %v1945 = vxor.u32 %v1939, 2147483648
        %v1946 = vsel %vm1944, %v1938, %v1945
        %vm1947 = vcmp.eq.s32.totalorder %v1942, 2
        %v1948 = vxor.u32 %v1938, 2147483648
        %v1949 = vsel %vm1947, %v1948, %v1939
        %v1950 = vsel %vm1943, %v1946, %v1949
        %v1951 = vsel %vm1940, nan, %v1950
        %v1952 = vand.u32 2147483647, %v278
        %vm1953 = vcmp.le.f32.partialorder %v1952, 0.7853982
        %vm1954 = vcmp.lt.s32.totalorder %v278, 0
        %v1955 = vand.u32 %v278, 2139095040
        %v1956 = vshrl.u32 %v1955, 23
        %v1957 = vsub.s32 %v1956, 127
        %v1958 = vand.u32 2147483647, %v278
        %v1959 = vand.u32 %v1958, 8388607
        %v1960 = vor.u32 %v1959, 8388608
        %v1961 = vsub.s32 0, %v1960
        %v1962 = vadd.s32 %v1957, 1
        %vm1963 = vcmp.gt.s32.totalorder %v1962, 0
        %v1964 = vsel %vm1963, %v1962, 0
        %v1965 = vshrl.u32 %v1964, 5
        %v1966 = vand.u32 %v1964, 31
        %v1967 = vsub.s32 32, %v1966
        %v1968 = vshrl.u32 683565275, %v1967
        %v1969 = vshll.u32 683565275, %v1966
        %v1970 = vshrl.u32 2475754826, %v1967
        %v1971 = vor.u32 %v1969, %v1970
        %v1972 = vshll.u32 2475754826, %v1966
        %v1973 = vshrl.u32 2131351028, %v1967
        %v1974 = vor.u32 %v1972, %v1973
        %v1975 = vshll.u32 2131351028, %v1966
        %v1976 = vshrl.u32 2102212464, %v1967
        %v1977 = vor.u32 %v1975, %v1976
        %v1978 = vshll.u32 2102212464, %v1966
        %v1979 = vshrl.u32 920167782, %v1967
        %v1980 = vor.u32 %v1978, %v1979
        %v1981 = vshll.u32 920167782, %v1966
        %v1982 = vshrl.u32 1326507024, %v1967
        %v1983 = vor.u32 %v1981, %v1982
        %vm1984 = vcmp.lt.s32.totalorder %v1965, 1
        %vm1985 = vcmp.lt.s32.totalorder %v1965, 2
        %vm1986 = vcmp.lt.s32.totalorder %v1965, 3
        %vm1987 = vcmp.lt.s32.totalorder %v1965, 4
        %v1988 = vsel %vm1984, %v1968, %v1971
        %v1989 = vsel %vm1987, %v1977, 2102212464
        %v1990 = vsel %vm1986, %v1974, %v1989
        %v1991 = vsel %vm1985, %v1988, %v1990
        %v1992 = vsel %vm1984, %v1971, %v1974
        %v1993 = vsel %vm1987, %v1980, 920167782
        %v1994 = vsel %vm1986, %v1977, %v1993
        %v1995 = vsel %vm1985, %v1992, %v1994
        %v1996 = vsel %vm1984, %v1974, %v1977
        %v1997 = vsel %vm1987, %v1983, 1326507024
        %v1998 = vsel %vm1986, %v1980, %v1997
        %v1999 = vsel %vm1985, %v1996, %v1998
        %v2000 = vshll.u32 %v1960, 8
        %v2001 = vmul.u32.u64.compose %v2000, %v1999
        %v2002 = vextract.low.u32 %v2001
        %v2003 = vextract.high.u32 %v2001
        %v2004 = vmul.u32.u64.compose %v2000, %v1995
        %v2005 = vextract.low.u32 %v2004
        %v2006 = vextract.high.u32 %v2004
        %v2007 = vmul.u32 %v2000, %v1991
        %v2008 = vadd.s32 %v2003, %v2005
        %vm2009 = vc.u32 %v2003, %v2005
        %v2010 = vadd.s32 %v2006, 1
        %v2011 = vsel %vm2009, %v2010, %v2006
        %v2012 = vadd.s32 %v2007, %v2011
        %v2013 = vadd.s32 %v2012, 536870912
        %v2014 = vshrl.u32 %v2013, 30
        %v2015 = vshll.u32 %v2014, 30
        %v2016 = vsub.s32 %v2012, %v2015
        %vm2017 = vcmp.lt.s32.totalorder %v2016, 0
        %v2018 = vsub.s32 0, %v2016
        %v2019 = vsel %vm2017, %v2018, %v2016
        %v2020 = vclz %v2019
        %v2021 = vsub.s32 %v2020, 2
        %vm2022 = vcmp.gt.s32.totalorder 0, %v2021
        %v2023 = vsel %vm2022, 0, %v2021
        %v2024 = vsub.s32 32, %v2023
        %v2025 = vshll.u32 %v2016, %v2023
        %v2026 = vshrl.u32 %v2008, %v2024
        %v2027 = vor.u32 %v2025, %v2026
        %v2028 = vsub.s32 4294967266, %v2023
        %v2029 = vadd.s32 %v2028, 127
        %v2030 = vshll.u32 %v2029, 23
        %v2031 = vor.u32 4788187, %v2030
        %v2032 = vand.u32 2147483647, %v2031
        %v2034 = vcvt.s32.f32 %v2027
        %v2035 = vmul.f32 %v2034, %v2032
        %v2036 = vxor.u32 %v2035, 2147483648
        %v2037 = vsel %vm1954, %v2036, %v2035
        %v2038 = vsub.s32 4, %v2014
        %v2039 = vsel %vm1954, %v2038, %v2014
        %v2040 = vsel %vm1953, %v278, %v2037
        %v2041 = vsel %vm1953, 0, %v2039
        %v2042 = vcosq.f32.pop %v2040
        %v2043 = vsinq.f32.pop %v2040
        %vm2044 = vweird.f32 %v278
        %v2045 = vadd.s32 %v2041, 3
        %v2046 = vand.u32 %v2045, 3
        %vm2047 = vcmp.lt.s32.totalorder %v2046, 2
        %vm2048 = vcmp.eq.s32.totalorder %v2046, 0
        %v2049 = vxor.u32 %v2043, 2147483648
        %v2050 = vsel %vm2048, %v2042, %v2049
        %vm2051 = vcmp.eq.s32.totalorder %v2046, 2
        %v2052 = vxor.u32 %v2042, 2147483648
        %v2053 = vsel %vm2051, %v2052, %v2043
        %v2054 = vsel %vm2047, %v2050, %v2053
        %v2055 = vsel %vm2044, nan, %v2054
        %v2056 = vand.u32 2147483647, %v279
        %vm2057 = vcmp.le.f32.partialorder %v2056, 0.7853982
        %vm2058 = vcmp.lt.s32.totalorder %v279, 0
        %v2059 = vand.u32 %v279, 2139095040
        %v2060 = vshrl.u32 %v2059, 23
        %v2061 = vsub.s32 %v2060, 127
        %v2062 = vand.u32 2147483647, %v279
        %v2063 = vand.u32 %v2062, 8388607
        %v2064 = vor.u32 %v2063, 8388608
        %v2065 = vsub.s32 0, %v2064
        %v2066 = vadd.s32 %v2061, 1
        %vm2067 = vcmp.gt.s32.totalorder %v2066, 0
        %v2068 = vsel %vm2067, %v2066, 0
        %v2069 = vshrl.u32 %v2068, 5
        %v2070 = vand.u32 %v2068, 31
        %v2071 = vsub.s32 32, %v2070
        %v2072 = vshrl.u32 683565275, %v2071
        %v2073 = vshll.u32 683565275, %v2070
        %v2074 = vshrl.u32 2475754826, %v2071
        %v2075 = vor.u32 %v2073, %v2074
        %v2076 = vshll.u32 2475754826, %v2070
        %v2077 = vshrl.u32 2131351028, %v2071
        %v2078 = vor.u32 %v2076, %v2077
        %v2079 = vshll.u32 2131351028, %v2070
        %v2080 = vshrl.u32 2102212464, %v2071
        %v2081 = vor.u32 %v2079, %v2080
        %v2082 = vshll.u32 2102212464, %v2070
        %v2083 = vshrl.u32 920167782, %v2071
        %v2084 = vor.u32 %v2082, %v2083
        %v2085 = vshll.u32 920167782, %v2070
        %v2086 = vshrl.u32 1326507024, %v2071
        %v2087 = vor.u32 %v2085, %v2086
        %vm2088 = vcmp.lt.s32.totalorder %v2069, 1
        %vm2089 = vcmp.lt.s32.totalorder %v2069, 2
        %vm2090 = vcmp.lt.s32.totalorder %v2069, 3
        %vm2091 = vcmp.lt.s32.totalorder %v2069, 4
        %v2092 = vsel %vm2088, %v2072, %v2075
        %v2093 = vsel %vm2091, %v2081, 2102212464
        %v2094 = vsel %vm2090, %v2078, %v2093
        %v2095 = vsel %vm2089, %v2092, %v2094
        %v2096 = vsel %vm2088, %v2075, %v2078
        %v2097 = vsel %vm2091, %v2084, 920167782
        %v2098 = vsel %vm2090, %v2081, %v2097
        %v2099 = vsel %vm2089, %v2096, %v2098
        %v2100 = vsel %vm2088, %v2078, %v2081
        %v2101 = vsel %vm2091, %v2087, 1326507024
        %v2102 = vsel %vm2090, %v2084, %v2101
        %v2103 = vsel %vm2089, %v2100, %v2102
        %v2104 = vshll.u32 %v2064, 8
        %v2105 = vmul.u32.u64.compose %v2104, %v2103
        %v2106 = vextract.low.u32 %v2105
        %v2107 = vextract.high.u32 %v2105
        %v2108 = vmul.u32.u64.compose %v2104, %v2099
        %v2109 = vextract.low.u32 %v2108
        %v2110 = vextract.high.u32 %v2108
        %v2111 = vmul.u32 %v2104, %v2095
        %v2112 = vadd.s32 %v2107, %v2109
        %vm2113 = vc.u32 %v2107, %v2109
        %v2114 = vadd.s32 %v2110, 1
        %v2115 = vsel %vm2113, %v2114, %v2110
        %v2116 = vadd.s32 %v2111, %v2115
        %v2117 = vadd.s32 %v2116, 536870912
        %v2118 = vshrl.u32 %v2117, 30
        %v2119 = vshll.u32 %v2118, 30
        %v2120 = vsub.s32 %v2116, %v2119
        %vm2121 = vcmp.lt.s32.totalorder %v2120, 0
        %v2122 = vsub.s32 0, %v2120
        %v2123 = vsel %vm2121, %v2122, %v2120
        %v2124 = vclz %v2123
        %v2125 = vsub.s32 %v2124, 2
        %vm2126 = vcmp.gt.s32.totalorder 0, %v2125
        %v2127 = vsel %vm2126, 0, %v2125
        %v2128 = vsub.s32 32, %v2127
        %v2129 = vshll.u32 %v2120, %v2127
        %v2130 = vshrl.u32 %v2112, %v2128
        %v2131 = vor.u32 %v2129, %v2130
        %v2132 = vsub.s32 4294967266, %v2127
        %v2133 = vadd.s32 %v2132, 127
        %v2134 = vshll.u32 %v2133, 23
        %v2135 = vor.u32 4788187, %v2134
        %v2136 = vand.u32 2147483647, %v2135
        %v2138 = vcvt.s32.f32 %v2131
        %v2139 = vmul.f32 %v2138, %v2136
        %v2140 = vxor.u32 %v2139, 2147483648
        %v2141 = vsel %vm2058, %v2140, %v2139
        %v2142 = vsub.s32 4, %v2118
        %v2143 = vsel %vm2058, %v2142, %v2118
        %v2144 = vsel %vm2057, %v279, %v2141
        %v2145 = vsel %vm2057, 0, %v2143
        %v2146 = vcosq.f32.pop %v2144
        %v2147 = vsinq.f32.pop %v2144
        %vm2148 = vweird.f32 %v279
        %v2149 = vadd.s32 %v2145, 3
        %v2150 = vand.u32 %v2149, 3
        %vm2151 = vcmp.lt.s32.totalorder %v2150, 2
        %vm2152 = vcmp.eq.s32.totalorder %v2150, 0
        %v2153 = vxor.u32 %v2147, 2147483648
        %v2154 = vsel %vm2152, %v2146, %v2153
        %vm2155 = vcmp.eq.s32.totalorder %v2150, 2
        %v2156 = vxor.u32 %v2146, 2147483648
        %v2157 = vsel %vm2155, %v2156, %v2147
        %v2158 = vsel %vm2151, %v2154, %v2157
        %v2159 = vsel %vm2148, nan, %v2158
        %v2160 = vand.u32 2147483647, %v280
        %vm2161 = vcmp.le.f32.partialorder %v2160, 0.7853982
        %vm2162 = vcmp.lt.s32.totalorder %v280, 0
        %v2163 = vand.u32 %v280, 2139095040
        %v2164 = vshrl.u32 %v2163, 23
        %v2165 = vsub.s32 %v2164, 127
        %v2166 = vand.u32 2147483647, %v280
        %v2167 = vand.u32 %v2166, 8388607
        %v2168 = vor.u32 %v2167, 8388608
        %v2169 = vsub.s32 0, %v2168
        %v2170 = vadd.s32 %v2165, 1
        %vm2171 = vcmp.gt.s32.totalorder %v2170, 0
        %v2172 = vsel %vm2171, %v2170, 0
        %v2173 = vshrl.u32 %v2172, 5
        %v2174 = vand.u32 %v2172, 31
        %v2175 = vsub.s32 32, %v2174
        %v2176 = vshrl.u32 683565275, %v2175
        %v2177 = vshll.u32 683565275, %v2174
        %v2178 = vshrl.u32 2475754826, %v2175
        %v2179 = vor.u32 %v2177, %v2178
        %v2180 = vshll.u32 2475754826, %v2174
        %v2181 = vshrl.u32 2131351028, %v2175
        %v2182 = vor.u32 %v2180, %v2181
        %v2183 = vshll.u32 2131351028, %v2174
        %v2184 = vshrl.u32 2102212464, %v2175
        %v2185 = vor.u32 %v2183, %v2184
        %v2186 = vshll.u32 2102212464, %v2174
        %v2187 = vshrl.u32 920167782, %v2175
        %v2188 = vor.u32 %v2186, %v2187
        %v2189 = vshll.u32 920167782, %v2174
        %v2190 = vshrl.u32 1326507024, %v2175
        %v2191 = vor.u32 %v2189, %v2190
        %vm2192 = vcmp.lt.s32.totalorder %v2173, 1
        %vm2193 = vcmp.lt.s32.totalorder %v2173, 2
        %vm2194 = vcmp.lt.s32.totalorder %v2173, 3
        %vm2195 = vcmp.lt.s32.totalorder %v2173, 4
        %v2196 = vsel %vm2192, %v2176, %v2179
        %v2197 = vsel %vm2195, %v2185, 2102212464
        %v2198 = vsel %vm2194, %v2182, %v2197
        %v2199 = vsel %vm2193, %v2196, %v2198
        %v2200 = vsel %vm2192, %v2179, %v2182
        %v2201 = vsel %vm2195, %v2188, 920167782
        %v2202 = vsel %vm2194, %v2185, %v2201
        %v2203 = vsel %vm2193, %v2200, %v2202
        %v2204 = vsel %vm2192, %v2182, %v2185
        %v2205 = vsel %vm2195, %v2191, 1326507024
        %v2206 = vsel %vm2194, %v2188, %v2205
        %v2207 = vsel %vm2193, %v2204, %v2206
        %v2208 = vshll.u32 %v2168, 8
        %v2209 = vmul.u32.u64.compose %v2208, %v2207
        %v2210 = vextract.low.u32 %v2209
        %v2211 = vextract.high.u32 %v2209
        %v2212 = vmul.u32.u64.compose %v2208, %v2203
        %v2213 = vextract.low.u32 %v2212
        %v2214 = vextract.high.u32 %v2212
        %v2215 = vmul.u32 %v2208, %v2199
        %v2216 = vadd.s32 %v2211, %v2213
        %vm2217 = vc.u32 %v2211, %v2213
        %v2218 = vadd.s32 %v2214, 1
        %v2219 = vsel %vm2217, %v2218, %v2214
        %v2220 = vadd.s32 %v2215, %v2219
        %v2221 = vadd.s32 %v2220, 536870912
        %v2222 = vshrl.u32 %v2221, 30
        %v2223 = vshll.u32 %v2222, 30
        %v2224 = vsub.s32 %v2220, %v2223
        %vm2225 = vcmp.lt.s32.totalorder %v2224, 0
        %v2226 = vsub.s32 0, %v2224
        %v2227 = vsel %vm2225, %v2226, %v2224
        %v2228 = vclz %v2227
        %v2229 = vsub.s32 %v2228, 2
        %vm2230 = vcmp.gt.s32.totalorder 0, %v2229
        %v2231 = vsel %vm2230, 0, %v2229
        %v2232 = vsub.s32 32, %v2231
        %v2233 = vshll.u32 %v2224, %v2231
        %v2234 = vshrl.u32 %v2216, %v2232
        %v2235 = vor.u32 %v2233, %v2234
        %v2236 = vsub.s32 4294967266, %v2231
        %v2237 = vadd.s32 %v2236, 127
        %v2238 = vshll.u32 %v2237, 23
        %v2239 = vor.u32 4788187, %v2238
        %v2240 = vand.u32 2147483647, %v2239
        %v2242 = vcvt.s32.f32 %v2235
        %v2243 = vmul.f32 %v2242, %v2240
        %v2244 = vxor.u32 %v2243, 2147483648
        %v2245 = vsel %vm2162, %v2244, %v2243
        %v2246 = vsub.s32 4, %v2222
        %v2247 = vsel %vm2162, %v2246, %v2222
        %v2248 = vsel %vm2161, %v280, %v2245
        %v2249 = vsel %vm2161, 0, %v2247
        %v2250 = vcosq.f32.pop %v2248
        %v2251 = vsinq.f32.pop %v2248
        %vm2252 = vweird.f32 %v280
        %v2253 = vadd.s32 %v2249, 3
        %v2254 = vand.u32 %v2253, 3
        %vm2255 = vcmp.lt.s32.totalorder %v2254, 2
        %vm2256 = vcmp.eq.s32.totalorder %v2254, 0
        %v2257 = vxor.u32 %v2251, 2147483648
        %v2258 = vsel %vm2256, %v2250, %v2257
        %vm2259 = vcmp.eq.s32.totalorder %v2254, 2
        %v2260 = vxor.u32 %v2250, 2147483648
        %v2261 = vsel %vm2259, %v2260, %v2251
        %v2262 = vsel %vm2255, %v2258, %v2261
        %v2263 = vsel %vm2252, nan, %v2262
        %v2264 = vand.u32 2147483647, %v281
        %vm2265 = vcmp.le.f32.partialorder %v2264, 0.7853982
        %vm2266 = vcmp.lt.s32.totalorder %v281, 0
        %v2267 = vand.u32 %v281, 2139095040
        %v2268 = vshrl.u32 %v2267, 23
        %v2269 = vsub.s32 %v2268, 127
        %v2270 = vand.u32 2147483647, %v281
        %v2271 = vand.u32 %v2270, 8388607
        %v2272 = vor.u32 %v2271, 8388608
        %v2273 = vsub.s32 0, %v2272
        %v2274 = vadd.s32 %v2269, 1
        %vm2275 = vcmp.gt.s32.totalorder %v2274, 0
        %v2276 = vsel %vm2275, %v2274, 0
        %v2277 = vshrl.u32 %v2276, 5
        %v2278 = vand.u32 %v2276, 31
        %v2279 = vsub.s32 32, %v2278
        %v2280 = vshrl.u32 683565275, %v2279
        %v2281 = vshll.u32 683565275, %v2278
        %v2282 = vshrl.u32 2475754826, %v2279
        %v2283 = vor.u32 %v2281, %v2282
        %v2284 = vshll.u32 2475754826, %v2278
        %v2285 = vshrl.u32 2131351028, %v2279
        %v2286 = vor.u32 %v2284, %v2285
        %v2287 = vshll.u32 2131351028, %v2278
        %v2288 = vshrl.u32 2102212464, %v2279
        %v2289 = vor.u32 %v2287, %v2288
        %v2290 = vshll.u32 2102212464, %v2278
        %v2291 = vshrl.u32 920167782, %v2279
        %v2292 = vor.u32 %v2290, %v2291
        %v2293 = vshll.u32 920167782, %v2278
        %v2294 = vshrl.u32 1326507024, %v2279
        %v2295 = vor.u32 %v2293, %v2294
        %vm2296 = vcmp.lt.s32.totalorder %v2277, 1
        %vm2297 = vcmp.lt.s32.totalorder %v2277, 2
        %vm2298 = vcmp.lt.s32.totalorder %v2277, 3
        %vm2299 = vcmp.lt.s32.totalorder %v2277, 4
        %v2300 = vsel %vm2296, %v2280, %v2283
        %v2301 = vsel %vm2299, %v2289, 2102212464
        %v2302 = vsel %vm2298, %v2286, %v2301
        %v2303 = vsel %vm2297, %v2300, %v2302
        %v2304 = vsel %vm2296, %v2283, %v2286
        %v2305 = vsel %vm2299, %v2292, 920167782
        %v2306 = vsel %vm2298, %v2289, %v2305
        %v2307 = vsel %vm2297, %v2304, %v2306
        %v2308 = vsel %vm2296, %v2286, %v2289
        %v2309 = vsel %vm2299, %v2295, 1326507024
        %v2310 = vsel %vm2298, %v2292, %v2309
        %v2311 = vsel %vm2297, %v2308, %v2310
        %v2312 = vshll.u32 %v2272, 8
        %v2313 = vmul.u32.u64.compose %v2312, %v2311
        %v2314 = vextract.low.u32 %v2313
        %v2315 = vextract.high.u32 %v2313
        %v2316 = vmul.u32.u64.compose %v2312, %v2307
        %v2317 = vextract.low.u32 %v2316
        %v2318 = vextract.high.u32 %v2316
        %v2319 = vmul.u32 %v2312, %v2303
        %v2320 = vadd.s32 %v2315, %v2317
        %vm2321 = vc.u32 %v2315, %v2317
        %v2322 = vadd.s32 %v2318, 1
        %v2323 = vsel %vm2321, %v2322, %v2318
        %v2324 = vadd.s32 %v2319, %v2323
        %v2325 = vadd.s32 %v2324, 536870912
        %v2326 = vshrl.u32 %v2325, 30
        %v2327 = vshll.u32 %v2326, 30
        %v2328 = vsub.s32 %v2324, %v2327
        %vm2329 = vcmp.lt.s32.totalorder %v2328, 0
        %v2330 = vsub.s32 0, %v2328
        %v2331 = vsel %vm2329, %v2330, %v2328
        %v2332 = vclz %v2331
        %v2333 = vsub.s32 %v2332, 2
        %vm2334 = vcmp.gt.s32.totalorder 0, %v2333
        %v2335 = vsel %vm2334, 0, %v2333
        %v2336 = vsub.s32 32, %v2335
        %v2337 = vshll.u32 %v2328, %v2335
        %v2338 = vshrl.u32 %v2320, %v2336
        %v2339 = vor.u32 %v2337, %v2338
        %v2340 = vsub.s32 4294967266, %v2335
        %v2341 = vadd.s32 %v2340, 127
        %v2342 = vshll.u32 %v2341, 23
        %v2343 = vor.u32 4788187, %v2342
        %v2344 = vand.u32 2147483647, %v2343
        %v2346 = vcvt.s32.f32 %v2339
        %v2347 = vmul.f32 %v2346, %v2344
        %v2348 = vxor.u32 %v2347, 2147483648
        %v2349 = vsel %vm2266, %v2348, %v2347
        %v2350 = vsub.s32 4, %v2326
        %v2351 = vsel %vm2266, %v2350, %v2326
        %v2352 = vsel %vm2265, %v281, %v2349
        %v2353 = vsel %vm2265, 0, %v2351
        %v2354 = vcosq.f32.pop %v2352
        %v2355 = vsinq.f32.pop %v2352
        %vm2356 = vweird.f32 %v281
        %v2357 = vadd.s32 %v2353, 3
        %v2358 = vand.u32 %v2357, 3
        %vm2359 = vcmp.lt.s32.totalorder %v2358, 2
        %vm2360 = vcmp.eq.s32.totalorder %v2358, 0
        %v2361 = vxor.u32 %v2355, 2147483648
        %v2362 = vsel %vm2360, %v2354, %v2361
        %vm2363 = vcmp.eq.s32.totalorder %v2358, 2
        %v2364 = vxor.u32 %v2354, 2147483648
        %v2365 = vsel %vm2363, %v2364, %v2355
        %v2366 = vsel %vm2359, %v2362, %v2365
        %v2367 = vsel %vm2356, nan, %v2366
        %v2368 = vand.u32 2147483647, %v282
        %vm2369 = vcmp.le.f32.partialorder %v2368, 0.7853982
        %vm2370 = vcmp.lt.s32.totalorder %v282, 0
        %v2371 = vand.u32 %v282, 2139095040
        %v2372 = vshrl.u32 %v2371, 23
        %v2373 = vsub.s32 %v2372, 127
        %v2374 = vand.u32 2147483647, %v282
        %v2375 = vand.u32 %v2374, 8388607
        %v2376 = vor.u32 %v2375, 8388608
        %v2377 = vsub.s32 0, %v2376
        %v2378 = vadd.s32 %v2373, 1
        %vm2379 = vcmp.gt.s32.totalorder %v2378, 0
        %v2380 = vsel %vm2379, %v2378, 0
        %v2381 = vshrl.u32 %v2380, 5
        %v2382 = vand.u32 %v2380, 31
        %v2383 = vsub.s32 32, %v2382
        %v2384 = vshrl.u32 683565275, %v2383
        %v2385 = vshll.u32 683565275, %v2382
        %v2386 = vshrl.u32 2475754826, %v2383
        %v2387 = vor.u32 %v2385, %v2386
        %v2388 = vshll.u32 2475754826, %v2382
        %v2389 = vshrl.u32 2131351028, %v2383
        %v2390 = vor.u32 %v2388, %v2389
        %v2391 = vshll.u32 2131351028, %v2382
        %v2392 = vshrl.u32 2102212464, %v2383
        %v2393 = vor.u32 %v2391, %v2392
        %v2394 = vshll.u32 2102212464, %v2382
        %v2395 = vshrl.u32 920167782, %v2383
        %v2396 = vor.u32 %v2394, %v2395
        %v2397 = vshll.u32 920167782, %v2382
        %v2398 = vshrl.u32 1326507024, %v2383
        %v2399 = vor.u32 %v2397, %v2398
        %vm2400 = vcmp.lt.s32.totalorder %v2381, 1
        %vm2401 = vcmp.lt.s32.totalorder %v2381, 2
        %vm2402 = vcmp.lt.s32.totalorder %v2381, 3
        %vm2403 = vcmp.lt.s32.totalorder %v2381, 4
        %v2404 = vsel %vm2400, %v2384, %v2387
        %v2405 = vsel %vm2403, %v2393, 2102212464
        %v2406 = vsel %vm2402, %v2390, %v2405
        %v2407 = vsel %vm2401, %v2404, %v2406
        %v2408 = vsel %vm2400, %v2387, %v2390
        %v2409 = vsel %vm2403, %v2396, 920167782
        %v2410 = vsel %vm2402, %v2393, %v2409
        %v2411 = vsel %vm2401, %v2408, %v2410
        %v2412 = vsel %vm2400, %v2390, %v2393
        %v2413 = vsel %vm2403, %v2399, 1326507024
        %v2414 = vsel %vm2402, %v2396, %v2413
        %v2415 = vsel %vm2401, %v2412, %v2414
        %v2416 = vshll.u32 %v2376, 8
        %v2417 = vmul.u32.u64.compose %v2416, %v2415
        %v2418 = vextract.low.u32 %v2417
        %v2419 = vextract.high.u32 %v2417
        %v2420 = vmul.u32.u64.compose %v2416, %v2411
        %v2421 = vextract.low.u32 %v2420
        %v2422 = vextract.high.u32 %v2420
        %v2423 = vmul.u32 %v2416, %v2407
        %v2424 = vadd.s32 %v2419, %v2421
        %vm2425 = vc.u32 %v2419, %v2421
        %v2426 = vadd.s32 %v2422, 1
        %v2427 = vsel %vm2425, %v2426, %v2422
        %v2428 = vadd.s32 %v2423, %v2427
        %v2429 = vadd.s32 %v2428, 536870912
        %v2430 = vshrl.u32 %v2429, 30
        %v2431 = vshll.u32 %v2430, 30
        %v2432 = vsub.s32 %v2428, %v2431
        %vm2433 = vcmp.lt.s32.totalorder %v2432, 0
        %v2434 = vsub.s32 0, %v2432
        %v2435 = vsel %vm2433, %v2434, %v2432
        %v2436 = vclz %v2435
        %v2437 = vsub.s32 %v2436, 2
        %vm2438 = vcmp.gt.s32.totalorder 0, %v2437
        %v2439 = vsel %vm2438, 0, %v2437
        %v2440 = vsub.s32 32, %v2439
        %v2441 = vshll.u32 %v2432, %v2439
        %v2442 = vshrl.u32 %v2424, %v2440
        %v2443 = vor.u32 %v2441, %v2442
        %v2444 = vsub.s32 4294967266, %v2439
        %v2445 = vadd.s32 %v2444, 127
        %v2446 = vshll.u32 %v2445, 23
        %v2447 = vor.u32 4788187, %v2446
        %v2448 = vand.u32 2147483647, %v2447
        %v2450 = vcvt.s32.f32 %v2443
        %v2451 = vmul.f32 %v2450, %v2448
        %v2452 = vxor.u32 %v2451, 2147483648
        %v2453 = vsel %vm2370, %v2452, %v2451
        %v2454 = vsub.s32 4, %v2430
        %v2455 = vsel %vm2370, %v2454, %v2430
        %v2456 = vsel %vm2369, %v282, %v2453
        %v2457 = vsel %vm2369, 0, %v2455
        %v2458 = vcosq.f32.pop %v2456
        %v2459 = vsinq.f32.pop %v2456
        %vm2460 = vweird.f32 %v282
        %v2461 = vadd.s32 %v2457, 3
        %v2462 = vand.u32 %v2461, 3
        %vm2463 = vcmp.lt.s32.totalorder %v2462, 2
        %vm2464 = vcmp.eq.s32.totalorder %v2462, 0
        %v2465 = vxor.u32 %v2459, 2147483648
        %v2466 = vsel %vm2464, %v2458, %v2465
        %vm2467 = vcmp.eq.s32.totalorder %v2462, 2
        %v2468 = vxor.u32 %v2458, 2147483648
        %v2469 = vsel %vm2467, %v2468, %v2459
        %v2470 = vsel %vm2463, %v2466, %v2469
        %v2471 = vsel %vm2460, nan, %v2470
        %v2472 = vand.u32 2147483647, %v283
        %vm2473 = vcmp.le.f32.partialorder %v2472, 0.7853982
        %vm2474 = vcmp.lt.s32.totalorder %v283, 0
        %v2475 = vand.u32 %v283, 2139095040
        %v2476 = vshrl.u32 %v2475, 23
        %v2477 = vsub.s32 %v2476, 127
        %v2478 = vand.u32 2147483647, %v283
        %v2479 = vand.u32 %v2478, 8388607
        %v2480 = vor.u32 %v2479, 8388608
        %v2481 = vsub.s32 0, %v2480
        %v2482 = vadd.s32 %v2477, 1
        %vm2483 = vcmp.gt.s32.totalorder %v2482, 0
        %v2484 = vsel %vm2483, %v2482, 0
        %v2485 = vshrl.u32 %v2484, 5
        %v2486 = vand.u32 %v2484, 31
        %v2487 = vsub.s32 32, %v2486
        %v2488 = vshrl.u32 683565275, %v2487
        %v2489 = vshll.u32 683565275, %v2486
        %v2490 = vshrl.u32 2475754826, %v2487
        %v2491 = vor.u32 %v2489, %v2490
        %v2492 = vshll.u32 2475754826, %v2486
        %v2493 = vshrl.u32 2131351028, %v2487
        %v2494 = vor.u32 %v2492, %v2493
        %v2495 = vshll.u32 2131351028, %v2486
        %v2496 = vshrl.u32 2102212464, %v2487
        %v2497 = vor.u32 %v2495, %v2496
        %v2498 = vshll.u32 2102212464, %v2486
        %v2499 = vshrl.u32 920167782, %v2487
        %v2500 = vor.u32 %v2498, %v2499
        %v2501 = vshll.u32 920167782, %v2486
        %v2502 = vshrl.u32 1326507024, %v2487
        %v2503 = vor.u32 %v2501, %v2502
        %vm2504 = vcmp.lt.s32.totalorder %v2485, 1
        %vm2505 = vcmp.lt.s32.totalorder %v2485, 2
        %vm2506 = vcmp.lt.s32.totalorder %v2485, 3
        %vm2507 = vcmp.lt.s32.totalorder %v2485, 4
        %v2508 = vsel %vm2504, %v2488, %v2491
        %v2509 = vsel %vm2507, %v2497, 2102212464
        %v2510 = vsel %vm2506, %v2494, %v2509
        %v2511 = vsel %vm2505, %v2508, %v2510
        %v2512 = vsel %vm2504, %v2491, %v2494
        %v2513 = vsel %vm2507, %v2500, 920167782
        %v2514 = vsel %vm2506, %v2497, %v2513
        %v2515 = vsel %vm2505, %v2512, %v2514
        %v2516 = vsel %vm2504, %v2494, %v2497
        %v2517 = vsel %vm2507, %v2503, 1326507024
        %v2518 = vsel %vm2506, %v2500, %v2517
        %v2519 = vsel %vm2505, %v2516, %v2518
        %v2520 = vshll.u32 %v2480, 8
        %v2521 = vmul.u32.u64.compose %v2520, %v2519
        %v2522 = vextract.low.u32 %v2521
        %v2523 = vextract.high.u32 %v2521
        %v2524 = vmul.u32.u64.compose %v2520, %v2515
        %v2525 = vextract.low.u32 %v2524
        %v2526 = vextract.high.u32 %v2524
        %v2527 = vmul.u32 %v2520, %v2511
        %v2528 = vadd.s32 %v2523, %v2525
        %vm2529 = vc.u32 %v2523, %v2525
        %v2530 = vadd.s32 %v2526, 1
        %v2531 = vsel %vm2529, %v2530, %v2526
        %v2532 = vadd.s32 %v2527, %v2531
        %v2533 = vadd.s32 %v2532, 536870912
        %v2534 = vshrl.u32 %v2533, 30
        %v2535 = vshll.u32 %v2534, 30
        %v2536 = vsub.s32 %v2532, %v2535
        %vm2537 = vcmp.lt.s32.totalorder %v2536, 0
        %v2538 = vsub.s32 0, %v2536
        %v2539 = vsel %vm2537, %v2538, %v2536
        %v2540 = vclz %v2539
        %v2541 = vsub.s32 %v2540, 2
        %vm2542 = vcmp.gt.s32.totalorder 0, %v2541
        %v2543 = vsel %vm2542, 0, %v2541
        %v2544 = vsub.s32 32, %v2543
        %v2545 = vshll.u32 %v2536, %v2543
        %v2546 = vshrl.u32 %v2528, %v2544
        %v2547 = vor.u32 %v2545, %v2546
        %v2548 = vsub.s32 4294967266, %v2543
        %v2549 = vadd.s32 %v2548, 127
        %v2550 = vshll.u32 %v2549, 23
        %v2551 = vor.u32 4788187, %v2550
        %v2552 = vand.u32 2147483647, %v2551
        %v2554 = vcvt.s32.f32 %v2547
        %v2555 = vmul.f32 %v2554, %v2552
        %v2556 = vxor.u32 %v2555, 2147483648
        %v2557 = vsel %vm2474, %v2556, %v2555
        %v2558 = vsub.s32 4, %v2534
        %v2559 = vsel %vm2474, %v2558, %v2534
        %v2560 = vsel %vm2473, %v283, %v2557
        %v2561 = vsel %vm2473, 0, %v2559
        %v2562 = vcosq.f32.pop %v2560
        %v2563 = vsinq.f32.pop %v2560
        %vm2564 = vweird.f32 %v283
        %v2565 = vadd.s32 %v2561, 3
        %v2566 = vand.u32 %v2565, 3
        %vm2567 = vcmp.lt.s32.totalorder %v2566, 2
        %vm2568 = vcmp.eq.s32.totalorder %v2566, 0
        %v2569 = vxor.u32 %v2563, 2147483648
        %v2570 = vsel %vm2568, %v2562, %v2569
        %vm2571 = vcmp.eq.s32.totalorder %v2566, 2
        %v2572 = vxor.u32 %v2562, 2147483648
        %v2573 = vsel %vm2571, %v2572, %v2563
        %v2574 = vsel %vm2567, %v2570, %v2573
        %v2575 = vsel %vm2564, nan, %v2574
        %v2576 = vand.u32 2147483647, %v284
        %vm2577 = vcmp.le.f32.partialorder %v2576, 0.7853982
        %vm2578 = vcmp.lt.s32.totalorder %v284, 0
        %v2579 = vand.u32 %v284, 2139095040
        %v2580 = vshrl.u32 %v2579, 23
        %v2581 = vsub.s32 %v2580, 127
        %v2582 = vand.u32 2147483647, %v284
        %v2583 = vand.u32 %v2582, 8388607
        %v2584 = vor.u32 %v2583, 8388608
        %v2585 = vsub.s32 0, %v2584
        %v2586 = vadd.s32 %v2581, 1
        %vm2587 = vcmp.gt.s32.totalorder %v2586, 0
        %v2588 = vsel %vm2587, %v2586, 0
        %v2589 = vshrl.u32 %v2588, 5
        %v2590 = vand.u32 %v2588, 31
        %v2591 = vsub.s32 32, %v2590
        %v2592 = vshrl.u32 683565275, %v2591
        %v2593 = vshll.u32 683565275, %v2590
        %v2594 = vshrl.u32 2475754826, %v2591
        %v2595 = vor.u32 %v2593, %v2594
        %v2596 = vshll.u32 2475754826, %v2590
        %v2597 = vshrl.u32 2131351028, %v2591
        %v2598 = vor.u32 %v2596, %v2597
        %v2599 = vshll.u32 2131351028, %v2590
        %v2600 = vshrl.u32 2102212464, %v2591
        %v2601 = vor.u32 %v2599, %v2600
        %v2602 = vshll.u32 2102212464, %v2590
        %v2603 = vshrl.u32 920167782, %v2591
        %v2604 = vor.u32 %v2602, %v2603
        %v2605 = vshll.u32 920167782, %v2590
        %v2606 = vshrl.u32 1326507024, %v2591
        %v2607 = vor.u32 %v2605, %v2606
        %vm2608 = vcmp.lt.s32.totalorder %v2589, 1
        %vm2609 = vcmp.lt.s32.totalorder %v2589, 2
        %vm2610 = vcmp.lt.s32.totalorder %v2589, 3
        %vm2611 = vcmp.lt.s32.totalorder %v2589, 4
        %v2612 = vsel %vm2608, %v2592, %v2595
        %v2613 = vsel %vm2611, %v2601, 2102212464
        %v2614 = vsel %vm2610, %v2598, %v2613
        %v2615 = vsel %vm2609, %v2612, %v2614
        %v2616 = vsel %vm2608, %v2595, %v2598
        %v2617 = vsel %vm2611, %v2604, 920167782
        %v2618 = vsel %vm2610, %v2601, %v2617
        %v2619 = vsel %vm2609, %v2616, %v2618
        %v2620 = vsel %vm2608, %v2598, %v2601
        %v2621 = vsel %vm2611, %v2607, 1326507024
        %v2622 = vsel %vm2610, %v2604, %v2621
        %v2623 = vsel %vm2609, %v2620, %v2622
        %v2624 = vshll.u32 %v2584, 8
        %v2625 = vmul.u32.u64.compose %v2624, %v2623
        %v2626 = vextract.low.u32 %v2625
        %v2627 = vextract.high.u32 %v2625
        %v2628 = vmul.u32.u64.compose %v2624, %v2619
        %v2629 = vextract.low.u32 %v2628
        %v2630 = vextract.high.u32 %v2628
        %v2631 = vmul.u32 %v2624, %v2615
        %v2632 = vadd.s32 %v2627, %v2629
        %vm2633 = vc.u32 %v2627, %v2629
        %v2634 = vadd.s32 %v2630, 1
        %v2635 = vsel %vm2633, %v2634, %v2630
        %v2636 = vadd.s32 %v2631, %v2635
        %v2637 = vadd.s32 %v2636, 536870912
        %v2638 = vshrl.u32 %v2637, 30
        %v2639 = vshll.u32 %v2638, 30
        %v2640 = vsub.s32 %v2636, %v2639
        %vm2641 = vcmp.lt.s32.totalorder %v2640, 0
        %v2642 = vsub.s32 0, %v2640
        %v2643 = vsel %vm2641, %v2642, %v2640
        %v2644 = vclz %v2643
        %v2645 = vsub.s32 %v2644, 2
        %vm2646 = vcmp.gt.s32.totalorder 0, %v2645
        %v2647 = vsel %vm2646, 0, %v2645
        %v2648 = vsub.s32 32, %v2647
        %v2649 = vshll.u32 %v2640, %v2647
        %v2650 = vshrl.u32 %v2632, %v2648
        %v2651 = vor.u32 %v2649, %v2650
        %v2652 = vsub.s32 4294967266, %v2647
        %v2653 = vadd.s32 %v2652, 127
        %v2654 = vshll.u32 %v2653, 23
        %v2655 = vor.u32 4788187, %v2654
        %v2656 = vand.u32 2147483647, %v2655
        %v2658 = vcvt.s32.f32 %v2651
        %v2659 = vmul.f32 %v2658, %v2656
        %v2660 = vxor.u32 %v2659, 2147483648
        %v2661 = vsel %vm2578, %v2660, %v2659
        %v2662 = vsub.s32 4, %v2638
        %v2663 = vsel %vm2578, %v2662, %v2638
        %v2664 = vsel %vm2577, %v284, %v2661
        %v2665 = vsel %vm2577, 0, %v2663
        %v2666 = vcosq.f32.pop %v2664
        %v2667 = vsinq.f32.pop %v2664
        %vm2668 = vweird.f32 %v284
        %v2669 = vadd.s32 %v2665, 3
        %v2670 = vand.u32 %v2669, 3
        %vm2671 = vcmp.lt.s32.totalorder %v2670, 2
        %vm2672 = vcmp.eq.s32.totalorder %v2670, 0
        %v2673 = vxor.u32 %v2667, 2147483648
        %v2674 = vsel %vm2672, %v2666, %v2673
        %vm2675 = vcmp.eq.s32.totalorder %v2670, 2
        %v2676 = vxor.u32 %v2666, 2147483648
        %v2677 = vsel %vm2675, %v2676, %v2667
        %v2678 = vsel %vm2671, %v2674, %v2677
        %v2679 = vsel %vm2668, nan, %v2678
        %v2680 = vand.u32 2147483647, %v285
        %vm2681 = vcmp.le.f32.partialorder %v2680, 0.7853982
        %vm2682 = vcmp.lt.s32.totalorder %v285, 0
        %v2683 = vand.u32 %v285, 2139095040
        %v2684 = vshrl.u32 %v2683, 23
        %v2685 = vsub.s32 %v2684, 127
        %v2686 = vand.u32 2147483647, %v285
        %v2687 = vand.u32 %v2686, 8388607
        %v2688 = vor.u32 %v2687, 8388608
        %v2689 = vsub.s32 0, %v2688
        %v2690 = vadd.s32 %v2685, 1
        %vm2691 = vcmp.gt.s32.totalorder %v2690, 0
        %v2692 = vsel %vm2691, %v2690, 0
        %v2693 = vshrl.u32 %v2692, 5
        %v2694 = vand.u32 %v2692, 31
        %v2695 = vsub.s32 32, %v2694
        %v2696 = vshrl.u32 683565275, %v2695
        %v2697 = vshll.u32 683565275, %v2694
        %v2698 = vshrl.u32 2475754826, %v2695
        %v2699 = vor.u32 %v2697, %v2698
        %v2700 = vshll.u32 2475754826, %v2694
        %v2701 = vshrl.u32 2131351028, %v2695
        %v2702 = vor.u32 %v2700, %v2701
        %v2703 = vshll.u32 2131351028, %v2694
        %v2704 = vshrl.u32 2102212464, %v2695
        %v2705 = vor.u32 %v2703, %v2704
        %v2706 = vshll.u32 2102212464, %v2694
        %v2707 = vshrl.u32 920167782, %v2695
        %v2708 = vor.u32 %v2706, %v2707
        %v2709 = vshll.u32 920167782, %v2694
        %v2710 = vshrl.u32 1326507024, %v2695
        %v2711 = vor.u32 %v2709, %v2710
        %vm2712 = vcmp.lt.s32.totalorder %v2693, 1
        %vm2713 = vcmp.lt.s32.totalorder %v2693, 2
        %vm2714 = vcmp.lt.s32.totalorder %v2693, 3
        %vm2715 = vcmp.lt.s32.totalorder %v2693, 4
        %v2716 = vsel %vm2712, %v2696, %v2699
        %v2717 = vsel %vm2715, %v2705, 2102212464
        %v2718 = vsel %vm2714, %v2702, %v2717
        %v2719 = vsel %vm2713, %v2716, %v2718
        %v2720 = vsel %vm2712, %v2699, %v2702
        %v2721 = vsel %vm2715, %v2708, 920167782
        %v2722 = vsel %vm2714, %v2705, %v2721
        %v2723 = vsel %vm2713, %v2720, %v2722
        %v2724 = vsel %vm2712, %v2702, %v2705
        %v2725 = vsel %vm2715, %v2711, 1326507024
        %v2726 = vsel %vm2714, %v2708, %v2725
        %v2727 = vsel %vm2713, %v2724, %v2726
        %v2728 = vshll.u32 %v2688, 8
        %v2729 = vmul.u32.u64.compose %v2728, %v2727
        %v2730 = vextract.low.u32 %v2729
        %v2731 = vextract.high.u32 %v2729
        %v2732 = vmul.u32.u64.compose %v2728, %v2723
        %v2733 = vextract.low.u32 %v2732
        %v2734 = vextract.high.u32 %v2732
        %v2735 = vmul.u32 %v2728, %v2719
        %v2736 = vadd.s32 %v2731, %v2733
        %vm2737 = vc.u32 %v2731, %v2733
        %v2738 = vadd.s32 %v2734, 1
        %v2739 = vsel %vm2737, %v2738, %v2734
        %v2740 = vadd.s32 %v2735, %v2739
        %v2741 = vadd.s32 %v2740, 536870912
        %v2742 = vshrl.u32 %v2741, 30
        %v2743 = vshll.u32 %v2742, 30
        %v2744 = vsub.s32 %v2740, %v2743
        %vm2745 = vcmp.lt.s32.totalorder %v2744, 0
        %v2746 = vsub.s32 0, %v2744
        %v2747 = vsel %vm2745, %v2746, %v2744
        %v2748 = vclz %v2747
        %v2749 = vsub.s32 %v2748, 2
        %vm2750 = vcmp.gt.s32.totalorder 0, %v2749
        %v2751 = vsel %vm2750, 0, %v2749
        %v2752 = vsub.s32 32, %v2751
        %v2753 = vshll.u32 %v2744, %v2751
        %v2754 = vshrl.u32 %v2736, %v2752
        %v2755 = vor.u32 %v2753, %v2754
        %v2756 = vsub.s32 4294967266, %v2751
        %v2757 = vadd.s32 %v2756, 127
        %v2758 = vshll.u32 %v2757, 23
        %v2759 = vor.u32 4788187, %v2758
        %v2760 = vand.u32 2147483647, %v2759
        %v2762 = vcvt.s32.f32 %v2755
        %v2763 = vmul.f32 %v2762, %v2760
        %v2764 = vxor.u32 %v2763, 2147483648
        %v2765 = vsel %vm2682, %v2764, %v2763
        %v2766 = vsub.s32 4, %v2742
        %v2767 = vsel %vm2682, %v2766, %v2742
        %v2768 = vsel %vm2681, %v285, %v2765
        %v2769 = vsel %vm2681, 0, %v2767
        %v2770 = vcosq.f32.pop %v2768
        %v2771 = vsinq.f32.pop %v2768
        %vm2772 = vweird.f32 %v285
        %v2773 = vadd.s32 %v2769, 3
        %v2774 = vand.u32 %v2773, 3
        %vm2775 = vcmp.lt.s32.totalorder %v2774, 2
        %vm2776 = vcmp.eq.s32.totalorder %v2774, 0
        %v2777 = vxor.u32 %v2771, 2147483648
        %v2778 = vsel %vm2776, %v2770, %v2777
        %vm2779 = vcmp.eq.s32.totalorder %v2774, 2
        %v2780 = vxor.u32 %v2770, 2147483648
        %v2781 = vsel %vm2779, %v2780, %v2771
        %v2782 = vsel %vm2775, %v2778, %v2781
        %v2783 = vsel %vm2772, nan, %v2782
        %v2784 = vand.u32 2147483647, %v286
        %vm2785 = vcmp.le.f32.partialorder %v2784, 0.7853982
        %vm2786 = vcmp.lt.s32.totalorder %v286, 0
        %v2787 = vand.u32 %v286, 2139095040
        %v2788 = vshrl.u32 %v2787, 23
        %v2789 = vsub.s32 %v2788, 127
        %v2790 = vand.u32 2147483647, %v286
        %v2791 = vand.u32 %v2790, 8388607
        %v2792 = vor.u32 %v2791, 8388608
        %v2793 = vsub.s32 0, %v2792
        %v2794 = vadd.s32 %v2789, 1
        %vm2795 = vcmp.gt.s32.totalorder %v2794, 0
        %v2796 = vsel %vm2795, %v2794, 0
        %v2797 = vshrl.u32 %v2796, 5
        %v2798 = vand.u32 %v2796, 31
        %v2799 = vsub.s32 32, %v2798
        %v2800 = vshrl.u32 683565275, %v2799
        %v2801 = vshll.u32 683565275, %v2798
        %v2802 = vshrl.u32 2475754826, %v2799
        %v2803 = vor.u32 %v2801, %v2802
        %v2804 = vshll.u32 2475754826, %v2798
        %v2805 = vshrl.u32 2131351028, %v2799
        %v2806 = vor.u32 %v2804, %v2805
        %v2807 = vshll.u32 2131351028, %v2798
        %v2808 = vshrl.u32 2102212464, %v2799
        %v2809 = vor.u32 %v2807, %v2808
        %v2810 = vshll.u32 2102212464, %v2798
        %v2811 = vshrl.u32 920167782, %v2799
        %v2812 = vor.u32 %v2810, %v2811
        %v2813 = vshll.u32 920167782, %v2798
        %v2814 = vshrl.u32 1326507024, %v2799
        %v2815 = vor.u32 %v2813, %v2814
        %vm2816 = vcmp.lt.s32.totalorder %v2797, 1
        %vm2817 = vcmp.lt.s32.totalorder %v2797, 2
        %vm2818 = vcmp.lt.s32.totalorder %v2797, 3
        %vm2819 = vcmp.lt.s32.totalorder %v2797, 4
        %v2820 = vsel %vm2816, %v2800, %v2803
        %v2821 = vsel %vm2819, %v2809, 2102212464
        %v2822 = vsel %vm2818, %v2806, %v2821
        %v2823 = vsel %vm2817, %v2820, %v2822
        %v2824 = vsel %vm2816, %v2803, %v2806
        %v2825 = vsel %vm2819, %v2812, 920167782
        %v2826 = vsel %vm2818, %v2809, %v2825
        %v2827 = vsel %vm2817, %v2824, %v2826
        %v2828 = vsel %vm2816, %v2806, %v2809
        %v2829 = vsel %vm2819, %v2815, 1326507024
        %v2830 = vsel %vm2818, %v2812, %v2829
        %v2831 = vsel %vm2817, %v2828, %v2830
        %v2832 = vshll.u32 %v2792, 8
        %v2833 = vmul.u32.u64.compose %v2832, %v2831
        %v2834 = vextract.low.u32 %v2833
        %v2835 = vextract.high.u32 %v2833
        %v2836 = vmul.u32.u64.compose %v2832, %v2827
        %v2837 = vextract.low.u32 %v2836
        %v2838 = vextract.high.u32 %v2836
        %v2839 = vmul.u32 %v2832, %v2823
        %v2840 = vadd.s32 %v2835, %v2837
        %vm2841 = vc.u32 %v2835, %v2837
        %v2842 = vadd.s32 %v2838, 1
        %v2843 = vsel %vm2841, %v2842, %v2838
        %v2844 = vadd.s32 %v2839, %v2843
        %v2845 = vadd.s32 %v2844, 536870912
        %v2846 = vshrl.u32 %v2845, 30
        %v2847 = vshll.u32 %v2846, 30
        %v2848 = vsub.s32 %v2844, %v2847
        %vm2849 = vcmp.lt.s32.totalorder %v2848, 0
        %v2850 = vsub.s32 0, %v2848
        %v2851 = vsel %vm2849, %v2850, %v2848
        %v2852 = vclz %v2851
        %v2853 = vsub.s32 %v2852, 2
        %vm2854 = vcmp.gt.s32.totalorder 0, %v2853
        %v2855 = vsel %vm2854, 0, %v2853
        %v2856 = vsub.s32 32, %v2855
        %v2857 = vshll.u32 %v2848, %v2855
        %v2858 = vshrl.u32 %v2840, %v2856
        %v2859 = vor.u32 %v2857, %v2858
        %v2860 = vsub.s32 4294967266, %v2855
        %v2861 = vadd.s32 %v2860, 127
        %v2862 = vshll.u32 %v2861, 23
        %v2863 = vor.u32 4788187, %v2862
        %v2864 = vand.u32 2147483647, %v2863
        %v2866 = vcvt.s32.f32 %v2859
        %v2867 = vmul.f32 %v2866, %v2864
        %v2868 = vxor.u32 %v2867, 2147483648
        %v2869 = vsel %vm2786, %v2868, %v2867
        %v2870 = vsub.s32 4, %v2846
        %v2871 = vsel %vm2786, %v2870, %v2846
        %v2872 = vsel %vm2785, %v286, %v2869
        %v2873 = vsel %vm2785, 0, %v2871
        %v2874 = vcosq.f32.pop %v2872
        %v2875 = vsinq.f32.pop %v2872
        %vm2876 = vweird.f32 %v286
        %v2877 = vadd.s32 %v2873, 3
        %v2878 = vand.u32 %v2877, 3
        %vm2879 = vcmp.lt.s32.totalorder %v2878, 2
        %vm2880 = vcmp.eq.s32.totalorder %v2878, 0
        %v2881 = vxor.u32 %v2875, 2147483648
        %v2882 = vsel %vm2880, %v2874, %v2881
        %vm2883 = vcmp.eq.s32.totalorder %v2878, 2
        %v2884 = vxor.u32 %v2874, 2147483648
        %v2885 = vsel %vm2883, %v2884, %v2875
        %v2886 = vsel %vm2879, %v2882, %v2885
        %v2887 = vsel %vm2876, nan, %v2886
        %v2888 = vand.u32 2147483647, %v287
        %vm2889 = vcmp.le.f32.partialorder %v2888, 0.7853982
        %vm2890 = vcmp.lt.s32.totalorder %v287, 0
        %v2891 = vand.u32 %v287, 2139095040
        %v2892 = vshrl.u32 %v2891, 23
        %v2893 = vsub.s32 %v2892, 127
        %v2894 = vand.u32 2147483647, %v287
        %v2895 = vand.u32 %v2894, 8388607
        %v2896 = vor.u32 %v2895, 8388608
        %v2897 = vsub.s32 0, %v2896
        %v2898 = vadd.s32 %v2893, 1
        %vm2899 = vcmp.gt.s32.totalorder %v2898, 0
        %v2900 = vsel %vm2899, %v2898, 0
        %v2901 = vshrl.u32 %v2900, 5
        %v2902 = vand.u32 %v2900, 31
        %v2903 = vsub.s32 32, %v2902
        %v2904 = vshrl.u32 683565275, %v2903
        %v2905 = vshll.u32 683565275, %v2902
        %v2906 = vshrl.u32 2475754826, %v2903
        %v2907 = vor.u32 %v2905, %v2906
        %v2908 = vshll.u32 2475754826, %v2902
        %v2909 = vshrl.u32 2131351028, %v2903
        %v2910 = vor.u32 %v2908, %v2909
        %v2911 = vshll.u32 2131351028, %v2902
        %v2912 = vshrl.u32 2102212464, %v2903
        %v2913 = vor.u32 %v2911, %v2912
        %v2914 = vshll.u32 2102212464, %v2902
        %v2915 = vshrl.u32 920167782, %v2903
        %v2916 = vor.u32 %v2914, %v2915
        %v2917 = vshll.u32 920167782, %v2902
        %v2918 = vshrl.u32 1326507024, %v2903
        %v2919 = vor.u32 %v2917, %v2918
        %vm2920 = vcmp.lt.s32.totalorder %v2901, 1
        %vm2921 = vcmp.lt.s32.totalorder %v2901, 2
        %vm2922 = vcmp.lt.s32.totalorder %v2901, 3
        %vm2923 = vcmp.lt.s32.totalorder %v2901, 4
        %v2924 = vsel %vm2920, %v2904, %v2907
        %v2925 = vsel %vm2923, %v2913, 2102212464
        %v2926 = vsel %vm2922, %v2910, %v2925
        %v2927 = vsel %vm2921, %v2924, %v2926
        %v2928 = vsel %vm2920, %v2907, %v2910
        %v2929 = vsel %vm2923, %v2916, 920167782
        %v2930 = vsel %vm2922, %v2913, %v2929
        %v2931 = vsel %vm2921, %v2928, %v2930
        %v2932 = vsel %vm2920, %v2910, %v2913
        %v2933 = vsel %vm2923, %v2919, 1326507024
        %v2934 = vsel %vm2922, %v2916, %v2933
        %v2935 = vsel %vm2921, %v2932, %v2934
        %v2936 = vshll.u32 %v2896, 8
        %v2937 = vmul.u32.u64.compose %v2936, %v2935
        %v2938 = vextract.low.u32 %v2937
        %v2939 = vextract.high.u32 %v2937
        %v2940 = vmul.u32.u64.compose %v2936, %v2931
        %v2941 = vextract.low.u32 %v2940
        %v2942 = vextract.high.u32 %v2940
        %v2943 = vmul.u32 %v2936, %v2927
        %v2944 = vadd.s32 %v2939, %v2941
        %vm2945 = vc.u32 %v2939, %v2941
        %v2946 = vadd.s32 %v2942, 1
        %v2947 = vsel %vm2945, %v2946, %v2942
        %v2948 = vadd.s32 %v2943, %v2947
        %v2949 = vadd.s32 %v2948, 536870912
        %v2950 = vshrl.u32 %v2949, 30
        %v2951 = vshll.u32 %v2950, 30
        %v2952 = vsub.s32 %v2948, %v2951
        %vm2953 = vcmp.lt.s32.totalorder %v2952, 0
        %v2954 = vsub.s32 0, %v2952
        %v2955 = vsel %vm2953, %v2954, %v2952
        %v2956 = vclz %v2955
        %v2957 = vsub.s32 %v2956, 2
        %vm2958 = vcmp.gt.s32.totalorder 0, %v2957
        %v2959 = vsel %vm2958, 0, %v2957
        %v2960 = vsub.s32 32, %v2959
        %v2961 = vshll.u32 %v2952, %v2959
        %v2962 = vshrl.u32 %v2944, %v2960
        %v2963 = vor.u32 %v2961, %v2962
        %v2964 = vsub.s32 4294967266, %v2959
        %v2965 = vadd.s32 %v2964, 127
        %v2966 = vshll.u32 %v2965, 23
        %v2967 = vor.u32 4788187, %v2966
        %v2968 = vand.u32 2147483647, %v2967
        %v2970 = vcvt.s32.f32 %v2963
        %v2971 = vmul.f32 %v2970, %v2968
        %v2972 = vxor.u32 %v2971, 2147483648
        %v2973 = vsel %vm2890, %v2972, %v2971
        %v2974 = vsub.s32 4, %v2950
        %v2975 = vsel %vm2890, %v2974, %v2950
        %v2976 = vsel %vm2889, %v287, %v2973
        %v2977 = vsel %vm2889, 0, %v2975
        %v2978 = vcosq.f32.pop %v2976
        %v2979 = vsinq.f32.pop %v2976
        %vm2980 = vweird.f32 %v287
        %v2981 = vadd.s32 %v2977, 3
        %v2982 = vand.u32 %v2981, 3
        %vm2983 = vcmp.lt.s32.totalorder %v2982, 2
        %vm2984 = vcmp.eq.s32.totalorder %v2982, 0
        %v2985 = vxor.u32 %v2979, 2147483648
        %v2986 = vsel %vm2984, %v2978, %v2985
        %vm2987 = vcmp.eq.s32.totalorder %v2982, 2
        %v2988 = vxor.u32 %v2978, 2147483648
        %v2989 = vsel %vm2987, %v2988, %v2979
        %v2990 = vsel %vm2983, %v2986, %v2989
        %v2991 = vsel %vm2980, nan, %v2990
        %v2993 = vlaneseq
        %v2994 = vshrl.u32 %v2993, 7
        %v2995 = vsub.s32 0, %v2994
        %v2996 = vrot.slane %v172, %v2995
        %v2997 = vlaneseq
        %v2998 = vshrl.u32 %v2997, 7
        %v2999 = vsub.s32 1, %v2998
        %v3000 = vrot.slane %v172, %v2999
        %v3003 = vmul.f32 %v2996, %v391
        %v3004 = vmul.f32 %v3000, %v495
        %v3005 = vmul.f32 %v2996, %v599
        %v3006 = vmul.f32 %v3000, %v703
        %v3007 = vmul.f32 %v2996, %v807
        %v3008 = vmul.f32 %v3000, %v911
        %v3009 = vmul.f32 %v2996, %v1015
        %v3010 = vmul.f32 %v3000, %v1119
        %v3011 = vmul.f32 %v2996, %v1223
        %v3012 = vmul.f32 %v3000, %v1327
        %v3013 = vmul.f32 %v2996, %v1431
        %v3014 = vmul.f32 %v3000, %v1535
        %v3015 = vmul.f32 %v2996, %v1639
        %v3016 = vmul.f32 %v3000, %v1743
        %v3017 = vmul.f32 %v2996, %v1847
        %v3018 = vmul.f32 %v3000, %v1951
        %v3019 = vmul.f32 %v2996, %v2055
        %v3020 = vmul.f32 %v3000, %v2159
        %v3021 = vmul.f32 %v2996, %v2263
        %v3022 = vmul.f32 %v3000, %v2367
        %v3023 = vmul.f32 %v2996, %v2471
        %v3024 = vmul.f32 %v3000, %v2575
        %v3025 = vmul.f32 %v2996, %v2679
        %v3026 = vmul.f32 %v3000, %v2783
        %v3027 = vmul.f32 %v2996, %v2887
        %v3028 = vmul.f32 %v3000, %v2991
        %3029 = vst [vmem:[%s149] sm:$0xff] %v3003
        %3030 = vst [vmem:[%s149 + $0x8] sm:$0xff] %v3004
        %3031 = vst [vmem:[%s149 + $0x20] sm:$0xff] %v3005
        %3032 = vst [vmem:[%s149 + $0x28] sm:$0xff] %v3006
        %3033 = vst [vmem:[%s149 + $0x40] sm:$0xff] %v3007
        %3034 = vst [vmem:[%s149 + $0x48] sm:$0xff] %v3008
        %3035 = vst [vmem:[%s149 + $0x60] sm:$0xff] %v3009
        %3036 = vst [vmem:[%s149 + $0x68] sm:$0xff] %v3010
        %3037 = vst [vmem:[%s149 + $0x80] sm:$0xff] %v3011
        %3038 = vst [vmem:[%s149 + $0x88] sm:$0xff] %v3012
        %3039 = vst [vmem:[%s149 + $0xa0] sm:$0xff] %v3013
        %3040 = vst [vmem:[%s149 + $0xa8] sm:$0xff] %v3014
        %3041 = vst [vmem:[%s149 + $0xc0] sm:$0xff] %v3015
        %3042 = vst [vmem:[%s149 + $0xc8] sm:$0xff] %v3016
        %3043 = vst [vmem:[%s149 + $0xe0] sm:$0xff] %v3017
        %3044 = vst [vmem:[%s149 + $0xe8] sm:$0xff] %v3018
        %3045 = vst [vmem:[%s149 + $0x100] sm:$0xff] %v3019
        %3046 = vst [vmem:[%s149 + $0x108] sm:$0xff] %v3020
        %3047 = vst [vmem:[%s149 + $0x120] sm:$0xff] %v3021
        %3048 = vst [vmem:[%s149 + $0x128] sm:$0xff] %v3022
        %3049 = vst [vmem:[%s149 + $0x140] sm:$0xff] %v3023
        %3050 = vst [vmem:[%s149 + $0x148] sm:$0xff] %v3024
        %3051 = vst [vmem:[%s149 + $0x160] sm:$0xff] %v3025
        %3052 = vst [vmem:[%s149 + $0x168] sm:$0xff] %v3026
        %3053 = vst [vmem:[%s149 + $0x180] sm:$0xff] %v3027
        %3054 = vst [vmem:[%s149 + $0x188] sm:$0xff] %v3028
        %v3055 = vand.u32 2147483647, %v262
        %vm3056 = vcmp.le.f32.partialorder %v3055, 0.7853982
        %vm3057 = vcmp.lt.s32.totalorder %v262, 0
        %v3058 = vand.u32 %v262, 2139095040
        %v3059 = vshrl.u32 %v3058, 23
        %v3060 = vsub.s32 %v3059, 127
        %v3061 = vand.u32 2147483647, %v262
        %v3062 = vand.u32 %v3061, 8388607
        %v3063 = vor.u32 %v3062, 8388608
        %v3064 = vsub.s32 0, %v3063
        %v3065 = vadd.s32 %v3060, 1
        %vm3066 = vcmp.gt.s32.totalorder %v3065, 0
        %v3067 = vsel %vm3066, %v3065, 0
        %v3068 = vshrl.u32 %v3067, 5
        %v3069 = vand.u32 %v3067, 31
        %v3070 = vsub.s32 32, %v3069
        %v3071 = vshrl.u32 683565275, %v3070
        %v3072 = vshll.u32 683565275, %v3069
        %v3073 = vshrl.u32 2475754826, %v3070
        %v3074 = vor.u32 %v3072, %v3073
        %v3075 = vshll.u32 2475754826, %v3069
        %v3076 = vshrl.u32 2131351028, %v3070
        %v3077 = vor.u32 %v3075, %v3076
        %v3078 = vshll.u32 2131351028, %v3069
        %v3079 = vshrl.u32 2102212464, %v3070
        %v3080 = vor.u32 %v3078, %v3079
        %v3081 = vshll.u32 2102212464, %v3069
        %v3082 = vshrl.u32 920167782, %v3070
        %v3083 = vor.u32 %v3081, %v3082
        %v3084 = vshll.u32 920167782, %v3069
        %v3085 = vshrl.u32 1326507024, %v3070
        %v3086 = vor.u32 %v3084, %v3085
        %vm3087 = vcmp.lt.s32.totalorder %v3068, 1
        %vm3088 = vcmp.lt.s32.totalorder %v3068, 2
        %vm3089 = vcmp.lt.s32.totalorder %v3068, 3
        %vm3090 = vcmp.lt.s32.totalorder %v3068, 4
        %v3091 = vsel %vm3087, %v3071, %v3074
        %v3092 = vsel %vm3090, %v3080, 2102212464
        %v3093 = vsel %vm3089, %v3077, %v3092
        %v3094 = vsel %vm3088, %v3091, %v3093
        %v3095 = vsel %vm3087, %v3074, %v3077
        %v3096 = vsel %vm3090, %v3083, 920167782
        %v3097 = vsel %vm3089, %v3080, %v3096
        %v3098 = vsel %vm3088, %v3095, %v3097
        %v3099 = vsel %vm3087, %v3077, %v3080
        %v3100 = vsel %vm3090, %v3086, 1326507024
        %v3101 = vsel %vm3089, %v3083, %v3100
        %v3102 = vsel %vm3088, %v3099, %v3101
        %v3103 = vshll.u32 %v3063, 8
        %v3104 = vmul.u32.u64.compose %v3103, %v3102
        %v3105 = vextract.low.u32 %v3104
        %v3106 = vextract.high.u32 %v3104
        %v3107 = vmul.u32.u64.compose %v3103, %v3098
        %v3108 = vextract.low.u32 %v3107
        %v3109 = vextract.high.u32 %v3107
        %v3110 = vmul.u32 %v3103, %v3094
        %v3111 = vadd.s32 %v3106, %v3108
        %vm3112 = vc.u32 %v3106, %v3108
        %v3113 = vadd.s32 %v3109, 1
        %v3114 = vsel %vm3112, %v3113, %v3109
        %v3115 = vadd.s32 %v3110, %v3114
        %v3116 = vadd.s32 %v3115, 536870912
        %v3117 = vshrl.u32 %v3116, 30
        %v3118 = vshll.u32 %v3117, 30
        %v3119 = vsub.s32 %v3115, %v3118
        %vm3120 = vcmp.lt.s32.totalorder %v3119, 0
        %v3121 = vsub.s32 0, %v3119
        %v3122 = vsel %vm3120, %v3121, %v3119
        %v3123 = vclz %v3122
        %v3124 = vsub.s32 %v3123, 2
        %vm3125 = vcmp.gt.s32.totalorder 0, %v3124
        %v3126 = vsel %vm3125, 0, %v3124
        %v3127 = vsub.s32 32, %v3126
        %v3128 = vshll.u32 %v3119, %v3126
        %v3129 = vshrl.u32 %v3111, %v3127
        %v3130 = vor.u32 %v3128, %v3129
        %v3131 = vsub.s32 4294967266, %v3126
        %v3132 = vadd.s32 %v3131, 127
        %v3133 = vshll.u32 %v3132, 23
        %v3134 = vor.u32 4788187, %v3133
        %v3135 = vand.u32 2147483647, %v3134
        %v3137 = vcvt.s32.f32 %v3130
        %v3138 = vmul.f32 %v3137, %v3135
        %v3139 = vxor.u32 %v3138, 2147483648
        %v3140 = vsel %vm3057, %v3139, %v3138
        %v3141 = vsub.s32 4, %v3117
        %v3142 = vsel %vm3057, %v3141, %v3117
        %v3143 = vsel %vm3056, %v262, %v3140
        %v3144 = vsel %vm3056, 0, %v3142
        %v3145 = vcosq.f32.pop %v3143
        %v3146 = vsinq.f32.pop %v3143
        %vm3147 = vweird.f32 %v262
        %v3148 = vand.u32 %v3144, 3
        %vm3149 = vcmp.lt.s32.totalorder %v3148, 2
        %vm3150 = vcmp.eq.s32.totalorder %v3148, 0
        %v3151 = vxor.u32 %v3146, 2147483648
        %v3152 = vsel %vm3150, %v3145, %v3151
        %vm3153 = vcmp.eq.s32.totalorder %v3148, 2
        %v3154 = vxor.u32 %v3145, 2147483648
        %v3155 = vsel %vm3153, %v3154, %v3146
        %v3156 = vsel %vm3149, %v3152, %v3155
        %v3157 = vsel %vm3147, nan, %v3156
        %v3158 = vand.u32 2147483647, %v263
        %vm3159 = vcmp.le.f32.partialorder %v3158, 0.7853982
        %vm3160 = vcmp.lt.s32.totalorder %v263, 0
        %v3161 = vand.u32 %v263, 2139095040
        %v3162 = vshrl.u32 %v3161, 23
        %v3163 = vsub.s32 %v3162, 127
        %v3164 = vand.u32 2147483647, %v263
        %v3165 = vand.u32 %v3164, 8388607
        %v3166 = vor.u32 %v3165, 8388608
        %v3167 = vsub.s32 0, %v3166
        %v3168 = vadd.s32 %v3163, 1
        %vm3169 = vcmp.gt.s32.totalorder %v3168, 0
        %v3170 = vsel %vm3169, %v3168, 0
        %v3171 = vshrl.u32 %v3170, 5
        %v3172 = vand.u32 %v3170, 31
        %v3173 = vsub.s32 32, %v3172
        %v3174 = vshrl.u32 683565275, %v3173
        %v3175 = vshll.u32 683565275, %v3172
        %v3176 = vshrl.u32 2475754826, %v3173
        %v3177 = vor.u32 %v3175, %v3176
        %v3178 = vshll.u32 2475754826, %v3172
        %v3179 = vshrl.u32 2131351028, %v3173
        %v3180 = vor.u32 %v3178, %v3179
        %v3181 = vshll.u32 2131351028, %v3172
        %v3182 = vshrl.u32 2102212464, %v3173
        %v3183 = vor.u32 %v3181, %v3182
        %v3184 = vshll.u32 2102212464, %v3172
        %v3185 = vshrl.u32 920167782, %v3173
        %v3186 = vor.u32 %v3184, %v3185
        %v3187 = vshll.u32 920167782, %v3172
        %v3188 = vshrl.u32 1326507024, %v3173
        %v3189 = vor.u32 %v3187, %v3188
        %vm3190 = vcmp.lt.s32.totalorder %v3171, 1
        %vm3191 = vcmp.lt.s32.totalorder %v3171, 2
        %vm3192 = vcmp.lt.s32.totalorder %v3171, 3
        %vm3193 = vcmp.lt.s32.totalorder %v3171, 4
        %v3194 = vsel %vm3190, %v3174, %v3177
        %v3195 = vsel %vm3193, %v3183, 2102212464
        %v3196 = vsel %vm3192, %v3180, %v3195
        %v3197 = vsel %vm3191, %v3194, %v3196
        %v3198 = vsel %vm3190, %v3177, %v3180
        %v3199 = vsel %vm3193, %v3186, 920167782
        %v3200 = vsel %vm3192, %v3183, %v3199
        %v3201 = vsel %vm3191, %v3198, %v3200
        %v3202 = vsel %vm3190, %v3180, %v3183
        %v3203 = vsel %vm3193, %v3189, 1326507024
        %v3204 = vsel %vm3192, %v3186, %v3203
        %v3205 = vsel %vm3191, %v3202, %v3204
        %v3206 = vshll.u32 %v3166, 8
        %v3207 = vmul.u32.u64.compose %v3206, %v3205
        %v3208 = vextract.low.u32 %v3207
        %v3209 = vextract.high.u32 %v3207
        %v3210 = vmul.u32.u64.compose %v3206, %v3201
        %v3211 = vextract.low.u32 %v3210
        %v3212 = vextract.high.u32 %v3210
        %v3213 = vmul.u32 %v3206, %v3197
        %v3214 = vadd.s32 %v3209, %v3211
        %vm3215 = vc.u32 %v3209, %v3211
        %v3216 = vadd.s32 %v3212, 1
        %v3217 = vsel %vm3215, %v3216, %v3212
        %v3218 = vadd.s32 %v3213, %v3217
        %v3219 = vadd.s32 %v3218, 536870912
        %v3220 = vshrl.u32 %v3219, 30
        %v3221 = vshll.u32 %v3220, 30
        %v3222 = vsub.s32 %v3218, %v3221
        %vm3223 = vcmp.lt.s32.totalorder %v3222, 0
        %v3224 = vsub.s32 0, %v3222
        %v3225 = vsel %vm3223, %v3224, %v3222
        %v3226 = vclz %v3225
        %v3227 = vsub.s32 %v3226, 2
        %vm3228 = vcmp.gt.s32.totalorder 0, %v3227
        %v3229 = vsel %vm3228, 0, %v3227
        %v3230 = vsub.s32 32, %v3229
        %v3231 = vshll.u32 %v3222, %v3229
        %v3232 = vshrl.u32 %v3214, %v3230
        %v3233 = vor.u32 %v3231, %v3232
        %v3234 = vsub.s32 4294967266, %v3229
        %v3235 = vadd.s32 %v3234, 127
        %v3236 = vshll.u32 %v3235, 23
        %v3237 = vor.u32 4788187, %v3236
        %v3238 = vand.u32 2147483647, %v3237
        %v3240 = vcvt.s32.f32 %v3233
        %v3241 = vmul.f32 %v3240, %v3238
        %v3242 = vxor.u32 %v3241, 2147483648
        %v3243 = vsel %vm3160, %v3242, %v3241
        %v3244 = vsub.s32 4, %v3220
        %v3245 = vsel %vm3160, %v3244, %v3220
        %v3246 = vsel %vm3159, %v263, %v3243
        %v3247 = vsel %vm3159, 0, %v3245
        %v3248 = vcosq.f32.pop %v3246
        %v3249 = vsinq.f32.pop %v3246
        %vm3250 = vweird.f32 %v263
        %v3251 = vand.u32 %v3247, 3
        %vm3252 = vcmp.lt.s32.totalorder %v3251, 2
        %vm3253 = vcmp.eq.s32.totalorder %v3251, 0
        %v3254 = vxor.u32 %v3249, 2147483648
        %v3255 = vsel %vm3253, %v3248, %v3254
        %vm3256 = vcmp.eq.s32.totalorder %v3251, 2
        %v3257 = vxor.u32 %v3248, 2147483648
        %v3258 = vsel %vm3256, %v3257, %v3249
        %v3259 = vsel %vm3252, %v3255, %v3258
        %v3260 = vsel %vm3250, nan, %v3259
        %v3261 = vand.u32 2147483647, %v264
        %vm3262 = vcmp.le.f32.partialorder %v3261, 0.7853982
        %vm3263 = vcmp.lt.s32.totalorder %v264, 0
        %v3264 = vand.u32 %v264, 2139095040
        %v3265 = vshrl.u32 %v3264, 23
        %v3266 = vsub.s32 %v3265, 127
        %v3267 = vand.u32 2147483647, %v264
        %v3268 = vand.u32 %v3267, 8388607
        %v3269 = vor.u32 %v3268, 8388608
        %v3270 = vsub.s32 0, %v3269
        %v3271 = vadd.s32 %v3266, 1
        %vm3272 = vcmp.gt.s32.totalorder %v3271, 0
        %v3273 = vsel %vm3272, %v3271, 0
        %v3274 = vshrl.u32 %v3273, 5
        %v3275 = vand.u32 %v3273, 31
        %v3276 = vsub.s32 32, %v3275
        %v3277 = vshrl.u32 683565275, %v3276
        %v3278 = vshll.u32 683565275, %v3275
        %v3279 = vshrl.u32 2475754826, %v3276
        %v3280 = vor.u32 %v3278, %v3279
        %v3281 = vshll.u32 2475754826, %v3275
        %v3282 = vshrl.u32 2131351028, %v3276
        %v3283 = vor.u32 %v3281, %v3282
        %v3284 = vshll.u32 2131351028, %v3275
        %v3285 = vshrl.u32 2102212464, %v3276
        %v3286 = vor.u32 %v3284, %v3285
        %v3287 = vshll.u32 2102212464, %v3275
        %v3288 = vshrl.u32 920167782, %v3276
        %v3289 = vor.u32 %v3287, %v3288
        %v3290 = vshll.u32 920167782, %v3275
        %v3291 = vshrl.u32 1326507024, %v3276
        %v3292 = vor.u32 %v3290, %v3291
        %vm3293 = vcmp.lt.s32.totalorder %v3274, 1
        %vm3294 = vcmp.lt.s32.totalorder %v3274, 2
        %vm3295 = vcmp.lt.s32.totalorder %v3274, 3
        %vm3296 = vcmp.lt.s32.totalorder %v3274, 4
        %v3297 = vsel %vm3293, %v3277, %v3280
        %v3298 = vsel %vm3296, %v3286, 2102212464
        %v3299 = vsel %vm3295, %v3283, %v3298
        %v3300 = vsel %vm3294, %v3297, %v3299
        %v3301 = vsel %vm3293, %v3280, %v3283
        %v3302 = vsel %vm3296, %v3289, 920167782
        %v3303 = vsel %vm3295, %v3286, %v3302
        %v3304 = vsel %vm3294, %v3301, %v3303
        %v3305 = vsel %vm3293, %v3283, %v3286
        %v3306 = vsel %vm3296, %v3292, 1326507024
        %v3307 = vsel %vm3295, %v3289, %v3306
        %v3308 = vsel %vm3294, %v3305, %v3307
        %v3309 = vshll.u32 %v3269, 8
        %v3310 = vmul.u32.u64.compose %v3309, %v3308
        %v3311 = vextract.low.u32 %v3310
        %v3312 = vextract.high.u32 %v3310
        %v3313 = vmul.u32.u64.compose %v3309, %v3304
        %v3314 = vextract.low.u32 %v3313
        %v3315 = vextract.high.u32 %v3313
        %v3316 = vmul.u32 %v3309, %v3300
        %v3317 = vadd.s32 %v3312, %v3314
        %vm3318 = vc.u32 %v3312, %v3314
        %v3319 = vadd.s32 %v3315, 1
        %v3320 = vsel %vm3318, %v3319, %v3315
        %v3321 = vadd.s32 %v3316, %v3320
        %v3322 = vadd.s32 %v3321, 536870912
        %v3323 = vshrl.u32 %v3322, 30
        %v3324 = vshll.u32 %v3323, 30
        %v3325 = vsub.s32 %v3321, %v3324
        %vm3326 = vcmp.lt.s32.totalorder %v3325, 0
        %v3327 = vsub.s32 0, %v3325
        %v3328 = vsel %vm3326, %v3327, %v3325
        %v3329 = vclz %v3328
        %v3330 = vsub.s32 %v3329, 2
        %vm3331 = vcmp.gt.s32.totalorder 0, %v3330
        %v3332 = vsel %vm3331, 0, %v3330
        %v3333 = vsub.s32 32, %v3332
        %v3334 = vshll.u32 %v3325, %v3332
        %v3335 = vshrl.u32 %v3317, %v3333
        %v3336 = vor.u32 %v3334, %v3335
        %v3337 = vsub.s32 4294967266, %v3332
        %v3338 = vadd.s32 %v3337, 127
        %v3339 = vshll.u32 %v3338, 23
        %v3340 = vor.u32 4788187, %v3339
        %v3341 = vand.u32 2147483647, %v3340
        %v3343 = vcvt.s32.f32 %v3336
        %v3344 = vmul.f32 %v3343, %v3341
        %v3345 = vxor.u32 %v3344, 2147483648
        %v3346 = vsel %vm3263, %v3345, %v3344
        %v3347 = vsub.s32 4, %v3323
        %v3348 = vsel %vm3263, %v3347, %v3323
        %v3349 = vsel %vm3262, %v264, %v3346
        %v3350 = vsel %vm3262, 0, %v3348
        %v3351 = vcosq.f32.pop %v3349
        %v3352 = vsinq.f32.pop %v3349
        %vm3353 = vweird.f32 %v264
        %v3354 = vand.u32 %v3350, 3
        %vm3355 = vcmp.lt.s32.totalorder %v3354, 2
        %vm3356 = vcmp.eq.s32.totalorder %v3354, 0
        %v3357 = vxor.u32 %v3352, 2147483648
        %v3358 = vsel %vm3356, %v3351, %v3357
        %vm3359 = vcmp.eq.s32.totalorder %v3354, 2
        %v3360 = vxor.u32 %v3351, 2147483648
        %v3361 = vsel %vm3359, %v3360, %v3352
        %v3362 = vsel %vm3355, %v3358, %v3361
        %v3363 = vsel %vm3353, nan, %v3362
        %v3364 = vand.u32 2147483647, %v265
        %vm3365 = vcmp.le.f32.partialorder %v3364, 0.7853982
        %vm3366 = vcmp.lt.s32.totalorder %v265, 0
        %v3367 = vand.u32 %v265, 2139095040
        %v3368 = vshrl.u32 %v3367, 23
        %v3369 = vsub.s32 %v3368, 127
        %v3370 = vand.u32 2147483647, %v265
        %v3371 = vand.u32 %v3370, 8388607
        %v3372 = vor.u32 %v3371, 8388608
        %v3373 = vsub.s32 0, %v3372
        %v3374 = vadd.s32 %v3369, 1
        %vm3375 = vcmp.gt.s32.totalorder %v3374, 0
        %v3376 = vsel %vm3375, %v3374, 0
        %v3377 = vshrl.u32 %v3376, 5
        %v3378 = vand.u32 %v3376, 31
        %v3379 = vsub.s32 32, %v3378
        %v3380 = vshrl.u32 683565275, %v3379
        %v3381 = vshll.u32 683565275, %v3378
        %v3382 = vshrl.u32 2475754826, %v3379
        %v3383 = vor.u32 %v3381, %v3382
        %v3384 = vshll.u32 2475754826, %v3378
        %v3385 = vshrl.u32 2131351028, %v3379
        %v3386 = vor.u32 %v3384, %v3385
        %v3387 = vshll.u32 2131351028, %v3378
        %v3388 = vshrl.u32 2102212464, %v3379
        %v3389 = vor.u32 %v3387, %v3388
        %v3390 = vshll.u32 2102212464, %v3378
        %v3391 = vshrl.u32 920167782, %v3379
        %v3392 = vor.u32 %v3390, %v3391
        %v3393 = vshll.u32 920167782, %v3378
        %v3394 = vshrl.u32 1326507024, %v3379
        %v3395 = vor.u32 %v3393, %v3394
        %vm3396 = vcmp.lt.s32.totalorder %v3377, 1
        %vm3397 = vcmp.lt.s32.totalorder %v3377, 2
        %vm3398 = vcmp.lt.s32.totalorder %v3377, 3
        %vm3399 = vcmp.lt.s32.totalorder %v3377, 4
        %v3400 = vsel %vm3396, %v3380, %v3383
        %v3401 = vsel %vm3399, %v3389, 2102212464
        %v3402 = vsel %vm3398, %v3386, %v3401
        %v3403 = vsel %vm3397, %v3400, %v3402
        %v3404 = vsel %vm3396, %v3383, %v3386
        %v3405 = vsel %vm3399, %v3392, 920167782
        %v3406 = vsel %vm3398, %v3389, %v3405
        %v3407 = vsel %vm3397, %v3404, %v3406
        %v3408 = vsel %vm3396, %v3386, %v3389
        %v3409 = vsel %vm3399, %v3395, 1326507024
        %v3410 = vsel %vm3398, %v3392, %v3409
        %v3411 = vsel %vm3397, %v3408, %v3410
        %v3412 = vshll.u32 %v3372, 8
        %v3413 = vmul.u32.u64.compose %v3412, %v3411
        %v3414 = vextract.low.u32 %v3413
        %v3415 = vextract.high.u32 %v3413
        %v3416 = vmul.u32.u64.compose %v3412, %v3407
        %v3417 = vextract.low.u32 %v3416
        %v3418 = vextract.high.u32 %v3416
        %v3419 = vmul.u32 %v3412, %v3403
        %v3420 = vadd.s32 %v3415, %v3417
        %vm3421 = vc.u32 %v3415, %v3417
        %v3422 = vadd.s32 %v3418, 1
        %v3423 = vsel %vm3421, %v3422, %v3418
        %v3424 = vadd.s32 %v3419, %v3423
        %v3425 = vadd.s32 %v3424, 536870912
        %v3426 = vshrl.u32 %v3425, 30
        %v3427 = vshll.u32 %v3426, 30
        %v3428 = vsub.s32 %v3424, %v3427
        %vm3429 = vcmp.lt.s32.totalorder %v3428, 0
        %v3430 = vsub.s32 0, %v3428
        %v3431 = vsel %vm3429, %v3430, %v3428
        %v3432 = vclz %v3431
        %v3433 = vsub.s32 %v3432, 2
        %vm3434 = vcmp.gt.s32.totalorder 0, %v3433
        %v3435 = vsel %vm3434, 0, %v3433
        %v3436 = vsub.s32 32, %v3435
        %v3437 = vshll.u32 %v3428, %v3435
        %v3438 = vshrl.u32 %v3420, %v3436
        %v3439 = vor.u32 %v3437, %v3438
        %v3440 = vsub.s32 4294967266, %v3435
        %v3441 = vadd.s32 %v3440, 127
        %v3442 = vshll.u32 %v3441, 23
        %v3443 = vor.u32 4788187, %v3442
        %v3444 = vand.u32 2147483647, %v3443
        %v3446 = vcvt.s32.f32 %v3439
        %v3447 = vmul.f32 %v3446, %v3444
        %v3448 = vxor.u32 %v3447, 2147483648
        %v3449 = vsel %vm3366, %v3448, %v3447
        %v3450 = vsub.s32 4, %v3426
        %v3451 = vsel %vm3366, %v3450, %v3426
        %v3452 = vsel %vm3365, %v265, %v3449
        %v3453 = vsel %vm3365, 0, %v3451
        %v3454 = vcosq.f32.pop %v3452
        %v3455 = vsinq.f32.pop %v3452
        %vm3456 = vweird.f32 %v265
        %v3457 = vand.u32 %v3453, 3
        %vm3458 = vcmp.lt.s32.totalorder %v3457, 2
        %vm3459 = vcmp.eq.s32.totalorder %v3457, 0
        %v3460 = vxor.u32 %v3455, 2147483648
        %v3461 = vsel %vm3459, %v3454, %v3460
        %vm3462 = vcmp.eq.s32.totalorder %v3457, 2
        %v3463 = vxor.u32 %v3454, 2147483648
        %v3464 = vsel %vm3462, %v3463, %v3455
        %v3465 = vsel %vm3458, %v3461, %v3464
        %v3466 = vsel %vm3456, nan, %v3465
        %v3467 = vand.u32 2147483647, %v266
        %vm3468 = vcmp.le.f32.partialorder %v3467, 0.7853982
        %vm3469 = vcmp.lt.s32.totalorder %v266, 0
        %v3470 = vand.u32 %v266, 2139095040
        %v3471 = vshrl.u32 %v3470, 23
        %v3472 = vsub.s32 %v3471, 127
        %v3473 = vand.u32 2147483647, %v266
        %v3474 = vand.u32 %v3473, 8388607
        %v3475 = vor.u32 %v3474, 8388608
        %v3476 = vsub.s32 0, %v3475
        %v3477 = vadd.s32 %v3472, 1
        %vm3478 = vcmp.gt.s32.totalorder %v3477, 0
        %v3479 = vsel %vm3478, %v3477, 0
        %v3480 = vshrl.u32 %v3479, 5
        %v3481 = vand.u32 %v3479, 31
        %v3482 = vsub.s32 32, %v3481
        %v3483 = vshrl.u32 683565275, %v3482
        %v3484 = vshll.u32 683565275, %v3481
        %v3485 = vshrl.u32 2475754826, %v3482
        %v3486 = vor.u32 %v3484, %v3485
        %v3487 = vshll.u32 2475754826, %v3481
        %v3488 = vshrl.u32 2131351028, %v3482
        %v3489 = vor.u32 %v3487, %v3488
        %v3490 = vshll.u32 2131351028, %v3481
        %v3491 = vshrl.u32 2102212464, %v3482
        %v3492 = vor.u32 %v3490, %v3491
        %v3493 = vshll.u32 2102212464, %v3481
        %v3494 = vshrl.u32 920167782, %v3482
        %v3495 = vor.u32 %v3493, %v3494
        %v3496 = vshll.u32 920167782, %v3481
        %v3497 = vshrl.u32 1326507024, %v3482
        %v3498 = vor.u32 %v3496, %v3497
        %vm3499 = vcmp.lt.s32.totalorder %v3480, 1
        %vm3500 = vcmp.lt.s32.totalorder %v3480, 2
        %vm3501 = vcmp.lt.s32.totalorder %v3480, 3
        %vm3502 = vcmp.lt.s32.totalorder %v3480, 4
        %v3503 = vsel %vm3499, %v3483, %v3486
        %v3504 = vsel %vm3502, %v3492, 2102212464
        %v3505 = vsel %vm3501, %v3489, %v3504
        %v3506 = vsel %vm3500, %v3503, %v3505
        %v3507 = vsel %vm3499, %v3486, %v3489
        %v3508 = vsel %vm3502, %v3495, 920167782
        %v3509 = vsel %vm3501, %v3492, %v3508
        %v3510 = vsel %vm3500, %v3507, %v3509
        %v3511 = vsel %vm3499, %v3489, %v3492
        %v3512 = vsel %vm3502, %v3498, 1326507024
        %v3513 = vsel %vm3501, %v3495, %v3512
        %v3514 = vsel %vm3500, %v3511, %v3513
        %v3515 = vshll.u32 %v3475, 8
        %v3516 = vmul.u32.u64.compose %v3515, %v3514
        %v3517 = vextract.low.u32 %v3516
        %v3518 = vextract.high.u32 %v3516
        %v3519 = vmul.u32.u64.compose %v3515, %v3510
        %v3520 = vextract.low.u32 %v3519
        %v3521 = vextract.high.u32 %v3519
        %v3522 = vmul.u32 %v3515, %v3506
        %v3523 = vadd.s32 %v3518, %v3520
        %vm3524 = vc.u32 %v3518, %v3520
        %v3525 = vadd.s32 %v3521, 1
        %v3526 = vsel %vm3524, %v3525, %v3521
        %v3527 = vadd.s32 %v3522, %v3526
        %v3528 = vadd.s32 %v3527, 536870912
        %v3529 = vshrl.u32 %v3528, 30
        %v3530 = vshll.u32 %v3529, 30
        %v3531 = vsub.s32 %v3527, %v3530
        %vm3532 = vcmp.lt.s32.totalorder %v3531, 0
        %v3533 = vsub.s32 0, %v3531
        %v3534 = vsel %vm3532, %v3533, %v3531
        %v3535 = vclz %v3534
        %v3536 = vsub.s32 %v3535, 2
        %vm3537 = vcmp.gt.s32.totalorder 0, %v3536
        %v3538 = vsel %vm3537, 0, %v3536
        %v3539 = vsub.s32 32, %v3538
        %v3540 = vshll.u32 %v3531, %v3538
        %v3541 = vshrl.u32 %v3523, %v3539
        %v3542 = vor.u32 %v3540, %v3541
        %v3543 = vsub.s32 4294967266, %v3538
        %v3544 = vadd.s32 %v3543, 127
        %v3545 = vshll.u32 %v3544, 23
        %v3546 = vor.u32 4788187, %v3545
        %v3547 = vand.u32 2147483647, %v3546
        %v3549 = vcvt.s32.f32 %v3542
        %v3550 = vmul.f32 %v3549, %v3547
        %v3551 = vxor.u32 %v3550, 2147483648
        %v3552 = vsel %vm3469, %v3551, %v3550
        %v3553 = vsub.s32 4, %v3529
        %v3554 = vsel %vm3469, %v3553, %v3529
        %v3555 = vsel %vm3468, %v266, %v3552
        %v3556 = vsel %vm3468, 0, %v3554
        %v3557 = vcosq.f32.pop %v3555
        %v3558 = vsinq.f32.pop %v3555
        %vm3559 = vweird.f32 %v266
        %v3560 = vand.u32 %v3556, 3
        %vm3561 = vcmp.lt.s32.totalorder %v3560, 2
        %vm3562 = vcmp.eq.s32.totalorder %v3560, 0
        %v3563 = vxor.u32 %v3558, 2147483648
        %v3564 = vsel %vm3562, %v3557, %v3563
        %vm3565 = vcmp.eq.s32.totalorder %v3560, 2
        %v3566 = vxor.u32 %v3557, 2147483648
        %v3567 = vsel %vm3565, %v3566, %v3558
        %v3568 = vsel %vm3561, %v3564, %v3567
        %v3569 = vsel %vm3559, nan, %v3568
        %v3570 = vand.u32 2147483647, %v267
        %vm3571 = vcmp.le.f32.partialorder %v3570, 0.7853982
        %vm3572 = vcmp.lt.s32.totalorder %v267, 0
        %v3573 = vand.u32 %v267, 2139095040
        %v3574 = vshrl.u32 %v3573, 23
        %v3575 = vsub.s32 %v3574, 127
        %v3576 = vand.u32 2147483647, %v267
        %v3577 = vand.u32 %v3576, 8388607
        %v3578 = vor.u32 %v3577, 8388608
        %v3579 = vsub.s32 0, %v3578
        %v3580 = vadd.s32 %v3575, 1
        %vm3581 = vcmp.gt.s32.totalorder %v3580, 0
        %v3582 = vsel %vm3581, %v3580, 0
        %v3583 = vshrl.u32 %v3582, 5
        %v3584 = vand.u32 %v3582, 31
        %v3585 = vsub.s32 32, %v3584
        %v3586 = vshrl.u32 683565275, %v3585
        %v3587 = vshll.u32 683565275, %v3584
        %v3588 = vshrl.u32 2475754826, %v3585
        %v3589 = vor.u32 %v3587, %v3588
        %v3590 = vshll.u32 2475754826, %v3584
        %v3591 = vshrl.u32 2131351028, %v3585
        %v3592 = vor.u32 %v3590, %v3591
        %v3593 = vshll.u32 2131351028, %v3584
        %v3594 = vshrl.u32 2102212464, %v3585
        %v3595 = vor.u32 %v3593, %v3594
        %v3596 = vshll.u32 2102212464, %v3584
        %v3597 = vshrl.u32 920167782, %v3585
        %v3598 = vor.u32 %v3596, %v3597
        %v3599 = vshll.u32 920167782, %v3584
        %v3600 = vshrl.u32 1326507024, %v3585
        %v3601 = vor.u32 %v3599, %v3600
        %vm3602 = vcmp.lt.s32.totalorder %v3583, 1
        %vm3603 = vcmp.lt.s32.totalorder %v3583, 2
        %vm3604 = vcmp.lt.s32.totalorder %v3583, 3
        %vm3605 = vcmp.lt.s32.totalorder %v3583, 4
        %v3606 = vsel %vm3602, %v3586, %v3589
        %v3607 = vsel %vm3605, %v3595, 2102212464
        %v3608 = vsel %vm3604, %v3592, %v3607
        %v3609 = vsel %vm3603, %v3606, %v3608
        %v3610 = vsel %vm3602, %v3589, %v3592
        %v3611 = vsel %vm3605, %v3598, 920167782
        %v3612 = vsel %vm3604, %v3595, %v3611
        %v3613 = vsel %vm3603, %v3610, %v3612
        %v3614 = vsel %vm3602, %v3592, %v3595
        %v3615 = vsel %vm3605, %v3601, 1326507024
        %v3616 = vsel %vm3604, %v3598, %v3615
        %v3617 = vsel %vm3603, %v3614, %v3616
        %v3618 = vshll.u32 %v3578, 8
        %v3619 = vmul.u32.u64.compose %v3618, %v3617
        %v3620 = vextract.low.u32 %v3619
        %v3621 = vextract.high.u32 %v3619
        %v3622 = vmul.u32.u64.compose %v3618, %v3613
        %v3623 = vextract.low.u32 %v3622
        %v3624 = vextract.high.u32 %v3622
        %v3625 = vmul.u32 %v3618, %v3609
        %v3626 = vadd.s32 %v3621, %v3623
        %vm3627 = vc.u32 %v3621, %v3623
        %v3628 = vadd.s32 %v3624, 1
        %v3629 = vsel %vm3627, %v3628, %v3624
        %v3630 = vadd.s32 %v3625, %v3629
        %v3631 = vadd.s32 %v3630, 536870912
        %v3632 = vshrl.u32 %v3631, 30
        %v3633 = vshll.u32 %v3632, 30
        %v3634 = vsub.s32 %v3630, %v3633
        %vm3635 = vcmp.lt.s32.totalorder %v3634, 0
        %v3636 = vsub.s32 0, %v3634
        %v3637 = vsel %vm3635, %v3636, %v3634
        %v3638 = vclz %v3637
        %v3639 = vsub.s32 %v3638, 2
        %vm3640 = vcmp.gt.s32.totalorder 0, %v3639
        %v3641 = vsel %vm3640, 0, %v3639
        %v3642 = vsub.s32 32, %v3641
        %v3643 = vshll.u32 %v3634, %v3641
        %v3644 = vshrl.u32 %v3626, %v3642
        %v3645 = vor.u32 %v3643, %v3644
        %v3646 = vsub.s32 4294967266, %v3641
        %v3647 = vadd.s32 %v3646, 127
        %v3648 = vshll.u32 %v3647, 23
        %v3649 = vor.u32 4788187, %v3648
        %v3650 = vand.u32 2147483647, %v3649
        %v3652 = vcvt.s32.f32 %v3645
        %v3653 = vmul.f32 %v3652, %v3650
        %v3654 = vxor.u32 %v3653, 2147483648
        %v3655 = vsel %vm3572, %v3654, %v3653
        %v3656 = vsub.s32 4, %v3632
        %v3657 = vsel %vm3572, %v3656, %v3632
        %v3658 = vsel %vm3571, %v267, %v3655
        %v3659 = vsel %vm3571, 0, %v3657
        %v3660 = vcosq.f32.pop %v3658
        %v3661 = vsinq.f32.pop %v3658
        %vm3662 = vweird.f32 %v267
        %v3663 = vand.u32 %v3659, 3
        %vm3664 = vcmp.lt.s32.totalorder %v3663, 2
        %vm3665 = vcmp.eq.s32.totalorder %v3663, 0
        %v3666 = vxor.u32 %v3661, 2147483648
        %v3667 = vsel %vm3665, %v3660, %v3666
        %vm3668 = vcmp.eq.s32.totalorder %v3663, 2
        %v3669 = vxor.u32 %v3660, 2147483648
        %v3670 = vsel %vm3668, %v3669, %v3661
        %v3671 = vsel %vm3664, %v3667, %v3670
        %v3672 = vsel %vm3662, nan, %v3671
        %v3673 = vand.u32 2147483647, %v268
        %vm3674 = vcmp.le.f32.partialorder %v3673, 0.7853982
        %vm3675 = vcmp.lt.s32.totalorder %v268, 0
        %v3676 = vand.u32 %v268, 2139095040
        %v3677 = vshrl.u32 %v3676, 23
        %v3678 = vsub.s32 %v3677, 127
        %v3679 = vand.u32 2147483647, %v268
        %v3680 = vand.u32 %v3679, 8388607
        %v3681 = vor.u32 %v3680, 8388608
        %v3682 = vsub.s32 0, %v3681
        %v3683 = vadd.s32 %v3678, 1
        %vm3684 = vcmp.gt.s32.totalorder %v3683, 0
        %v3685 = vsel %vm3684, %v3683, 0
        %v3686 = vshrl.u32 %v3685, 5
        %v3687 = vand.u32 %v3685, 31
        %v3688 = vsub.s32 32, %v3687
        %v3689 = vshrl.u32 683565275, %v3688
        %v3690 = vshll.u32 683565275, %v3687
        %v3691 = vshrl.u32 2475754826, %v3688
        %v3692 = vor.u32 %v3690, %v3691
        %v3693 = vshll.u32 2475754826, %v3687
        %v3694 = vshrl.u32 2131351028, %v3688
        %v3695 = vor.u32 %v3693, %v3694
        %v3696 = vshll.u32 2131351028, %v3687
        %v3697 = vshrl.u32 2102212464, %v3688
        %v3698 = vor.u32 %v3696, %v3697
        %v3699 = vshll.u32 2102212464, %v3687
        %v3700 = vshrl.u32 920167782, %v3688
        %v3701 = vor.u32 %v3699, %v3700
        %v3702 = vshll.u32 920167782, %v3687
        %v3703 = vshrl.u32 1326507024, %v3688
        %v3704 = vor.u32 %v3702, %v3703
        %vm3705 = vcmp.lt.s32.totalorder %v3686, 1
        %vm3706 = vcmp.lt.s32.totalorder %v3686, 2
        %vm3707 = vcmp.lt.s32.totalorder %v3686, 3
        %vm3708 = vcmp.lt.s32.totalorder %v3686, 4
        %v3709 = vsel %vm3705, %v3689, %v3692
        %v3710 = vsel %vm3708, %v3698, 2102212464
        %v3711 = vsel %vm3707, %v3695, %v3710
        %v3712 = vsel %vm3706, %v3709, %v3711
        %v3713 = vsel %vm3705, %v3692, %v3695
        %v3714 = vsel %vm3708, %v3701, 920167782
        %v3715 = vsel %vm3707, %v3698, %v3714
        %v3716 = vsel %vm3706, %v3713, %v3715
        %v3717 = vsel %vm3705, %v3695, %v3698
        %v3718 = vsel %vm3708, %v3704, 1326507024
        %v3719 = vsel %vm3707, %v3701, %v3718
        %v3720 = vsel %vm3706, %v3717, %v3719
        %v3721 = vshll.u32 %v3681, 8
        %v3722 = vmul.u32.u64.compose %v3721, %v3720
        %v3723 = vextract.low.u32 %v3722
        %v3724 = vextract.high.u32 %v3722
        %v3725 = vmul.u32.u64.compose %v3721, %v3716
        %v3726 = vextract.low.u32 %v3725
        %v3727 = vextract.high.u32 %v3725
        %v3728 = vmul.u32 %v3721, %v3712
        %v3729 = vadd.s32 %v3724, %v3726
        %vm3730 = vc.u32 %v3724, %v3726
        %v3731 = vadd.s32 %v3727, 1
        %v3732 = vsel %vm3730, %v3731, %v3727
        %v3733 = vadd.s32 %v3728, %v3732
        %v3734 = vadd.s32 %v3733, 536870912
        %v3735 = vshrl.u32 %v3734, 30
        %v3736 = vshll.u32 %v3735, 30
        %v3737 = vsub.s32 %v3733, %v3736
        %vm3738 = vcmp.lt.s32.totalorder %v3737, 0
        %v3739 = vsub.s32 0, %v3737
        %v3740 = vsel %vm3738, %v3739, %v3737
        %v3741 = vclz %v3740
        %v3742 = vsub.s32 %v3741, 2
        %vm3743 = vcmp.gt.s32.totalorder 0, %v3742
        %v3744 = vsel %vm3743, 0, %v3742
        %v3745 = vsub.s32 32, %v3744
        %v3746 = vshll.u32 %v3737, %v3744
        %v3747 = vshrl.u32 %v3729, %v3745
        %v3748 = vor.u32 %v3746, %v3747
        %v3749 = vsub.s32 4294967266, %v3744
        %v3750 = vadd.s32 %v3749, 127
        %v3751 = vshll.u32 %v3750, 23
        %v3752 = vor.u32 4788187, %v3751
        %v3753 = vand.u32 2147483647, %v3752
        %v3755 = vcvt.s32.f32 %v3748
        %v3756 = vmul.f32 %v3755, %v3753
        %v3757 = vxor.u32 %v3756, 2147483648
        %v3758 = vsel %vm3675, %v3757, %v3756
        %v3759 = vsub.s32 4, %v3735
        %v3760 = vsel %vm3675, %v3759, %v3735
        %v3761 = vsel %vm3674, %v268, %v3758
        %v3762 = vsel %vm3674, 0, %v3760
        %v3763 = vcosq.f32.pop %v3761
        %v3764 = vsinq.f32.pop %v3761
        %vm3765 = vweird.f32 %v268
        %v3766 = vand.u32 %v3762, 3
        %vm3767 = vcmp.lt.s32.totalorder %v3766, 2
        %vm3768 = vcmp.eq.s32.totalorder %v3766, 0
        %v3769 = vxor.u32 %v3764, 2147483648
        %v3770 = vsel %vm3768, %v3763, %v3769
        %vm3771 = vcmp.eq.s32.totalorder %v3766, 2
        %v3772 = vxor.u32 %v3763, 2147483648
        %v3773 = vsel %vm3771, %v3772, %v3764
        %v3774 = vsel %vm3767, %v3770, %v3773
        %v3775 = vsel %vm3765, nan, %v3774
        %v3776 = vand.u32 2147483647, %v269
        %vm3777 = vcmp.le.f32.partialorder %v3776, 0.7853982
        %vm3778 = vcmp.lt.s32.totalorder %v269, 0
        %v3779 = vand.u32 %v269, 2139095040
        %v3780 = vshrl.u32 %v3779, 23
        %v3781 = vsub.s32 %v3780, 127
        %v3782 = vand.u32 2147483647, %v269
        %v3783 = vand.u32 %v3782, 8388607
        %v3784 = vor.u32 %v3783, 8388608
        %v3785 = vsub.s32 0, %v3784
        %v3786 = vadd.s32 %v3781, 1
        %vm3787 = vcmp.gt.s32.totalorder %v3786, 0
        %v3788 = vsel %vm3787, %v3786, 0
        %v3789 = vshrl.u32 %v3788, 5
        %v3790 = vand.u32 %v3788, 31
        %v3791 = vsub.s32 32, %v3790
        %v3792 = vshrl.u32 683565275, %v3791
        %v3793 = vshll.u32 683565275, %v3790
        %v3794 = vshrl.u32 2475754826, %v3791
        %v3795 = vor.u32 %v3793, %v3794
        %v3796 = vshll.u32 2475754826, %v3790
        %v3797 = vshrl.u32 2131351028, %v3791
        %v3798 = vor.u32 %v3796, %v3797
        %v3799 = vshll.u32 2131351028, %v3790
        %v3800 = vshrl.u32 2102212464, %v3791
        %v3801 = vor.u32 %v3799, %v3800
        %v3802 = vshll.u32 2102212464, %v3790
        %v3803 = vshrl.u32 920167782, %v3791
        %v3804 = vor.u32 %v3802, %v3803
        %v3805 = vshll.u32 920167782, %v3790
        %v3806 = vshrl.u32 1326507024, %v3791
        %v3807 = vor.u32 %v3805, %v3806
        %vm3808 = vcmp.lt.s32.totalorder %v3789, 1
        %vm3809 = vcmp.lt.s32.totalorder %v3789, 2
        %vm3810 = vcmp.lt.s32.totalorder %v3789, 3
        %vm3811 = vcmp.lt.s32.totalorder %v3789, 4
        %v3812 = vsel %vm3808, %v3792, %v3795
        %v3813 = vsel %vm3811, %v3801, 2102212464
        %v3814 = vsel %vm3810, %v3798, %v3813
        %v3815 = vsel %vm3809, %v3812, %v3814
        %v3816 = vsel %vm3808, %v3795, %v3798
        %v3817 = vsel %vm3811, %v3804, 920167782
        %v3818 = vsel %vm3810, %v3801, %v3817
        %v3819 = vsel %vm3809, %v3816, %v3818
        %v3820 = vsel %vm3808, %v3798, %v3801
        %v3821 = vsel %vm3811, %v3807, 1326507024
        %v3822 = vsel %vm3810, %v3804, %v3821
        %v3823 = vsel %vm3809, %v3820, %v3822
        %v3824 = vshll.u32 %v3784, 8
        %v3825 = vmul.u32.u64.compose %v3824, %v3823
        %v3826 = vextract.low.u32 %v3825
        %v3827 = vextract.high.u32 %v3825
        %v3828 = vmul.u32.u64.compose %v3824, %v3819
        %v3829 = vextract.low.u32 %v3828
        %v3830 = vextract.high.u32 %v3828
        %v3831 = vmul.u32 %v3824, %v3815
        %v3832 = vadd.s32 %v3827, %v3829
        %vm3833 = vc.u32 %v3827, %v3829
        %v3834 = vadd.s32 %v3830, 1
        %v3835 = vsel %vm3833, %v3834, %v3830
        %v3836 = vadd.s32 %v3831, %v3835
        %v3837 = vadd.s32 %v3836, 536870912
        %v3838 = vshrl.u32 %v3837, 30
        %v3839 = vshll.u32 %v3838, 30
        %v3840 = vsub.s32 %v3836, %v3839
        %vm3841 = vcmp.lt.s32.totalorder %v3840, 0
        %v3842 = vsub.s32 0, %v3840
        %v3843 = vsel %vm3841, %v3842, %v3840
        %v3844 = vclz %v3843
        %v3845 = vsub.s32 %v3844, 2
        %vm3846 = vcmp.gt.s32.totalorder 0, %v3845
        %v3847 = vsel %vm3846, 0, %v3845
        %v3848 = vsub.s32 32, %v3847
        %v3849 = vshll.u32 %v3840, %v3847
        %v3850 = vshrl.u32 %v3832, %v3848
        %v3851 = vor.u32 %v3849, %v3850
        %v3852 = vsub.s32 4294967266, %v3847
        %v3853 = vadd.s32 %v3852, 127
        %v3854 = vshll.u32 %v3853, 23
        %v3855 = vor.u32 4788187, %v3854
        %v3856 = vand.u32 2147483647, %v3855
        %v3858 = vcvt.s32.f32 %v3851
        %v3859 = vmul.f32 %v3858, %v3856
        %v3860 = vxor.u32 %v3859, 2147483648
        %v3861 = vsel %vm3778, %v3860, %v3859
        %v3862 = vsub.s32 4, %v3838
        %v3863 = vsel %vm3778, %v3862, %v3838
        %v3864 = vsel %vm3777, %v269, %v3861
        %v3865 = vsel %vm3777, 0, %v3863
        %v3866 = vcosq.f32.pop %v3864
        %v3867 = vsinq.f32.pop %v3864
        %vm3868 = vweird.f32 %v269
        %v3869 = vand.u32 %v3865, 3
        %vm3870 = vcmp.lt.s32.totalorder %v3869, 2
        %vm3871 = vcmp.eq.s32.totalorder %v3869, 0
        %v3872 = vxor.u32 %v3867, 2147483648
        %v3873 = vsel %vm3871, %v3866, %v3872
        %vm3874 = vcmp.eq.s32.totalorder %v3869, 2
        %v3875 = vxor.u32 %v3866, 2147483648
        %v3876 = vsel %vm3874, %v3875, %v3867
        %v3877 = vsel %vm3870, %v3873, %v3876
        %v3878 = vsel %vm3868, nan, %v3877
        %v3879 = vand.u32 2147483647, %v270
        %vm3880 = vcmp.le.f32.partialorder %v3879, 0.7853982
        %vm3881 = vcmp.lt.s32.totalorder %v270, 0
        %v3882 = vand.u32 %v270, 2139095040
        %v3883 = vshrl.u32 %v3882, 23
        %v3884 = vsub.s32 %v3883, 127
        %v3885 = vand.u32 2147483647, %v270
        %v3886 = vand.u32 %v3885, 8388607
        %v3887 = vor.u32 %v3886, 8388608
        %v3888 = vsub.s32 0, %v3887
        %v3889 = vadd.s32 %v3884, 1
        %vm3890 = vcmp.gt.s32.totalorder %v3889, 0
        %v3891 = vsel %vm3890, %v3889, 0
        %v3892 = vshrl.u32 %v3891, 5
        %v3893 = vand.u32 %v3891, 31
        %v3894 = vsub.s32 32, %v3893
        %v3895 = vshrl.u32 683565275, %v3894
        %v3896 = vshll.u32 683565275, %v3893
        %v3897 = vshrl.u32 2475754826, %v3894
        %v3898 = vor.u32 %v3896, %v3897
        %v3899 = vshll.u32 2475754826, %v3893
        %v3900 = vshrl.u32 2131351028, %v3894
        %v3901 = vor.u32 %v3899, %v3900
        %v3902 = vshll.u32 2131351028, %v3893
        %v3903 = vshrl.u32 2102212464, %v3894
        %v3904 = vor.u32 %v3902, %v3903
        %v3905 = vshll.u32 2102212464, %v3893
        %v3906 = vshrl.u32 920167782, %v3894
        %v3907 = vor.u32 %v3905, %v3906
        %v3908 = vshll.u32 920167782, %v3893
        %v3909 = vshrl.u32 1326507024, %v3894
        %v3910 = vor.u32 %v3908, %v3909
        %vm3911 = vcmp.lt.s32.totalorder %v3892, 1
        %vm3912 = vcmp.lt.s32.totalorder %v3892, 2
        %vm3913 = vcmp.lt.s32.totalorder %v3892, 3
        %vm3914 = vcmp.lt.s32.totalorder %v3892, 4
        %v3915 = vsel %vm3911, %v3895, %v3898
        %v3916 = vsel %vm3914, %v3904, 2102212464
        %v3917 = vsel %vm3913, %v3901, %v3916
        %v3918 = vsel %vm3912, %v3915, %v3917
        %v3919 = vsel %vm3911, %v3898, %v3901
        %v3920 = vsel %vm3914, %v3907, 920167782
        %v3921 = vsel %vm3913, %v3904, %v3920
        %v3922 = vsel %vm3912, %v3919, %v3921
        %v3923 = vsel %vm3911, %v3901, %v3904
        %v3924 = vsel %vm3914, %v3910, 1326507024
        %v3925 = vsel %vm3913, %v3907, %v3924
        %v3926 = vsel %vm3912, %v3923, %v3925
        %v3927 = vshll.u32 %v3887, 8
        %v3928 = vmul.u32.u64.compose %v3927, %v3926
        %v3929 = vextract.low.u32 %v3928
        %v3930 = vextract.high.u32 %v3928
        %v3931 = vmul.u32.u64.compose %v3927, %v3922
        %v3932 = vextract.low.u32 %v3931
        %v3933 = vextract.high.u32 %v3931
        %v3934 = vmul.u32 %v3927, %v3918
        %v3935 = vadd.s32 %v3930, %v3932
        %vm3936 = vc.u32 %v3930, %v3932
        %v3937 = vadd.s32 %v3933, 1
        %v3938 = vsel %vm3936, %v3937, %v3933
        %v3939 = vadd.s32 %v3934, %v3938
        %v3940 = vadd.s32 %v3939, 536870912
        %v3941 = vshrl.u32 %v3940, 30
        %v3942 = vshll.u32 %v3941, 30
        %v3943 = vsub.s32 %v3939, %v3942
        %vm3944 = vcmp.lt.s32.totalorder %v3943, 0
        %v3945 = vsub.s32 0, %v3943
        %v3946 = vsel %vm3944, %v3945, %v3943
        %v3947 = vclz %v3946
        %v3948 = vsub.s32 %v3947, 2
        %vm3949 = vcmp.gt.s32.totalorder 0, %v3948
        %v3950 = vsel %vm3949, 0, %v3948
        %v3951 = vsub.s32 32, %v3950
        %v3952 = vshll.u32 %v3943, %v3950
        %v3953 = vshrl.u32 %v3935, %v3951
        %v3954 = vor.u32 %v3952, %v3953
        %v3955 = vsub.s32 4294967266, %v3950
        %v3956 = vadd.s32 %v3955, 127
        %v3957 = vshll.u32 %v3956, 23
        %v3958 = vor.u32 4788187, %v3957
        %v3959 = vand.u32 2147483647, %v3958
        %v3961 = vcvt.s32.f32 %v3954
        %v3962 = vmul.f32 %v3961, %v3959
        %v3963 = vxor.u32 %v3962, 2147483648
        %v3964 = vsel %vm3881, %v3963, %v3962
        %v3965 = vsub.s32 4, %v3941
        %v3966 = vsel %vm3881, %v3965, %v3941
        %v3967 = vsel %vm3880, %v270, %v3964
        %v3968 = vsel %vm3880, 0, %v3966
        %v3969 = vcosq.f32.pop %v3967
        %v3970 = vsinq.f32.pop %v3967
        %vm3971 = vweird.f32 %v270
        %v3972 = vand.u32 %v3968, 3
        %vm3973 = vcmp.lt.s32.totalorder %v3972, 2
        %vm3974 = vcmp.eq.s32.totalorder %v3972, 0
        %v3975 = vxor.u32 %v3970, 2147483648
        %v3976 = vsel %vm3974, %v3969, %v3975
        %vm3977 = vcmp.eq.s32.totalorder %v3972, 2
        %v3978 = vxor.u32 %v3969, 2147483648
        %v3979 = vsel %vm3977, %v3978, %v3970
        %v3980 = vsel %vm3973, %v3976, %v3979
        %v3981 = vsel %vm3971, nan, %v3980
        %v3982 = vand.u32 2147483647, %v271
        %vm3983 = vcmp.le.f32.partialorder %v3982, 0.7853982
        %vm3984 = vcmp.lt.s32.totalorder %v271, 0
        %v3985 = vand.u32 %v271, 2139095040
        %v3986 = vshrl.u32 %v3985, 23
        %v3987 = vsub.s32 %v3986, 127
        %v3988 = vand.u32 2147483647, %v271
        %v3989 = vand.u32 %v3988, 8388607
        %v3990 = vor.u32 %v3989, 8388608
        %v3991 = vsub.s32 0, %v3990
        %v3992 = vadd.s32 %v3987, 1
        %vm3993 = vcmp.gt.s32.totalorder %v3992, 0
        %v3994 = vsel %vm3993, %v3992, 0
        %v3995 = vshrl.u32 %v3994, 5
        %v3996 = vand.u32 %v3994, 31
        %v3997 = vsub.s32 32, %v3996
        %v3998 = vshrl.u32 683565275, %v3997
        %v3999 = vshll.u32 683565275, %v3996
        %v4000 = vshrl.u32 2475754826, %v3997
        %v4001 = vor.u32 %v3999, %v4000
        %v4002 = vshll.u32 2475754826, %v3996
        %v4003 = vshrl.u32 2131351028, %v3997
        %v4004 = vor.u32 %v4002, %v4003
        %v4005 = vshll.u32 2131351028, %v3996
        %v4006 = vshrl.u32 2102212464, %v3997
        %v4007 = vor.u32 %v4005, %v4006
        %v4008 = vshll.u32 2102212464, %v3996
        %v4009 = vshrl.u32 920167782, %v3997
        %v4010 = vor.u32 %v4008, %v4009
        %v4011 = vshll.u32 920167782, %v3996
        %v4012 = vshrl.u32 1326507024, %v3997
        %v4013 = vor.u32 %v4011, %v4012
        %vm4014 = vcmp.lt.s32.totalorder %v3995, 1
        %vm4015 = vcmp.lt.s32.totalorder %v3995, 2
        %vm4016 = vcmp.lt.s32.totalorder %v3995, 3
        %vm4017 = vcmp.lt.s32.totalorder %v3995, 4
        %v4018 = vsel %vm4014, %v3998, %v4001
        %v4019 = vsel %vm4017, %v4007, 2102212464
        %v4020 = vsel %vm4016, %v4004, %v4019
        %v4021 = vsel %vm4015, %v4018, %v4020
        %v4022 = vsel %vm4014, %v4001, %v4004
        %v4023 = vsel %vm4017, %v4010, 920167782
        %v4024 = vsel %vm4016, %v4007, %v4023
        %v4025 = vsel %vm4015, %v4022, %v4024
        %v4026 = vsel %vm4014, %v4004, %v4007
        %v4027 = vsel %vm4017, %v4013, 1326507024
        %v4028 = vsel %vm4016, %v4010, %v4027
        %v4029 = vsel %vm4015, %v4026, %v4028
        %v4030 = vshll.u32 %v3990, 8
        %v4031 = vmul.u32.u64.compose %v4030, %v4029
        %v4032 = vextract.low.u32 %v4031
        %v4033 = vextract.high.u32 %v4031
        %v4034 = vmul.u32.u64.compose %v4030, %v4025
        %v4035 = vextract.low.u32 %v4034
        %v4036 = vextract.high.u32 %v4034
        %v4037 = vmul.u32 %v4030, %v4021
        %v4038 = vadd.s32 %v4033, %v4035
        %vm4039 = vc.u32 %v4033, %v4035
        %v4040 = vadd.s32 %v4036, 1
        %v4041 = vsel %vm4039, %v4040, %v4036
        %v4042 = vadd.s32 %v4037, %v4041
        %v4043 = vadd.s32 %v4042, 536870912
        %v4044 = vshrl.u32 %v4043, 30
        %v4045 = vshll.u32 %v4044, 30
        %v4046 = vsub.s32 %v4042, %v4045
        %vm4047 = vcmp.lt.s32.totalorder %v4046, 0
        %v4048 = vsub.s32 0, %v4046
        %v4049 = vsel %vm4047, %v4048, %v4046
        %v4050 = vclz %v4049
        %v4051 = vsub.s32 %v4050, 2
        %vm4052 = vcmp.gt.s32.totalorder 0, %v4051
        %v4053 = vsel %vm4052, 0, %v4051
        %v4054 = vsub.s32 32, %v4053
        %v4055 = vshll.u32 %v4046, %v4053
        %v4056 = vshrl.u32 %v4038, %v4054
        %v4057 = vor.u32 %v4055, %v4056
        %v4058 = vsub.s32 4294967266, %v4053
        %v4059 = vadd.s32 %v4058, 127
        %v4060 = vshll.u32 %v4059, 23
        %v4061 = vor.u32 4788187, %v4060
        %v4062 = vand.u32 2147483647, %v4061
        %v4064 = vcvt.s32.f32 %v4057
        %v4065 = vmul.f32 %v4064, %v4062
        %v4066 = vxor.u32 %v4065, 2147483648
        %v4067 = vsel %vm3984, %v4066, %v4065
        %v4068 = vsub.s32 4, %v4044
        %v4069 = vsel %vm3984, %v4068, %v4044
        %v4070 = vsel %vm3983, %v271, %v4067
        %v4071 = vsel %vm3983, 0, %v4069
        %v4072 = vcosq.f32.pop %v4070
        %v4073 = vsinq.f32.pop %v4070
        %vm4074 = vweird.f32 %v271
        %v4075 = vand.u32 %v4071, 3
        %vm4076 = vcmp.lt.s32.totalorder %v4075, 2
        %vm4077 = vcmp.eq.s32.totalorder %v4075, 0
        %v4078 = vxor.u32 %v4073, 2147483648
        %v4079 = vsel %vm4077, %v4072, %v4078
        %vm4080 = vcmp.eq.s32.totalorder %v4075, 2
        %v4081 = vxor.u32 %v4072, 2147483648
        %v4082 = vsel %vm4080, %v4081, %v4073
        %v4083 = vsel %vm4076, %v4079, %v4082
        %v4084 = vsel %vm4074, nan, %v4083
        %v4085 = vand.u32 2147483647, %v272
        %vm4086 = vcmp.le.f32.partialorder %v4085, 0.7853982
        %vm4087 = vcmp.lt.s32.totalorder %v272, 0
        %v4088 = vand.u32 %v272, 2139095040
        %v4089 = vshrl.u32 %v4088, 23
        %v4090 = vsub.s32 %v4089, 127
        %v4091 = vand.u32 2147483647, %v272
        %v4092 = vand.u32 %v4091, 8388607
        %v4093 = vor.u32 %v4092, 8388608
        %v4094 = vsub.s32 0, %v4093
        %v4095 = vadd.s32 %v4090, 1
        %vm4096 = vcmp.gt.s32.totalorder %v4095, 0
        %v4097 = vsel %vm4096, %v4095, 0
        %v4098 = vshrl.u32 %v4097, 5
        %v4099 = vand.u32 %v4097, 31
        %v4100 = vsub.s32 32, %v4099
        %v4101 = vshrl.u32 683565275, %v4100
        %v4102 = vshll.u32 683565275, %v4099
        %v4103 = vshrl.u32 2475754826, %v4100
        %v4104 = vor.u32 %v4102, %v4103
        %v4105 = vshll.u32 2475754826, %v4099
        %v4106 = vshrl.u32 2131351028, %v4100
        %v4107 = vor.u32 %v4105, %v4106
        %v4108 = vshll.u32 2131351028, %v4099
        %v4109 = vshrl.u32 2102212464, %v4100
        %v4110 = vor.u32 %v4108, %v4109
        %v4111 = vshll.u32 2102212464, %v4099
        %v4112 = vshrl.u32 920167782, %v4100
        %v4113 = vor.u32 %v4111, %v4112
        %v4114 = vshll.u32 920167782, %v4099
        %v4115 = vshrl.u32 1326507024, %v4100
        %v4116 = vor.u32 %v4114, %v4115
        %vm4117 = vcmp.lt.s32.totalorder %v4098, 1
        %vm4118 = vcmp.lt.s32.totalorder %v4098, 2
        %vm4119 = vcmp.lt.s32.totalorder %v4098, 3
        %vm4120 = vcmp.lt.s32.totalorder %v4098, 4
        %v4121 = vsel %vm4117, %v4101, %v4104
        %v4122 = vsel %vm4120, %v4110, 2102212464
        %v4123 = vsel %vm4119, %v4107, %v4122
        %v4124 = vsel %vm4118, %v4121, %v4123
        %v4125 = vsel %vm4117, %v4104, %v4107
        %v4126 = vsel %vm4120, %v4113, 920167782
        %v4127 = vsel %vm4119, %v4110, %v4126
        %v4128 = vsel %vm4118, %v4125, %v4127
        %v4129 = vsel %vm4117, %v4107, %v4110
        %v4130 = vsel %vm4120, %v4116, 1326507024
        %v4131 = vsel %vm4119, %v4113, %v4130
        %v4132 = vsel %vm4118, %v4129, %v4131
        %v4133 = vshll.u32 %v4093, 8
        %v4134 = vmul.u32.u64.compose %v4133, %v4132
        %v4135 = vextract.low.u32 %v4134
        %v4136 = vextract.high.u32 %v4134
        %v4137 = vmul.u32.u64.compose %v4133, %v4128
        %v4138 = vextract.low.u32 %v4137
        %v4139 = vextract.high.u32 %v4137
        %v4140 = vmul.u32 %v4133, %v4124
        %v4141 = vadd.s32 %v4136, %v4138
        %vm4142 = vc.u32 %v4136, %v4138
        %v4143 = vadd.s32 %v4139, 1
        %v4144 = vsel %vm4142, %v4143, %v4139
        %v4145 = vadd.s32 %v4140, %v4144
        %v4146 = vadd.s32 %v4145, 536870912
        %v4147 = vshrl.u32 %v4146, 30
        %v4148 = vshll.u32 %v4147, 30
        %v4149 = vsub.s32 %v4145, %v4148
        %vm4150 = vcmp.lt.s32.totalorder %v4149, 0
        %v4151 = vsub.s32 0, %v4149
        %v4152 = vsel %vm4150, %v4151, %v4149
        %v4153 = vclz %v4152
        %v4154 = vsub.s32 %v4153, 2
        %vm4155 = vcmp.gt.s32.totalorder 0, %v4154
        %v4156 = vsel %vm4155, 0, %v4154
        %v4157 = vsub.s32 32, %v4156
        %v4158 = vshll.u32 %v4149, %v4156
        %v4159 = vshrl.u32 %v4141, %v4157
        %v4160 = vor.u32 %v4158, %v4159
        %v4161 = vsub.s32 4294967266, %v4156
        %v4162 = vadd.s32 %v4161, 127
        %v4163 = vshll.u32 %v4162, 23
        %v4164 = vor.u32 4788187, %v4163
        %v4165 = vand.u32 2147483647, %v4164
        %v4167 = vcvt.s32.f32 %v4160
        %v4168 = vmul.f32 %v4167, %v4165
        %v4169 = vxor.u32 %v4168, 2147483648
        %v4170 = vsel %vm4087, %v4169, %v4168
        %v4171 = vsub.s32 4, %v4147
        %v4172 = vsel %vm4087, %v4171, %v4147
        %v4173 = vsel %vm4086, %v272, %v4170
        %v4174 = vsel %vm4086, 0, %v4172
        %v4175 = vcosq.f32.pop %v4173
        %v4176 = vsinq.f32.pop %v4173
        %vm4177 = vweird.f32 %v272
        %v4178 = vand.u32 %v4174, 3
        %vm4179 = vcmp.lt.s32.totalorder %v4178, 2
        %vm4180 = vcmp.eq.s32.totalorder %v4178, 0
        %v4181 = vxor.u32 %v4176, 2147483648
        %v4182 = vsel %vm4180, %v4175, %v4181
        %vm4183 = vcmp.eq.s32.totalorder %v4178, 2
        %v4184 = vxor.u32 %v4175, 2147483648
        %v4185 = vsel %vm4183, %v4184, %v4176
        %v4186 = vsel %vm4179, %v4182, %v4185
        %v4187 = vsel %vm4177, nan, %v4186
        %v4188 = vand.u32 2147483647, %v273
        %vm4189 = vcmp.le.f32.partialorder %v4188, 0.7853982
        %vm4190 = vcmp.lt.s32.totalorder %v273, 0
        %v4191 = vand.u32 %v273, 2139095040
        %v4192 = vshrl.u32 %v4191, 23
        %v4193 = vsub.s32 %v4192, 127
        %v4194 = vand.u32 2147483647, %v273
        %v4195 = vand.u32 %v4194, 8388607
        %v4196 = vor.u32 %v4195, 8388608
        %v4197 = vsub.s32 0, %v4196
        %v4198 = vadd.s32 %v4193, 1
        %vm4199 = vcmp.gt.s32.totalorder %v4198, 0
        %v4200 = vsel %vm4199, %v4198, 0
        %v4201 = vshrl.u32 %v4200, 5
        %v4202 = vand.u32 %v4200, 31
        %v4203 = vsub.s32 32, %v4202
        %v4204 = vshrl.u32 683565275, %v4203
        %v4205 = vshll.u32 683565275, %v4202
        %v4206 = vshrl.u32 2475754826, %v4203
        %v4207 = vor.u32 %v4205, %v4206
        %v4208 = vshll.u32 2475754826, %v4202
        %v4209 = vshrl.u32 2131351028, %v4203
        %v4210 = vor.u32 %v4208, %v4209
        %v4211 = vshll.u32 2131351028, %v4202
        %v4212 = vshrl.u32 2102212464, %v4203
        %v4213 = vor.u32 %v4211, %v4212
        %v4214 = vshll.u32 2102212464, %v4202
        %v4215 = vshrl.u32 920167782, %v4203
        %v4216 = vor.u32 %v4214, %v4215
        %v4217 = vshll.u32 920167782, %v4202
        %v4218 = vshrl.u32 1326507024, %v4203
        %v4219 = vor.u32 %v4217, %v4218
        %vm4220 = vcmp.lt.s32.totalorder %v4201, 1
        %vm4221 = vcmp.lt.s32.totalorder %v4201, 2
        %vm4222 = vcmp.lt.s32.totalorder %v4201, 3
        %vm4223 = vcmp.lt.s32.totalorder %v4201, 4
        %v4224 = vsel %vm4220, %v4204, %v4207
        %v4225 = vsel %vm4223, %v4213, 2102212464
        %v4226 = vsel %vm4222, %v4210, %v4225
        %v4227 = vsel %vm4221, %v4224, %v4226
        %v4228 = vsel %vm4220, %v4207, %v4210
        %v4229 = vsel %vm4223, %v4216, 920167782
        %v4230 = vsel %vm4222, %v4213, %v4229
        %v4231 = vsel %vm4221, %v4228, %v4230
        %v4232 = vsel %vm4220, %v4210, %v4213
        %v4233 = vsel %vm4223, %v4219, 1326507024
        %v4234 = vsel %vm4222, %v4216, %v4233
        %v4235 = vsel %vm4221, %v4232, %v4234
        %v4236 = vshll.u32 %v4196, 8
        %v4237 = vmul.u32.u64.compose %v4236, %v4235
        %v4238 = vextract.low.u32 %v4237
        %v4239 = vextract.high.u32 %v4237
        %v4240 = vmul.u32.u64.compose %v4236, %v4231
        %v4241 = vextract.low.u32 %v4240
        %v4242 = vextract.high.u32 %v4240
        %v4243 = vmul.u32 %v4236, %v4227
        %v4244 = vadd.s32 %v4239, %v4241
        %vm4245 = vc.u32 %v4239, %v4241
        %v4246 = vadd.s32 %v4242, 1
        %v4247 = vsel %vm4245, %v4246, %v4242
        %v4248 = vadd.s32 %v4243, %v4247
        %v4249 = vadd.s32 %v4248, 536870912
        %v4250 = vshrl.u32 %v4249, 30
        %v4251 = vshll.u32 %v4250, 30
        %v4252 = vsub.s32 %v4248, %v4251
        %vm4253 = vcmp.lt.s32.totalorder %v4252, 0
        %v4254 = vsub.s32 0, %v4252
        %v4255 = vsel %vm4253, %v4254, %v4252
        %v4256 = vclz %v4255
        %v4257 = vsub.s32 %v4256, 2
        %vm4258 = vcmp.gt.s32.totalorder 0, %v4257
        %v4259 = vsel %vm4258, 0, %v4257
        %v4260 = vsub.s32 32, %v4259
        %v4261 = vshll.u32 %v4252, %v4259
        %v4262 = vshrl.u32 %v4244, %v4260
        %v4263 = vor.u32 %v4261, %v4262
        %v4264 = vsub.s32 4294967266, %v4259
        %v4265 = vadd.s32 %v4264, 127
        %v4266 = vshll.u32 %v4265, 23
        %v4267 = vor.u32 4788187, %v4266
        %v4268 = vand.u32 2147483647, %v4267
        %v4270 = vcvt.s32.f32 %v4263
        %v4271 = vmul.f32 %v4270, %v4268
        %v4272 = vxor.u32 %v4271, 2147483648
        %v4273 = vsel %vm4190, %v4272, %v4271
        %v4274 = vsub.s32 4, %v4250
        %v4275 = vsel %vm4190, %v4274, %v4250
        %v4276 = vsel %vm4189, %v273, %v4273
        %v4277 = vsel %vm4189, 0, %v4275
        %v4278 = vcosq.f32.pop %v4276
        %v4279 = vsinq.f32.pop %v4276
        %vm4280 = vweird.f32 %v273
        %v4281 = vand.u32 %v4277, 3
        %vm4282 = vcmp.lt.s32.totalorder %v4281, 2
        %vm4283 = vcmp.eq.s32.totalorder %v4281, 0
        %v4284 = vxor.u32 %v4279, 2147483648
        %v4285 = vsel %vm4283, %v4278, %v4284
        %vm4286 = vcmp.eq.s32.totalorder %v4281, 2
        %v4287 = vxor.u32 %v4278, 2147483648
        %v4288 = vsel %vm4286, %v4287, %v4279
        %v4289 = vsel %vm4282, %v4285, %v4288
        %v4290 = vsel %vm4280, nan, %v4289
        %v4291 = vand.u32 2147483647, %v274
        %vm4292 = vcmp.le.f32.partialorder %v4291, 0.7853982
        %vm4293 = vcmp.lt.s32.totalorder %v274, 0
        %v4294 = vand.u32 %v274, 2139095040
        %v4295 = vshrl.u32 %v4294, 23
        %v4296 = vsub.s32 %v4295, 127
        %v4297 = vand.u32 2147483647, %v274
        %v4298 = vand.u32 %v4297, 8388607
        %v4299 = vor.u32 %v4298, 8388608
        %v4300 = vsub.s32 0, %v4299
        %v4301 = vadd.s32 %v4296, 1
        %vm4302 = vcmp.gt.s32.totalorder %v4301, 0
        %v4303 = vsel %vm4302, %v4301, 0
        %v4304 = vshrl.u32 %v4303, 5
        %v4305 = vand.u32 %v4303, 31
        %v4306 = vsub.s32 32, %v4305
        %v4307 = vshrl.u32 683565275, %v4306
        %v4308 = vshll.u32 683565275, %v4305
        %v4309 = vshrl.u32 2475754826, %v4306
        %v4310 = vor.u32 %v4308, %v4309
        %v4311 = vshll.u32 2475754826, %v4305
        %v4312 = vshrl.u32 2131351028, %v4306
        %v4313 = vor.u32 %v4311, %v4312
        %v4314 = vshll.u32 2131351028, %v4305
        %v4315 = vshrl.u32 2102212464, %v4306
        %v4316 = vor.u32 %v4314, %v4315
        %v4317 = vshll.u32 2102212464, %v4305
        %v4318 = vshrl.u32 920167782, %v4306
        %v4319 = vor.u32 %v4317, %v4318
        %v4320 = vshll.u32 920167782, %v4305
        %v4321 = vshrl.u32 1326507024, %v4306
        %v4322 = vor.u32 %v4320, %v4321
        %vm4323 = vcmp.lt.s32.totalorder %v4304, 1
        %vm4324 = vcmp.lt.s32.totalorder %v4304, 2
        %vm4325 = vcmp.lt.s32.totalorder %v4304, 3
        %vm4326 = vcmp.lt.s32.totalorder %v4304, 4
        %v4327 = vsel %vm4323, %v4307, %v4310
        %v4328 = vsel %vm4326, %v4316, 2102212464
        %v4329 = vsel %vm4325, %v4313, %v4328
        %v4330 = vsel %vm4324, %v4327, %v4329
        %v4331 = vsel %vm4323, %v4310, %v4313
        %v4332 = vsel %vm4326, %v4319, 920167782
        %v4333 = vsel %vm4325, %v4316, %v4332
        %v4334 = vsel %vm4324, %v4331, %v4333
        %v4335 = vsel %vm4323, %v4313, %v4316
        %v4336 = vsel %vm4326, %v4322, 1326507024
        %v4337 = vsel %vm4325, %v4319, %v4336
        %v4338 = vsel %vm4324, %v4335, %v4337
        %v4339 = vshll.u32 %v4299, 8
        %v4340 = vmul.u32.u64.compose %v4339, %v4338
        %v4341 = vextract.low.u32 %v4340
        %v4342 = vextract.high.u32 %v4340
        %v4343 = vmul.u32.u64.compose %v4339, %v4334
        %v4344 = vextract.low.u32 %v4343
        %v4345 = vextract.high.u32 %v4343
        %v4346 = vmul.u32 %v4339, %v4330
        %v4347 = vadd.s32 %v4342, %v4344
        %vm4348 = vc.u32 %v4342, %v4344
        %v4349 = vadd.s32 %v4345, 1
        %v4350 = vsel %vm4348, %v4349, %v4345
        %v4351 = vadd.s32 %v4346, %v4350
        %v4352 = vadd.s32 %v4351, 536870912
        %v4353 = vshrl.u32 %v4352, 30
        %v4354 = vshll.u32 %v4353, 30
        %v4355 = vsub.s32 %v4351, %v4354
        %vm4356 = vcmp.lt.s32.totalorder %v4355, 0
        %v4357 = vsub.s32 0, %v4355
        %v4358 = vsel %vm4356, %v4357, %v4355
        %v4359 = vclz %v4358
        %v4360 = vsub.s32 %v4359, 2
        %vm4361 = vcmp.gt.s32.totalorder 0, %v4360
        %v4362 = vsel %vm4361, 0, %v4360
        %v4363 = vsub.s32 32, %v4362
        %v4364 = vshll.u32 %v4355, %v4362
        %v4365 = vshrl.u32 %v4347, %v4363
        %v4366 = vor.u32 %v4364, %v4365
        %v4367 = vsub.s32 4294967266, %v4362
        %v4368 = vadd.s32 %v4367, 127
        %v4369 = vshll.u32 %v4368, 23
        %v4370 = vor.u32 4788187, %v4369
        %v4371 = vand.u32 2147483647, %v4370
        %v4373 = vcvt.s32.f32 %v4366
        %v4374 = vmul.f32 %v4373, %v4371
        %v4375 = vxor.u32 %v4374, 2147483648
        %v4376 = vsel %vm4293, %v4375, %v4374
        %v4377 = vsub.s32 4, %v4353
        %v4378 = vsel %vm4293, %v4377, %v4353
        %v4379 = vsel %vm4292, %v274, %v4376
        %v4380 = vsel %vm4292, 0, %v4378
        %v4381 = vcosq.f32.pop %v4379
        %v4382 = vsinq.f32.pop %v4379
        %vm4383 = vweird.f32 %v274
        %v4384 = vand.u32 %v4380, 3
        %vm4385 = vcmp.lt.s32.totalorder %v4384, 2
        %vm4386 = vcmp.eq.s32.totalorder %v4384, 0
        %v4387 = vxor.u32 %v4382, 2147483648
        %v4388 = vsel %vm4386, %v4381, %v4387
        %vm4389 = vcmp.eq.s32.totalorder %v4384, 2
        %v4390 = vxor.u32 %v4381, 2147483648
        %v4391 = vsel %vm4389, %v4390, %v4382
        %v4392 = vsel %vm4385, %v4388, %v4391
        %v4393 = vsel %vm4383, nan, %v4392
        %v4394 = vand.u32 2147483647, %v275
        %vm4395 = vcmp.le.f32.partialorder %v4394, 0.7853982
        %vm4396 = vcmp.lt.s32.totalorder %v275, 0
        %v4397 = vand.u32 %v275, 2139095040
        %v4398 = vshrl.u32 %v4397, 23
        %v4399 = vsub.s32 %v4398, 127
        %v4400 = vand.u32 2147483647, %v275
        %v4401 = vand.u32 %v4400, 8388607
        %v4402 = vor.u32 %v4401, 8388608
        %v4403 = vsub.s32 0, %v4402
        %v4404 = vadd.s32 %v4399, 1
        %vm4405 = vcmp.gt.s32.totalorder %v4404, 0
        %v4406 = vsel %vm4405, %v4404, 0
        %v4407 = vshrl.u32 %v4406, 5
        %v4408 = vand.u32 %v4406, 31
        %v4409 = vsub.s32 32, %v4408
        %v4410 = vshrl.u32 683565275, %v4409
        %v4411 = vshll.u32 683565275, %v4408
        %v4412 = vshrl.u32 2475754826, %v4409
        %v4413 = vor.u32 %v4411, %v4412
        %v4414 = vshll.u32 2475754826, %v4408
        %v4415 = vshrl.u32 2131351028, %v4409
        %v4416 = vor.u32 %v4414, %v4415
        %v4417 = vshll.u32 2131351028, %v4408
        %v4418 = vshrl.u32 2102212464, %v4409
        %v4419 = vor.u32 %v4417, %v4418
        %v4420 = vshll.u32 2102212464, %v4408
        %v4421 = vshrl.u32 920167782, %v4409
        %v4422 = vor.u32 %v4420, %v4421
        %v4423 = vshll.u32 920167782, %v4408
        %v4424 = vshrl.u32 1326507024, %v4409
        %v4425 = vor.u32 %v4423, %v4424
        %vm4426 = vcmp.lt.s32.totalorder %v4407, 1
        %vm4427 = vcmp.lt.s32.totalorder %v4407, 2
        %vm4428 = vcmp.lt.s32.totalorder %v4407, 3
        %vm4429 = vcmp.lt.s32.totalorder %v4407, 4
        %v4430 = vsel %vm4426, %v4410, %v4413
        %v4431 = vsel %vm4429, %v4419, 2102212464
        %v4432 = vsel %vm4428, %v4416, %v4431
        %v4433 = vsel %vm4427, %v4430, %v4432
        %v4434 = vsel %vm4426, %v4413, %v4416
        %v4435 = vsel %vm4429, %v4422, 920167782
        %v4436 = vsel %vm4428, %v4419, %v4435
        %v4437 = vsel %vm4427, %v4434, %v4436
        %v4438 = vsel %vm4426, %v4416, %v4419
        %v4439 = vsel %vm4429, %v4425, 1326507024
        %v4440 = vsel %vm4428, %v4422, %v4439
        %v4441 = vsel %vm4427, %v4438, %v4440
        %v4442 = vshll.u32 %v4402, 8
        %v4443 = vmul.u32.u64.compose %v4442, %v4441
        %v4444 = vextract.low.u32 %v4443
        %v4445 = vextract.high.u32 %v4443
        %v4446 = vmul.u32.u64.compose %v4442, %v4437
        %v4447 = vextract.low.u32 %v4446
        %v4448 = vextract.high.u32 %v4446
        %v4449 = vmul.u32 %v4442, %v4433
        %v4450 = vadd.s32 %v4445, %v4447
        %vm4451 = vc.u32 %v4445, %v4447
        %v4452 = vadd.s32 %v4448, 1
        %v4453 = vsel %vm4451, %v4452, %v4448
        %v4454 = vadd.s32 %v4449, %v4453
        %v4455 = vadd.s32 %v4454, 536870912
        %v4456 = vshrl.u32 %v4455, 30
        %v4457 = vshll.u32 %v4456, 30
        %v4458 = vsub.s32 %v4454, %v4457
        %vm4459 = vcmp.lt.s32.totalorder %v4458, 0
        %v4460 = vsub.s32 0, %v4458
        %v4461 = vsel %vm4459, %v4460, %v4458
        %v4462 = vclz %v4461
        %v4463 = vsub.s32 %v4462, 2
        %vm4464 = vcmp.gt.s32.totalorder 0, %v4463
        %v4465 = vsel %vm4464, 0, %v4463
        %v4466 = vsub.s32 32, %v4465
        %v4467 = vshll.u32 %v4458, %v4465
        %v4468 = vshrl.u32 %v4450, %v4466
        %v4469 = vor.u32 %v4467, %v4468
        %v4470 = vsub.s32 4294967266, %v4465
        %v4471 = vadd.s32 %v4470, 127
        %v4472 = vshll.u32 %v4471, 23
        %v4473 = vor.u32 4788187, %v4472
        %v4474 = vand.u32 2147483647, %v4473
        %v4476 = vcvt.s32.f32 %v4469
        %v4477 = vmul.f32 %v4476, %v4474
        %v4478 = vxor.u32 %v4477, 2147483648
        %v4479 = vsel %vm4396, %v4478, %v4477
        %v4480 = vsub.s32 4, %v4456
        %v4481 = vsel %vm4396, %v4480, %v4456
        %v4482 = vsel %vm4395, %v275, %v4479
        %v4483 = vsel %vm4395, 0, %v4481
        %v4484 = vcosq.f32.pop %v4482
        %v4485 = vsinq.f32.pop %v4482
        %vm4486 = vweird.f32 %v275
        %v4487 = vand.u32 %v4483, 3
        %vm4488 = vcmp.lt.s32.totalorder %v4487, 2
        %vm4489 = vcmp.eq.s32.totalorder %v4487, 0
        %v4490 = vxor.u32 %v4485, 2147483648
        %v4491 = vsel %vm4489, %v4484, %v4490
        %vm4492 = vcmp.eq.s32.totalorder %v4487, 2
        %v4493 = vxor.u32 %v4484, 2147483648
        %v4494 = vsel %vm4492, %v4493, %v4485
        %v4495 = vsel %vm4488, %v4491, %v4494
        %v4496 = vsel %vm4486, nan, %v4495
        %v4497 = vand.u32 2147483647, %v276
        %vm4498 = vcmp.le.f32.partialorder %v4497, 0.7853982
        %vm4499 = vcmp.lt.s32.totalorder %v276, 0
        %v4500 = vand.u32 %v276, 2139095040
        %v4501 = vshrl.u32 %v4500, 23
        %v4502 = vsub.s32 %v4501, 127
        %v4503 = vand.u32 2147483647, %v276
        %v4504 = vand.u32 %v4503, 8388607
        %v4505 = vor.u32 %v4504, 8388608
        %v4506 = vsub.s32 0, %v4505
        %v4507 = vadd.s32 %v4502, 1
        %vm4508 = vcmp.gt.s32.totalorder %v4507, 0
        %v4509 = vsel %vm4508, %v4507, 0
        %v4510 = vshrl.u32 %v4509, 5
        %v4511 = vand.u32 %v4509, 31
        %v4512 = vsub.s32 32, %v4511
        %v4513 = vshrl.u32 683565275, %v4512
        %v4514 = vshll.u32 683565275, %v4511
        %v4515 = vshrl.u32 2475754826, %v4512
        %v4516 = vor.u32 %v4514, %v4515
        %v4517 = vshll.u32 2475754826, %v4511
        %v4518 = vshrl.u32 2131351028, %v4512
        %v4519 = vor.u32 %v4517, %v4518
        %v4520 = vshll.u32 2131351028, %v4511
        %v4521 = vshrl.u32 2102212464, %v4512
        %v4522 = vor.u32 %v4520, %v4521
        %v4523 = vshll.u32 2102212464, %v4511
        %v4524 = vshrl.u32 920167782, %v4512
        %v4525 = vor.u32 %v4523, %v4524
        %v4526 = vshll.u32 920167782, %v4511
        %v4527 = vshrl.u32 1326507024, %v4512
        %v4528 = vor.u32 %v4526, %v4527
        %vm4529 = vcmp.lt.s32.totalorder %v4510, 1
        %vm4530 = vcmp.lt.s32.totalorder %v4510, 2
        %vm4531 = vcmp.lt.s32.totalorder %v4510, 3
        %vm4532 = vcmp.lt.s32.totalorder %v4510, 4
        %v4533 = vsel %vm4529, %v4513, %v4516
        %v4534 = vsel %vm4532, %v4522, 2102212464
        %v4535 = vsel %vm4531, %v4519, %v4534
        %v4536 = vsel %vm4530, %v4533, %v4535
        %v4537 = vsel %vm4529, %v4516, %v4519
        %v4538 = vsel %vm4532, %v4525, 920167782
        %v4539 = vsel %vm4531, %v4522, %v4538
        %v4540 = vsel %vm4530, %v4537, %v4539
        %v4541 = vsel %vm4529, %v4519, %v4522
        %v4542 = vsel %vm4532, %v4528, 1326507024
        %v4543 = vsel %vm4531, %v4525, %v4542
        %v4544 = vsel %vm4530, %v4541, %v4543
        %v4545 = vshll.u32 %v4505, 8
        %v4546 = vmul.u32.u64.compose %v4545, %v4544
        %v4547 = vextract.low.u32 %v4546
        %v4548 = vextract.high.u32 %v4546
        %v4549 = vmul.u32.u64.compose %v4545, %v4540
        %v4550 = vextract.low.u32 %v4549
        %v4551 = vextract.high.u32 %v4549
        %v4552 = vmul.u32 %v4545, %v4536
        %v4553 = vadd.s32 %v4548, %v4550
        %vm4554 = vc.u32 %v4548, %v4550
        %v4555 = vadd.s32 %v4551, 1
        %v4556 = vsel %vm4554, %v4555, %v4551
        %v4557 = vadd.s32 %v4552, %v4556
        %v4558 = vadd.s32 %v4557, 536870912
        %v4559 = vshrl.u32 %v4558, 30
        %v4560 = vshll.u32 %v4559, 30
        %v4561 = vsub.s32 %v4557, %v4560
        %vm4562 = vcmp.lt.s32.totalorder %v4561, 0
        %v4563 = vsub.s32 0, %v4561
        %v4564 = vsel %vm4562, %v4563, %v4561
        %v4565 = vclz %v4564
        %v4566 = vsub.s32 %v4565, 2
        %vm4567 = vcmp.gt.s32.totalorder 0, %v4566
        %v4568 = vsel %vm4567, 0, %v4566
        %v4569 = vsub.s32 32, %v4568
        %v4570 = vshll.u32 %v4561, %v4568
        %v4571 = vshrl.u32 %v4553, %v4569
        %v4572 = vor.u32 %v4570, %v4571
        %v4573 = vsub.s32 4294967266, %v4568
        %v4574 = vadd.s32 %v4573, 127
        %v4575 = vshll.u32 %v4574, 23
        %v4576 = vor.u32 4788187, %v4575
        %v4577 = vand.u32 2147483647, %v4576
        %v4579 = vcvt.s32.f32 %v4572
        %v4580 = vmul.f32 %v4579, %v4577
        %v4581 = vxor.u32 %v4580, 2147483648
        %v4582 = vsel %vm4499, %v4581, %v4580
        %v4583 = vsub.s32 4, %v4559
        %v4584 = vsel %vm4499, %v4583, %v4559
        %v4585 = vsel %vm4498, %v276, %v4582
        %v4586 = vsel %vm4498, 0, %v4584
        %v4587 = vcosq.f32.pop %v4585
        %v4588 = vsinq.f32.pop %v4585
        %vm4589 = vweird.f32 %v276
        %v4590 = vand.u32 %v4586, 3
        %vm4591 = vcmp.lt.s32.totalorder %v4590, 2
        %vm4592 = vcmp.eq.s32.totalorder %v4590, 0
        %v4593 = vxor.u32 %v4588, 2147483648
        %v4594 = vsel %vm4592, %v4587, %v4593
        %vm4595 = vcmp.eq.s32.totalorder %v4590, 2
        %v4596 = vxor.u32 %v4587, 2147483648
        %v4597 = vsel %vm4595, %v4596, %v4588
        %v4598 = vsel %vm4591, %v4594, %v4597
        %v4599 = vsel %vm4589, nan, %v4598
        %v4600 = vand.u32 2147483647, %v277
        %vm4601 = vcmp.le.f32.partialorder %v4600, 0.7853982
        %vm4602 = vcmp.lt.s32.totalorder %v277, 0
        %v4603 = vand.u32 %v277, 2139095040
        %v4604 = vshrl.u32 %v4603, 23
        %v4605 = vsub.s32 %v4604, 127
        %v4606 = vand.u32 2147483647, %v277
        %v4607 = vand.u32 %v4606, 8388607
        %v4608 = vor.u32 %v4607, 8388608
        %v4609 = vsub.s32 0, %v4608
        %v4610 = vadd.s32 %v4605, 1
        %vm4611 = vcmp.gt.s32.totalorder %v4610, 0
        %v4612 = vsel %vm4611, %v4610, 0
        %v4613 = vshrl.u32 %v4612, 5
        %v4614 = vand.u32 %v4612, 31
        %v4615 = vsub.s32 32, %v4614
        %v4616 = vshrl.u32 683565275, %v4615
        %v4617 = vshll.u32 683565275, %v4614
        %v4618 = vshrl.u32 2475754826, %v4615
        %v4619 = vor.u32 %v4617, %v4618
        %v4620 = vshll.u32 2475754826, %v4614
        %v4621 = vshrl.u32 2131351028, %v4615
        %v4622 = vor.u32 %v4620, %v4621
        %v4623 = vshll.u32 2131351028, %v4614
        %v4624 = vshrl.u32 2102212464, %v4615
        %v4625 = vor.u32 %v4623, %v4624
        %v4626 = vshll.u32 2102212464, %v4614
        %v4627 = vshrl.u32 920167782, %v4615
        %v4628 = vor.u32 %v4626, %v4627
        %v4629 = vshll.u32 920167782, %v4614
        %v4630 = vshrl.u32 1326507024, %v4615
        %v4631 = vor.u32 %v4629, %v4630
        %vm4632 = vcmp.lt.s32.totalorder %v4613, 1
        %vm4633 = vcmp.lt.s32.totalorder %v4613, 2
        %vm4634 = vcmp.lt.s32.totalorder %v4613, 3
        %vm4635 = vcmp.lt.s32.totalorder %v4613, 4
        %v4636 = vsel %vm4632, %v4616, %v4619
        %v4637 = vsel %vm4635, %v4625, 2102212464
        %v4638 = vsel %vm4634, %v4622, %v4637
        %v4639 = vsel %vm4633, %v4636, %v4638
        %v4640 = vsel %vm4632, %v4619, %v4622
        %v4641 = vsel %vm4635, %v4628, 920167782
        %v4642 = vsel %vm4634, %v4625, %v4641
        %v4643 = vsel %vm4633, %v4640, %v4642
        %v4644 = vsel %vm4632, %v4622, %v4625
        %v4645 = vsel %vm4635, %v4631, 1326507024
        %v4646 = vsel %vm4634, %v4628, %v4645
        %v4647 = vsel %vm4633, %v4644, %v4646
        %v4648 = vshll.u32 %v4608, 8
        %v4649 = vmul.u32.u64.compose %v4648, %v4647
        %v4650 = vextract.low.u32 %v4649
        %v4651 = vextract.high.u32 %v4649
        %v4652 = vmul.u32.u64.compose %v4648, %v4643
        %v4653 = vextract.low.u32 %v4652
        %v4654 = vextract.high.u32 %v4652
        %v4655 = vmul.u32 %v4648, %v4639
        %v4656 = vadd.s32 %v4651, %v4653
        %vm4657 = vc.u32 %v4651, %v4653
        %v4658 = vadd.s32 %v4654, 1
        %v4659 = vsel %vm4657, %v4658, %v4654
        %v4660 = vadd.s32 %v4655, %v4659
        %v4661 = vadd.s32 %v4660, 536870912
        %v4662 = vshrl.u32 %v4661, 30
        %v4663 = vshll.u32 %v4662, 30
        %v4664 = vsub.s32 %v4660, %v4663
        %vm4665 = vcmp.lt.s32.totalorder %v4664, 0
        %v4666 = vsub.s32 0, %v4664
        %v4667 = vsel %vm4665, %v4666, %v4664
        %v4668 = vclz %v4667
        %v4669 = vsub.s32 %v4668, 2
        %vm4670 = vcmp.gt.s32.totalorder 0, %v4669
        %v4671 = vsel %vm4670, 0, %v4669
        %v4672 = vsub.s32 32, %v4671
        %v4673 = vshll.u32 %v4664, %v4671
        %v4674 = vshrl.u32 %v4656, %v4672
        %v4675 = vor.u32 %v4673, %v4674
        %v4676 = vsub.s32 4294967266, %v4671
        %v4677 = vadd.s32 %v4676, 127
        %v4678 = vshll.u32 %v4677, 23
        %v4679 = vor.u32 4788187, %v4678
        %v4680 = vand.u32 2147483647, %v4679
        %v4682 = vcvt.s32.f32 %v4675
        %v4683 = vmul.f32 %v4682, %v4680
        %v4684 = vxor.u32 %v4683, 2147483648
        %v4685 = vsel %vm4602, %v4684, %v4683
        %v4686 = vsub.s32 4, %v4662
        %v4687 = vsel %vm4602, %v4686, %v4662
        %v4688 = vsel %vm4601, %v277, %v4685
        %v4689 = vsel %vm4601, 0, %v4687
        %v4690 = vcosq.f32.pop %v4688
        %v4691 = vsinq.f32.pop %v4688
        %vm4692 = vweird.f32 %v277
        %v4693 = vand.u32 %v4689, 3
        %vm4694 = vcmp.lt.s32.totalorder %v4693, 2
        %vm4695 = vcmp.eq.s32.totalorder %v4693, 0
        %v4696 = vxor.u32 %v4691, 2147483648
        %v4697 = vsel %vm4695, %v4690, %v4696
        %vm4698 = vcmp.eq.s32.totalorder %v4693, 2
        %v4699 = vxor.u32 %v4690, 2147483648
        %v4700 = vsel %vm4698, %v4699, %v4691
        %v4701 = vsel %vm4694, %v4697, %v4700
        %v4702 = vsel %vm4692, nan, %v4701
        %v4703 = vand.u32 2147483647, %v278
        %vm4704 = vcmp.le.f32.partialorder %v4703, 0.7853982
        %vm4705 = vcmp.lt.s32.totalorder %v278, 0
        %v4706 = vand.u32 %v278, 2139095040
        %v4707 = vshrl.u32 %v4706, 23
        %v4708 = vsub.s32 %v4707, 127
        %v4709 = vand.u32 2147483647, %v278
        %v4710 = vand.u32 %v4709, 8388607
        %v4711 = vor.u32 %v4710, 8388608
        %v4712 = vsub.s32 0, %v4711
        %v4713 = vadd.s32 %v4708, 1
        %vm4714 = vcmp.gt.s32.totalorder %v4713, 0
        %v4715 = vsel %vm4714, %v4713, 0
        %v4716 = vshrl.u32 %v4715, 5
        %v4717 = vand.u32 %v4715, 31
        %v4718 = vsub.s32 32, %v4717
        %v4719 = vshrl.u32 683565275, %v4718
        %v4720 = vshll.u32 683565275, %v4717
        %v4721 = vshrl.u32 2475754826, %v4718
        %v4722 = vor.u32 %v4720, %v4721
        %v4723 = vshll.u32 2475754826, %v4717
        %v4724 = vshrl.u32 2131351028, %v4718
        %v4725 = vor.u32 %v4723, %v4724
        %v4726 = vshll.u32 2131351028, %v4717
        %v4727 = vshrl.u32 2102212464, %v4718
        %v4728 = vor.u32 %v4726, %v4727
        %v4729 = vshll.u32 2102212464, %v4717
        %v4730 = vshrl.u32 920167782, %v4718
        %v4731 = vor.u32 %v4729, %v4730
        %v4732 = vshll.u32 920167782, %v4717
        %v4733 = vshrl.u32 1326507024, %v4718
        %v4734 = vor.u32 %v4732, %v4733
        %vm4735 = vcmp.lt.s32.totalorder %v4716, 1
        %vm4736 = vcmp.lt.s32.totalorder %v4716, 2
        %vm4737 = vcmp.lt.s32.totalorder %v4716, 3
        %vm4738 = vcmp.lt.s32.totalorder %v4716, 4
        %v4739 = vsel %vm4735, %v4719, %v4722
        %v4740 = vsel %vm4738, %v4728, 2102212464
        %v4741 = vsel %vm4737, %v4725, %v4740
        %v4742 = vsel %vm4736, %v4739, %v4741
        %v4743 = vsel %vm4735, %v4722, %v4725
        %v4744 = vsel %vm4738, %v4731, 920167782
        %v4745 = vsel %vm4737, %v4728, %v4744
        %v4746 = vsel %vm4736, %v4743, %v4745
        %v4747 = vsel %vm4735, %v4725, %v4728
        %v4748 = vsel %vm4738, %v4734, 1326507024
        %v4749 = vsel %vm4737, %v4731, %v4748
        %v4750 = vsel %vm4736, %v4747, %v4749
        %v4751 = vshll.u32 %v4711, 8
        %v4752 = vmul.u32.u64.compose %v4751, %v4750
        %v4753 = vextract.low.u32 %v4752
        %v4754 = vextract.high.u32 %v4752
        %v4755 = vmul.u32.u64.compose %v4751, %v4746
        %v4756 = vextract.low.u32 %v4755
        %v4757 = vextract.high.u32 %v4755
        %v4758 = vmul.u32 %v4751, %v4742
        %v4759 = vadd.s32 %v4754, %v4756
        %vm4760 = vc.u32 %v4754, %v4756
        %v4761 = vadd.s32 %v4757, 1
        %v4762 = vsel %vm4760, %v4761, %v4757
        %v4763 = vadd.s32 %v4758, %v4762
        %v4764 = vadd.s32 %v4763, 536870912
        %v4765 = vshrl.u32 %v4764, 30
        %v4766 = vshll.u32 %v4765, 30
        %v4767 = vsub.s32 %v4763, %v4766
        %vm4768 = vcmp.lt.s32.totalorder %v4767, 0
        %v4769 = vsub.s32 0, %v4767
        %v4770 = vsel %vm4768, %v4769, %v4767
        %v4771 = vclz %v4770
        %v4772 = vsub.s32 %v4771, 2
        %vm4773 = vcmp.gt.s32.totalorder 0, %v4772
        %v4774 = vsel %vm4773, 0, %v4772
        %v4775 = vsub.s32 32, %v4774
        %v4776 = vshll.u32 %v4767, %v4774
        %v4777 = vshrl.u32 %v4759, %v4775
        %v4778 = vor.u32 %v4776, %v4777
        %v4779 = vsub.s32 4294967266, %v4774
        %v4780 = vadd.s32 %v4779, 127
        %v4781 = vshll.u32 %v4780, 23
        %v4782 = vor.u32 4788187, %v4781
        %v4783 = vand.u32 2147483647, %v4782
        %v4785 = vcvt.s32.f32 %v4778
        %v4786 = vmul.f32 %v4785, %v4783
        %v4787 = vxor.u32 %v4786, 2147483648
        %v4788 = vsel %vm4705, %v4787, %v4786
        %v4789 = vsub.s32 4, %v4765
        %v4790 = vsel %vm4705, %v4789, %v4765
        %v4791 = vsel %vm4704, %v278, %v4788
        %v4792 = vsel %vm4704, 0, %v4790
        %v4793 = vcosq.f32.pop %v4791
        %v4794 = vsinq.f32.pop %v4791
        %vm4795 = vweird.f32 %v278
        %v4796 = vand.u32 %v4792, 3
        %vm4797 = vcmp.lt.s32.totalorder %v4796, 2
        %vm4798 = vcmp.eq.s32.totalorder %v4796, 0
        %v4799 = vxor.u32 %v4794, 2147483648
        %v4800 = vsel %vm4798, %v4793, %v4799
        %vm4801 = vcmp.eq.s32.totalorder %v4796, 2
        %v4802 = vxor.u32 %v4793, 2147483648
        %v4803 = vsel %vm4801, %v4802, %v4794
        %v4804 = vsel %vm4797, %v4800, %v4803
        %v4805 = vsel %vm4795, nan, %v4804
        %v4806 = vand.u32 2147483647, %v279
        %vm4807 = vcmp.le.f32.partialorder %v4806, 0.7853982
        %vm4808 = vcmp.lt.s32.totalorder %v279, 0
        %v4809 = vand.u32 %v279, 2139095040
        %v4810 = vshrl.u32 %v4809, 23
        %v4811 = vsub.s32 %v4810, 127
        %v4812 = vand.u32 2147483647, %v279
        %v4813 = vand.u32 %v4812, 8388607
        %v4814 = vor.u32 %v4813, 8388608
        %v4815 = vsub.s32 0, %v4814
        %v4816 = vadd.s32 %v4811, 1
        %vm4817 = vcmp.gt.s32.totalorder %v4816, 0
        %v4818 = vsel %vm4817, %v4816, 0
        %v4819 = vshrl.u32 %v4818, 5
        %v4820 = vand.u32 %v4818, 31
        %v4821 = vsub.s32 32, %v4820
        %v4822 = vshrl.u32 683565275, %v4821
        %v4823 = vshll.u32 683565275, %v4820
        %v4824 = vshrl.u32 2475754826, %v4821
        %v4825 = vor.u32 %v4823, %v4824
        %v4826 = vshll.u32 2475754826, %v4820
        %v4827 = vshrl.u32 2131351028, %v4821
        %v4828 = vor.u32 %v4826, %v4827
        %v4829 = vshll.u32 2131351028, %v4820
        %v4830 = vshrl.u32 2102212464, %v4821
        %v4831 = vor.u32 %v4829, %v4830
        %v4832 = vshll.u32 2102212464, %v4820
        %v4833 = vshrl.u32 920167782, %v4821
        %v4834 = vor.u32 %v4832, %v4833
        %v4835 = vshll.u32 920167782, %v4820
        %v4836 = vshrl.u32 1326507024, %v4821
        %v4837 = vor.u32 %v4835, %v4836
        %vm4838 = vcmp.lt.s32.totalorder %v4819, 1
        %vm4839 = vcmp.lt.s32.totalorder %v4819, 2
        %vm4840 = vcmp.lt.s32.totalorder %v4819, 3
        %vm4841 = vcmp.lt.s32.totalorder %v4819, 4
        %v4842 = vsel %vm4838, %v4822, %v4825
        %v4843 = vsel %vm4841, %v4831, 2102212464
        %v4844 = vsel %vm4840, %v4828, %v4843
        %v4845 = vsel %vm4839, %v4842, %v4844
        %v4846 = vsel %vm4838, %v4825, %v4828
        %v4847 = vsel %vm4841, %v4834, 920167782
        %v4848 = vsel %vm4840, %v4831, %v4847
        %v4849 = vsel %vm4839, %v4846, %v4848
        %v4850 = vsel %vm4838, %v4828, %v4831
        %v4851 = vsel %vm4841, %v4837, 1326507024
        %v4852 = vsel %vm4840, %v4834, %v4851
        %v4853 = vsel %vm4839, %v4850, %v4852
        %v4854 = vshll.u32 %v4814, 8
        %v4855 = vmul.u32.u64.compose %v4854, %v4853
        %v4856 = vextract.low.u32 %v4855
        %v4857 = vextract.high.u32 %v4855
        %v4858 = vmul.u32.u64.compose %v4854, %v4849
        %v4859 = vextract.low.u32 %v4858
        %v4860 = vextract.high.u32 %v4858
        %v4861 = vmul.u32 %v4854, %v4845
        %v4862 = vadd.s32 %v4857, %v4859
        %vm4863 = vc.u32 %v4857, %v4859
        %v4864 = vadd.s32 %v4860, 1
        %v4865 = vsel %vm4863, %v4864, %v4860
        %v4866 = vadd.s32 %v4861, %v4865
        %v4867 = vadd.s32 %v4866, 536870912
        %v4868 = vshrl.u32 %v4867, 30
        %v4869 = vshll.u32 %v4868, 30
        %v4870 = vsub.s32 %v4866, %v4869
        %vm4871 = vcmp.lt.s32.totalorder %v4870, 0
        %v4872 = vsub.s32 0, %v4870
        %v4873 = vsel %vm4871, %v4872, %v4870
        %v4874 = vclz %v4873
        %v4875 = vsub.s32 %v4874, 2
        %vm4876 = vcmp.gt.s32.totalorder 0, %v4875
        %v4877 = vsel %vm4876, 0, %v4875
        %v4878 = vsub.s32 32, %v4877
        %v4879 = vshll.u32 %v4870, %v4877
        %v4880 = vshrl.u32 %v4862, %v4878
        %v4881 = vor.u32 %v4879, %v4880
        %v4882 = vsub.s32 4294967266, %v4877
        %v4883 = vadd.s32 %v4882, 127
        %v4884 = vshll.u32 %v4883, 23
        %v4885 = vor.u32 4788187, %v4884
        %v4886 = vand.u32 2147483647, %v4885
        %v4888 = vcvt.s32.f32 %v4881
        %v4889 = vmul.f32 %v4888, %v4886
        %v4890 = vxor.u32 %v4889, 2147483648
        %v4891 = vsel %vm4808, %v4890, %v4889
        %v4892 = vsub.s32 4, %v4868
        %v4893 = vsel %vm4808, %v4892, %v4868
        %v4894 = vsel %vm4807, %v279, %v4891
        %v4895 = vsel %vm4807, 0, %v4893
        %v4896 = vcosq.f32.pop %v4894
        %v4897 = vsinq.f32.pop %v4894
        %vm4898 = vweird.f32 %v279
        %v4899 = vand.u32 %v4895, 3
        %vm4900 = vcmp.lt.s32.totalorder %v4899, 2
        %vm4901 = vcmp.eq.s32.totalorder %v4899, 0
        %v4902 = vxor.u32 %v4897, 2147483648
        %v4903 = vsel %vm4901, %v4896, %v4902
        %vm4904 = vcmp.eq.s32.totalorder %v4899, 2
        %v4905 = vxor.u32 %v4896, 2147483648
        %v4906 = vsel %vm4904, %v4905, %v4897
        %v4907 = vsel %vm4900, %v4903, %v4906
        %v4908 = vsel %vm4898, nan, %v4907
        %v4909 = vand.u32 2147483647, %v280
        %vm4910 = vcmp.le.f32.partialorder %v4909, 0.7853982
        %vm4911 = vcmp.lt.s32.totalorder %v280, 0
        %v4912 = vand.u32 %v280, 2139095040
        %v4913 = vshrl.u32 %v4912, 23
        %v4914 = vsub.s32 %v4913, 127
        %v4915 = vand.u32 2147483647, %v280
        %v4916 = vand.u32 %v4915, 8388607
        %v4917 = vor.u32 %v4916, 8388608
        %v4918 = vsub.s32 0, %v4917
        %v4919 = vadd.s32 %v4914, 1
        %vm4920 = vcmp.gt.s32.totalorder %v4919, 0
        %v4921 = vsel %vm4920, %v4919, 0
        %v4922 = vshrl.u32 %v4921, 5
        %v4923 = vand.u32 %v4921, 31
        %v4924 = vsub.s32 32, %v4923
        %v4925 = vshrl.u32 683565275, %v4924
        %v4926 = vshll.u32 683565275, %v4923
        %v4927 = vshrl.u32 2475754826, %v4924
        %v4928 = vor.u32 %v4926, %v4927
        %v4929 = vshll.u32 2475754826, %v4923
        %v4930 = vshrl.u32 2131351028, %v4924
        %v4931 = vor.u32 %v4929, %v4930
        %v4932 = vshll.u32 2131351028, %v4923
        %v4933 = vshrl.u32 2102212464, %v4924
        %v4934 = vor.u32 %v4932, %v4933
        %v4935 = vshll.u32 2102212464, %v4923
        %v4936 = vshrl.u32 920167782, %v4924
        %v4937 = vor.u32 %v4935, %v4936
        %v4938 = vshll.u32 920167782, %v4923
        %v4939 = vshrl.u32 1326507024, %v4924
        %v4940 = vor.u32 %v4938, %v4939
        %vm4941 = vcmp.lt.s32.totalorder %v4922, 1
        %vm4942 = vcmp.lt.s32.totalorder %v4922, 2
        %vm4943 = vcmp.lt.s32.totalorder %v4922, 3
        %vm4944 = vcmp.lt.s32.totalorder %v4922, 4
        %v4945 = vsel %vm4941, %v4925, %v4928
        %v4946 = vsel %vm4944, %v4934, 2102212464
        %v4947 = vsel %vm4943, %v4931, %v4946
        %v4948 = vsel %vm4942, %v4945, %v4947
        %v4949 = vsel %vm4941, %v4928, %v4931
        %v4950 = vsel %vm4944, %v4937, 920167782
        %v4951 = vsel %vm4943, %v4934, %v4950
        %v4952 = vsel %vm4942, %v4949, %v4951
        %v4953 = vsel %vm4941, %v4931, %v4934
        %v4954 = vsel %vm4944, %v4940, 1326507024
        %v4955 = vsel %vm4943, %v4937, %v4954
        %v4956 = vsel %vm4942, %v4953, %v4955
        %v4957 = vshll.u32 %v4917, 8
        %v4958 = vmul.u32.u64.compose %v4957, %v4956
        %v4959 = vextract.low.u32 %v4958
        %v4960 = vextract.high.u32 %v4958
        %v4961 = vmul.u32.u64.compose %v4957, %v4952
        %v4962 = vextract.low.u32 %v4961
        %v4963 = vextract.high.u32 %v4961
        %v4964 = vmul.u32 %v4957, %v4948
        %v4965 = vadd.s32 %v4960, %v4962
        %vm4966 = vc.u32 %v4960, %v4962
        %v4967 = vadd.s32 %v4963, 1
        %v4968 = vsel %vm4966, %v4967, %v4963
        %v4969 = vadd.s32 %v4964, %v4968
        %v4970 = vadd.s32 %v4969, 536870912
        %v4971 = vshrl.u32 %v4970, 30
        %v4972 = vshll.u32 %v4971, 30
        %v4973 = vsub.s32 %v4969, %v4972
        %vm4974 = vcmp.lt.s32.totalorder %v4973, 0
        %v4975 = vsub.s32 0, %v4973
        %v4976 = vsel %vm4974, %v4975, %v4973
        %v4977 = vclz %v4976
        %v4978 = vsub.s32 %v4977, 2
        %vm4979 = vcmp.gt.s32.totalorder 0, %v4978
        %v4980 = vsel %vm4979, 0, %v4978
        %v4981 = vsub.s32 32, %v4980
        %v4982 = vshll.u32 %v4973, %v4980
        %v4983 = vshrl.u32 %v4965, %v4981
        %v4984 = vor.u32 %v4982, %v4983
        %v4985 = vsub.s32 4294967266, %v4980
        %v4986 = vadd.s32 %v4985, 127
        %v4987 = vshll.u32 %v4986, 23
        %v4988 = vor.u32 4788187, %v4987
        %v4989 = vand.u32 2147483647, %v4988
        %v4991 = vcvt.s32.f32 %v4984
        %v4992 = vmul.f32 %v4991, %v4989
        %v4993 = vxor.u32 %v4992, 2147483648
        %v4994 = vsel %vm4911, %v4993, %v4992
        %v4995 = vsub.s32 4, %v4971
        %v4996 = vsel %vm4911, %v4995, %v4971
        %v4997 = vsel %vm4910, %v280, %v4994
        %v4998 = vsel %vm4910, 0, %v4996
        %v4999 = vcosq.f32.pop %v4997
        %v5000 = vsinq.f32.pop %v4997
        %vm5001 = vweird.f32 %v280
        %v5002 = vand.u32 %v4998, 3
        %vm5003 = vcmp.lt.s32.totalorder %v5002, 2
        %vm5004 = vcmp.eq.s32.totalorder %v5002, 0
        %v5005 = vxor.u32 %v5000, 2147483648
        %v5006 = vsel %vm5004, %v4999, %v5005
        %vm5007 = vcmp.eq.s32.totalorder %v5002, 2
        %v5008 = vxor.u32 %v4999, 2147483648
        %v5009 = vsel %vm5007, %v5008, %v5000
        %v5010 = vsel %vm5003, %v5006, %v5009
        %v5011 = vsel %vm5001, nan, %v5010
        %v5012 = vand.u32 2147483647, %v281
        %vm5013 = vcmp.le.f32.partialorder %v5012, 0.7853982
        %vm5014 = vcmp.lt.s32.totalorder %v281, 0
        %v5015 = vand.u32 %v281, 2139095040
        %v5016 = vshrl.u32 %v5015, 23
        %v5017 = vsub.s32 %v5016, 127
        %v5018 = vand.u32 2147483647, %v281
        %v5019 = vand.u32 %v5018, 8388607
        %v5020 = vor.u32 %v5019, 8388608
        %v5021 = vsub.s32 0, %v5020
        %v5022 = vadd.s32 %v5017, 1
        %vm5023 = vcmp.gt.s32.totalorder %v5022, 0
        %v5024 = vsel %vm5023, %v5022, 0
        %v5025 = vshrl.u32 %v5024, 5
        %v5026 = vand.u32 %v5024, 31
        %v5027 = vsub.s32 32, %v5026
        %v5028 = vshrl.u32 683565275, %v5027
        %v5029 = vshll.u32 683565275, %v5026
        %v5030 = vshrl.u32 2475754826, %v5027
        %v5031 = vor.u32 %v5029, %v5030
        %v5032 = vshll.u32 2475754826, %v5026
        %v5033 = vshrl.u32 2131351028, %v5027
        %v5034 = vor.u32 %v5032, %v5033
        %v5035 = vshll.u32 2131351028, %v5026
        %v5036 = vshrl.u32 2102212464, %v5027
        %v5037 = vor.u32 %v5035, %v5036
        %v5038 = vshll.u32 2102212464, %v5026
        %v5039 = vshrl.u32 920167782, %v5027
        %v5040 = vor.u32 %v5038, %v5039
        %v5041 = vshll.u32 920167782, %v5026
        %v5042 = vshrl.u32 1326507024, %v5027
        %v5043 = vor.u32 %v5041, %v5042
        %vm5044 = vcmp.lt.s32.totalorder %v5025, 1
        %vm5045 = vcmp.lt.s32.totalorder %v5025, 2
        %vm5046 = vcmp.lt.s32.totalorder %v5025, 3
        %vm5047 = vcmp.lt.s32.totalorder %v5025, 4
        %v5048 = vsel %vm5044, %v5028, %v5031
        %v5049 = vsel %vm5047, %v5037, 2102212464
        %v5050 = vsel %vm5046, %v5034, %v5049
        %v5051 = vsel %vm5045, %v5048, %v5050
        %v5052 = vsel %vm5044, %v5031, %v5034
        %v5053 = vsel %vm5047, %v5040, 920167782
        %v5054 = vsel %vm5046, %v5037, %v5053
        %v5055 = vsel %vm5045, %v5052, %v5054
        %v5056 = vsel %vm5044, %v5034, %v5037
        %v5057 = vsel %vm5047, %v5043, 1326507024
        %v5058 = vsel %vm5046, %v5040, %v5057
        %v5059 = vsel %vm5045, %v5056, %v5058
        %v5060 = vshll.u32 %v5020, 8
        %v5061 = vmul.u32.u64.compose %v5060, %v5059
        %v5062 = vextract.low.u32 %v5061
        %v5063 = vextract.high.u32 %v5061
        %v5064 = vmul.u32.u64.compose %v5060, %v5055
        %v5065 = vextract.low.u32 %v5064
        %v5066 = vextract.high.u32 %v5064
        %v5067 = vmul.u32 %v5060, %v5051
        %v5068 = vadd.s32 %v5063, %v5065
        %vm5069 = vc.u32 %v5063, %v5065
        %v5070 = vadd.s32 %v5066, 1
        %v5071 = vsel %vm5069, %v5070, %v5066
        %v5072 = vadd.s32 %v5067, %v5071
        %v5073 = vadd.s32 %v5072, 536870912
        %v5074 = vshrl.u32 %v5073, 30
        %v5075 = vshll.u32 %v5074, 30
        %v5076 = vsub.s32 %v5072, %v5075
        %vm5077 = vcmp.lt.s32.totalorder %v5076, 0
        %v5078 = vsub.s32 0, %v5076
        %v5079 = vsel %vm5077, %v5078, %v5076
        %v5080 = vclz %v5079
        %v5081 = vsub.s32 %v5080, 2
        %vm5082 = vcmp.gt.s32.totalorder 0, %v5081
        %v5083 = vsel %vm5082, 0, %v5081
        %v5084 = vsub.s32 32, %v5083
        %v5085 = vshll.u32 %v5076, %v5083
        %v5086 = vshrl.u32 %v5068, %v5084
        %v5087 = vor.u32 %v5085, %v5086
        %v5088 = vsub.s32 4294967266, %v5083
        %v5089 = vadd.s32 %v5088, 127
        %v5090 = vshll.u32 %v5089, 23
        %v5091 = vor.u32 4788187, %v5090
        %v5092 = vand.u32 2147483647, %v5091
        %v5094 = vcvt.s32.f32 %v5087
        %v5095 = vmul.f32 %v5094, %v5092
        %v5096 = vxor.u32 %v5095, 2147483648
        %v5097 = vsel %vm5014, %v5096, %v5095
        %v5098 = vsub.s32 4, %v5074
        %v5099 = vsel %vm5014, %v5098, %v5074
        %v5100 = vsel %vm5013, %v281, %v5097
        %v5101 = vsel %vm5013, 0, %v5099
        %v5102 = vcosq.f32.pop %v5100
        %v5103 = vsinq.f32.pop %v5100
        %vm5104 = vweird.f32 %v281
        %v5105 = vand.u32 %v5101, 3
        %vm5106 = vcmp.lt.s32.totalorder %v5105, 2
        %vm5107 = vcmp.eq.s32.totalorder %v5105, 0
        %v5108 = vxor.u32 %v5103, 2147483648
        %v5109 = vsel %vm5107, %v5102, %v5108
        %vm5110 = vcmp.eq.s32.totalorder %v5105, 2
        %v5111 = vxor.u32 %v5102, 2147483648
        %v5112 = vsel %vm5110, %v5111, %v5103
        %v5113 = vsel %vm5106, %v5109, %v5112
        %v5114 = vsel %vm5104, nan, %v5113
        %v5115 = vand.u32 2147483647, %v282
        %vm5116 = vcmp.le.f32.partialorder %v5115, 0.7853982
        %vm5117 = vcmp.lt.s32.totalorder %v282, 0
        %v5118 = vand.u32 %v282, 2139095040
        %v5119 = vshrl.u32 %v5118, 23
        %v5120 = vsub.s32 %v5119, 127
        %v5121 = vand.u32 2147483647, %v282
        %v5122 = vand.u32 %v5121, 8388607
        %v5123 = vor.u32 %v5122, 8388608
        %v5124 = vsub.s32 0, %v5123
        %v5125 = vadd.s32 %v5120, 1
        %vm5126 = vcmp.gt.s32.totalorder %v5125, 0
        %v5127 = vsel %vm5126, %v5125, 0
        %v5128 = vshrl.u32 %v5127, 5
        %v5129 = vand.u32 %v5127, 31
        %v5130 = vsub.s32 32, %v5129
        %v5131 = vshrl.u32 683565275, %v5130
        %v5132 = vshll.u32 683565275, %v5129
        %v5133 = vshrl.u32 2475754826, %v5130
        %v5134 = vor.u32 %v5132, %v5133
        %v5135 = vshll.u32 2475754826, %v5129
        %v5136 = vshrl.u32 2131351028, %v5130
        %v5137 = vor.u32 %v5135, %v5136
        %v5138 = vshll.u32 2131351028, %v5129
        %v5139 = vshrl.u32 2102212464, %v5130
        %v5140 = vor.u32 %v5138, %v5139
        %v5141 = vshll.u32 2102212464, %v5129
        %v5142 = vshrl.u32 920167782, %v5130
        %v5143 = vor.u32 %v5141, %v5142
        %v5144 = vshll.u32 920167782, %v5129
        %v5145 = vshrl.u32 1326507024, %v5130
        %v5146 = vor.u32 %v5144, %v5145
        %vm5147 = vcmp.lt.s32.totalorder %v5128, 1
        %vm5148 = vcmp.lt.s32.totalorder %v5128, 2
        %vm5149 = vcmp.lt.s32.totalorder %v5128, 3
        %vm5150 = vcmp.lt.s32.totalorder %v5128, 4
        %v5151 = vsel %vm5147, %v5131, %v5134
        %v5152 = vsel %vm5150, %v5140, 2102212464
        %v5153 = vsel %vm5149, %v5137, %v5152
        %v5154 = vsel %vm5148, %v5151, %v5153
        %v5155 = vsel %vm5147, %v5134, %v5137
        %v5156 = vsel %vm5150, %v5143, 920167782
        %v5157 = vsel %vm5149, %v5140, %v5156
        %v5158 = vsel %vm5148, %v5155, %v5157
        %v5159 = vsel %vm5147, %v5137, %v5140
        %v5160 = vsel %vm5150, %v5146, 1326507024
        %v5161 = vsel %vm5149, %v5143, %v5160
        %v5162 = vsel %vm5148, %v5159, %v5161
        %v5163 = vshll.u32 %v5123, 8
        %v5164 = vmul.u32.u64.compose %v5163, %v5162
        %v5165 = vextract.low.u32 %v5164
        %v5166 = vextract.high.u32 %v5164
        %v5167 = vmul.u32.u64.compose %v5163, %v5158
        %v5168 = vextract.low.u32 %v5167
        %v5169 = vextract.high.u32 %v5167
        %v5170 = vmul.u32 %v5163, %v5154
        %v5171 = vadd.s32 %v5166, %v5168
        %vm5172 = vc.u32 %v5166, %v5168
        %v5173 = vadd.s32 %v5169, 1
        %v5174 = vsel %vm5172, %v5173, %v5169
        %v5175 = vadd.s32 %v5170, %v5174
        %v5176 = vadd.s32 %v5175, 536870912
        %v5177 = vshrl.u32 %v5176, 30
        %v5178 = vshll.u32 %v5177, 30
        %v5179 = vsub.s32 %v5175, %v5178
        %vm5180 = vcmp.lt.s32.totalorder %v5179, 0
        %v5181 = vsub.s32 0, %v5179
        %v5182 = vsel %vm5180, %v5181, %v5179
        %v5183 = vclz %v5182
        %v5184 = vsub.s32 %v5183, 2
        %vm5185 = vcmp.gt.s32.totalorder 0, %v5184
        %v5186 = vsel %vm5185, 0, %v5184
        %v5187 = vsub.s32 32, %v5186
        %v5188 = vshll.u32 %v5179, %v5186
        %v5189 = vshrl.u32 %v5171, %v5187
        %v5190 = vor.u32 %v5188, %v5189
        %v5191 = vsub.s32 4294967266, %v5186
        %v5192 = vadd.s32 %v5191, 127
        %v5193 = vshll.u32 %v5192, 23
        %v5194 = vor.u32 4788187, %v5193
        %v5195 = vand.u32 2147483647, %v5194
        %v5197 = vcvt.s32.f32 %v5190
        %v5198 = vmul.f32 %v5197, %v5195
        %v5199 = vxor.u32 %v5198, 2147483648
        %v5200 = vsel %vm5117, %v5199, %v5198
        %v5201 = vsub.s32 4, %v5177
        %v5202 = vsel %vm5117, %v5201, %v5177
        %v5203 = vsel %vm5116, %v282, %v5200
        %v5204 = vsel %vm5116, 0, %v5202
        %v5205 = vcosq.f32.pop %v5203
        %v5206 = vsinq.f32.pop %v5203
        %vm5207 = vweird.f32 %v282
        %v5208 = vand.u32 %v5204, 3
        %vm5209 = vcmp.lt.s32.totalorder %v5208, 2
        %vm5210 = vcmp.eq.s32.totalorder %v5208, 0
        %v5211 = vxor.u32 %v5206, 2147483648
        %v5212 = vsel %vm5210, %v5205, %v5211
        %vm5213 = vcmp.eq.s32.totalorder %v5208, 2
        %v5214 = vxor.u32 %v5205, 2147483648
        %v5215 = vsel %vm5213, %v5214, %v5206
        %v5216 = vsel %vm5209, %v5212, %v5215
        %v5217 = vsel %vm5207, nan, %v5216
        %v5218 = vand.u32 2147483647, %v283
        %vm5219 = vcmp.le.f32.partialorder %v5218, 0.7853982
        %vm5220 = vcmp.lt.s32.totalorder %v283, 0
        %v5221 = vand.u32 %v283, 2139095040
        %v5222 = vshrl.u32 %v5221, 23
        %v5223 = vsub.s32 %v5222, 127
        %v5224 = vand.u32 2147483647, %v283
        %v5225 = vand.u32 %v5224, 8388607
        %v5226 = vor.u32 %v5225, 8388608
        %v5227 = vsub.s32 0, %v5226
        %v5228 = vadd.s32 %v5223, 1
        %vm5229 = vcmp.gt.s32.totalorder %v5228, 0
        %v5230 = vsel %vm5229, %v5228, 0
        %v5231 = vshrl.u32 %v5230, 5
        %v5232 = vand.u32 %v5230, 31
        %v5233 = vsub.s32 32, %v5232
        %v5234 = vshrl.u32 683565275, %v5233
        %v5235 = vshll.u32 683565275, %v5232
        %v5236 = vshrl.u32 2475754826, %v5233
        %v5237 = vor.u32 %v5235, %v5236
        %v5238 = vshll.u32 2475754826, %v5232
        %v5239 = vshrl.u32 2131351028, %v5233
        %v5240 = vor.u32 %v5238, %v5239
        %v5241 = vshll.u32 2131351028, %v5232
        %v5242 = vshrl.u32 2102212464, %v5233
        %v5243 = vor.u32 %v5241, %v5242
        %v5244 = vshll.u32 2102212464, %v5232
        %v5245 = vshrl.u32 920167782, %v5233
        %v5246 = vor.u32 %v5244, %v5245
        %v5247 = vshll.u32 920167782, %v5232
        %v5248 = vshrl.u32 1326507024, %v5233
        %v5249 = vor.u32 %v5247, %v5248
        %vm5250 = vcmp.lt.s32.totalorder %v5231, 1
        %vm5251 = vcmp.lt.s32.totalorder %v5231, 2
        %vm5252 = vcmp.lt.s32.totalorder %v5231, 3
        %vm5253 = vcmp.lt.s32.totalorder %v5231, 4
        %v5254 = vsel %vm5250, %v5234, %v5237
        %v5255 = vsel %vm5253, %v5243, 2102212464
        %v5256 = vsel %vm5252, %v5240, %v5255
        %v5257 = vsel %vm5251, %v5254, %v5256
        %v5258 = vsel %vm5250, %v5237, %v5240
        %v5259 = vsel %vm5253, %v5246, 920167782
        %v5260 = vsel %vm5252, %v5243, %v5259
        %v5261 = vsel %vm5251, %v5258, %v5260
        %v5262 = vsel %vm5250, %v5240, %v5243
        %v5263 = vsel %vm5253, %v5249, 1326507024
        %v5264 = vsel %vm5252, %v5246, %v5263
        %v5265 = vsel %vm5251, %v5262, %v5264
        %v5266 = vshll.u32 %v5226, 8
        %v5267 = vmul.u32.u64.compose %v5266, %v5265
        %v5268 = vextract.low.u32 %v5267
        %v5269 = vextract.high.u32 %v5267
        %v5270 = vmul.u32.u64.compose %v5266, %v5261
        %v5271 = vextract.low.u32 %v5270
        %v5272 = vextract.high.u32 %v5270
        %v5273 = vmul.u32 %v5266, %v5257
        %v5274 = vadd.s32 %v5269, %v5271
        %vm5275 = vc.u32 %v5269, %v5271
        %v5276 = vadd.s32 %v5272, 1
        %v5277 = vsel %vm5275, %v5276, %v5272
        %v5278 = vadd.s32 %v5273, %v5277
        %v5279 = vadd.s32 %v5278, 536870912
        %v5280 = vshrl.u32 %v5279, 30
        %v5281 = vshll.u32 %v5280, 30
        %v5282 = vsub.s32 %v5278, %v5281
        %vm5283 = vcmp.lt.s32.totalorder %v5282, 0
        %v5284 = vsub.s32 0, %v5282
        %v5285 = vsel %vm5283, %v5284, %v5282
        %v5286 = vclz %v5285
        %v5287 = vsub.s32 %v5286, 2
        %vm5288 = vcmp.gt.s32.totalorder 0, %v5287
        %v5289 = vsel %vm5288, 0, %v5287
        %v5290 = vsub.s32 32, %v5289
        %v5291 = vshll.u32 %v5282, %v5289
        %v5292 = vshrl.u32 %v5274, %v5290
        %v5293 = vor.u32 %v5291, %v5292
        %v5294 = vsub.s32 4294967266, %v5289
        %v5295 = vadd.s32 %v5294, 127
        %v5296 = vshll.u32 %v5295, 23
        %v5297 = vor.u32 4788187, %v5296
        %v5298 = vand.u32 2147483647, %v5297
        %v5300 = vcvt.s32.f32 %v5293
        %v5301 = vmul.f32 %v5300, %v5298
        %v5302 = vxor.u32 %v5301, 2147483648
        %v5303 = vsel %vm5220, %v5302, %v5301
        %v5304 = vsub.s32 4, %v5280
        %v5305 = vsel %vm5220, %v5304, %v5280
        %v5306 = vsel %vm5219, %v283, %v5303
        %v5307 = vsel %vm5219, 0, %v5305
        %v5308 = vcosq.f32.pop %v5306
        %v5309 = vsinq.f32.pop %v5306
        %vm5310 = vweird.f32 %v283
        %v5311 = vand.u32 %v5307, 3
        %vm5312 = vcmp.lt.s32.totalorder %v5311, 2
        %vm5313 = vcmp.eq.s32.totalorder %v5311, 0
        %v5314 = vxor.u32 %v5309, 2147483648
        %v5315 = vsel %vm5313, %v5308, %v5314
        %vm5316 = vcmp.eq.s32.totalorder %v5311, 2
        %v5317 = vxor.u32 %v5308, 2147483648
        %v5318 = vsel %vm5316, %v5317, %v5309
        %v5319 = vsel %vm5312, %v5315, %v5318
        %v5320 = vsel %vm5310, nan, %v5319
        %v5321 = vand.u32 2147483647, %v284
        %vm5322 = vcmp.le.f32.partialorder %v5321, 0.7853982
        %vm5323 = vcmp.lt.s32.totalorder %v284, 0
        %v5324 = vand.u32 %v284, 2139095040
        %v5325 = vshrl.u32 %v5324, 23
        %v5326 = vsub.s32 %v5325, 127
        %v5327 = vand.u32 2147483647, %v284
        %v5328 = vand.u32 %v5327, 8388607
        %v5329 = vor.u32 %v5328, 8388608
        %v5330 = vsub.s32 0, %v5329
        %v5331 = vadd.s32 %v5326, 1
        %vm5332 = vcmp.gt.s32.totalorder %v5331, 0
        %v5333 = vsel %vm5332, %v5331, 0
        %v5334 = vshrl.u32 %v5333, 5
        %v5335 = vand.u32 %v5333, 31
        %v5336 = vsub.s32 32, %v5335
        %v5337 = vshrl.u32 683565275, %v5336
        %v5338 = vshll.u32 683565275, %v5335
        %v5339 = vshrl.u32 2475754826, %v5336
        %v5340 = vor.u32 %v5338, %v5339
        %v5341 = vshll.u32 2475754826, %v5335
        %v5342 = vshrl.u32 2131351028, %v5336
        %v5343 = vor.u32 %v5341, %v5342
        %v5344 = vshll.u32 2131351028, %v5335
        %v5345 = vshrl.u32 2102212464, %v5336
        %v5346 = vor.u32 %v5344, %v5345
        %v5347 = vshll.u32 2102212464, %v5335
        %v5348 = vshrl.u32 920167782, %v5336
        %v5349 = vor.u32 %v5347, %v5348
        %v5350 = vshll.u32 920167782, %v5335
        %v5351 = vshrl.u32 1326507024, %v5336
        %v5352 = vor.u32 %v5350, %v5351
        %vm5353 = vcmp.lt.s32.totalorder %v5334, 1
        %vm5354 = vcmp.lt.s32.totalorder %v5334, 2
        %vm5355 = vcmp.lt.s32.totalorder %v5334, 3
        %vm5356 = vcmp.lt.s32.totalorder %v5334, 4
        %v5357 = vsel %vm5353, %v5337, %v5340
        %v5358 = vsel %vm5356, %v5346, 2102212464
        %v5359 = vsel %vm5355, %v5343, %v5358
        %v5360 = vsel %vm5354, %v5357, %v5359
        %v5361 = vsel %vm5353, %v5340, %v5343
        %v5362 = vsel %vm5356, %v5349, 920167782
        %v5363 = vsel %vm5355, %v5346, %v5362
        %v5364 = vsel %vm5354, %v5361, %v5363
        %v5365 = vsel %vm5353, %v5343, %v5346
        %v5366 = vsel %vm5356, %v5352, 1326507024
        %v5367 = vsel %vm5355, %v5349, %v5366
        %v5368 = vsel %vm5354, %v5365, %v5367
        %v5369 = vshll.u32 %v5329, 8
        %v5370 = vmul.u32.u64.compose %v5369, %v5368
        %v5371 = vextract.low.u32 %v5370
        %v5372 = vextract.high.u32 %v5370
        %v5373 = vmul.u32.u64.compose %v5369, %v5364
        %v5374 = vextract.low.u32 %v5373
        %v5375 = vextract.high.u32 %v5373
        %v5376 = vmul.u32 %v5369, %v5360
        %v5377 = vadd.s32 %v5372, %v5374
        %vm5378 = vc.u32 %v5372, %v5374
        %v5379 = vadd.s32 %v5375, 1
        %v5380 = vsel %vm5378, %v5379, %v5375
        %v5381 = vadd.s32 %v5376, %v5380
        %v5382 = vadd.s32 %v5381, 536870912
        %v5383 = vshrl.u32 %v5382, 30
        %v5384 = vshll.u32 %v5383, 30
        %v5385 = vsub.s32 %v5381, %v5384
        %vm5386 = vcmp.lt.s32.totalorder %v5385, 0
        %v5387 = vsub.s32 0, %v5385
        %v5388 = vsel %vm5386, %v5387, %v5385
        %v5389 = vclz %v5388
        %v5390 = vsub.s32 %v5389, 2
        %vm5391 = vcmp.gt.s32.totalorder 0, %v5390
        %v5392 = vsel %vm5391, 0, %v5390
        %v5393 = vsub.s32 32, %v5392
        %v5394 = vshll.u32 %v5385, %v5392
        %v5395 = vshrl.u32 %v5377, %v5393
        %v5396 = vor.u32 %v5394, %v5395
        %v5397 = vsub.s32 4294967266, %v5392
        %v5398 = vadd.s32 %v5397, 127
        %v5399 = vshll.u32 %v5398, 23
        %v5400 = vor.u32 4788187, %v5399
        %v5401 = vand.u32 2147483647, %v5400
        %v5403 = vcvt.s32.f32 %v5396
        %v5404 = vmul.f32 %v5403, %v5401
        %v5405 = vxor.u32 %v5404, 2147483648
        %v5406 = vsel %vm5323, %v5405, %v5404
        %v5407 = vsub.s32 4, %v5383
        %v5408 = vsel %vm5323, %v5407, %v5383
        %v5409 = vsel %vm5322, %v284, %v5406
        %v5410 = vsel %vm5322, 0, %v5408
        %v5411 = vcosq.f32.pop %v5409
        %v5412 = vsinq.f32.pop %v5409
        %vm5413 = vweird.f32 %v284
        %v5414 = vand.u32 %v5410, 3
        %vm5415 = vcmp.lt.s32.totalorder %v5414, 2
        %vm5416 = vcmp.eq.s32.totalorder %v5414, 0
        %v5417 = vxor.u32 %v5412, 2147483648
        %v5418 = vsel %vm5416, %v5411, %v5417
        %vm5419 = vcmp.eq.s32.totalorder %v5414, 2
        %v5420 = vxor.u32 %v5411, 2147483648
        %v5421 = vsel %vm5419, %v5420, %v5412
        %v5422 = vsel %vm5415, %v5418, %v5421
        %v5423 = vsel %vm5413, nan, %v5422
        %v5424 = vand.u32 2147483647, %v285
        %vm5425 = vcmp.le.f32.partialorder %v5424, 0.7853982
        %vm5426 = vcmp.lt.s32.totalorder %v285, 0
        %v5427 = vand.u32 %v285, 2139095040
        %v5428 = vshrl.u32 %v5427, 23
        %v5429 = vsub.s32 %v5428, 127
        %v5430 = vand.u32 2147483647, %v285
        %v5431 = vand.u32 %v5430, 8388607
        %v5432 = vor.u32 %v5431, 8388608
        %v5433 = vsub.s32 0, %v5432
        %v5434 = vadd.s32 %v5429, 1
        %vm5435 = vcmp.gt.s32.totalorder %v5434, 0
        %v5436 = vsel %vm5435, %v5434, 0
        %v5437 = vshrl.u32 %v5436, 5
        %v5438 = vand.u32 %v5436, 31
        %v5439 = vsub.s32 32, %v5438
        %v5440 = vshrl.u32 683565275, %v5439
        %v5441 = vshll.u32 683565275, %v5438
        %v5442 = vshrl.u32 2475754826, %v5439
        %v5443 = vor.u32 %v5441, %v5442
        %v5444 = vshll.u32 2475754826, %v5438
        %v5445 = vshrl.u32 2131351028, %v5439
        %v5446 = vor.u32 %v5444, %v5445
        %v5447 = vshll.u32 2131351028, %v5438
        %v5448 = vshrl.u32 2102212464, %v5439
        %v5449 = vor.u32 %v5447, %v5448
        %v5450 = vshll.u32 2102212464, %v5438
        %v5451 = vshrl.u32 920167782, %v5439
        %v5452 = vor.u32 %v5450, %v5451
        %v5453 = vshll.u32 920167782, %v5438
        %v5454 = vshrl.u32 1326507024, %v5439
        %v5455 = vor.u32 %v5453, %v5454
        %vm5456 = vcmp.lt.s32.totalorder %v5437, 1
        %vm5457 = vcmp.lt.s32.totalorder %v5437, 2
        %vm5458 = vcmp.lt.s32.totalorder %v5437, 3
        %vm5459 = vcmp.lt.s32.totalorder %v5437, 4
        %v5460 = vsel %vm5456, %v5440, %v5443
        %v5461 = vsel %vm5459, %v5449, 2102212464
        %v5462 = vsel %vm5458, %v5446, %v5461
        %v5463 = vsel %vm5457, %v5460, %v5462
        %v5464 = vsel %vm5456, %v5443, %v5446
        %v5465 = vsel %vm5459, %v5452, 920167782
        %v5466 = vsel %vm5458, %v5449, %v5465
        %v5467 = vsel %vm5457, %v5464, %v5466
        %v5468 = vsel %vm5456, %v5446, %v5449
        %v5469 = vsel %vm5459, %v5455, 1326507024
        %v5470 = vsel %vm5458, %v5452, %v5469
        %v5471 = vsel %vm5457, %v5468, %v5470
        %v5472 = vshll.u32 %v5432, 8
        %v5473 = vmul.u32.u64.compose %v5472, %v5471
        %v5474 = vextract.low.u32 %v5473
        %v5475 = vextract.high.u32 %v5473
        %v5476 = vmul.u32.u64.compose %v5472, %v5467
        %v5477 = vextract.low.u32 %v5476
        %v5478 = vextract.high.u32 %v5476
        %v5479 = vmul.u32 %v5472, %v5463
        %v5480 = vadd.s32 %v5475, %v5477
        %vm5481 = vc.u32 %v5475, %v5477
        %v5482 = vadd.s32 %v5478, 1
        %v5483 = vsel %vm5481, %v5482, %v5478
        %v5484 = vadd.s32 %v5479, %v5483
        %v5485 = vadd.s32 %v5484, 536870912
        %v5486 = vshrl.u32 %v5485, 30
        %v5487 = vshll.u32 %v5486, 30
        %v5488 = vsub.s32 %v5484, %v5487
        %vm5489 = vcmp.lt.s32.totalorder %v5488, 0
        %v5490 = vsub.s32 0, %v5488
        %v5491 = vsel %vm5489, %v5490, %v5488
        %v5492 = vclz %v5491
        %v5493 = vsub.s32 %v5492, 2
        %vm5494 = vcmp.gt.s32.totalorder 0, %v5493
        %v5495 = vsel %vm5494, 0, %v5493
        %v5496 = vsub.s32 32, %v5495
        %v5497 = vshll.u32 %v5488, %v5495
        %v5498 = vshrl.u32 %v5480, %v5496
        %v5499 = vor.u32 %v5497, %v5498
        %v5500 = vsub.s32 4294967266, %v5495
        %v5501 = vadd.s32 %v5500, 127
        %v5502 = vshll.u32 %v5501, 23
        %v5503 = vor.u32 4788187, %v5502
        %v5504 = vand.u32 2147483647, %v5503
        %v5506 = vcvt.s32.f32 %v5499
        %v5507 = vmul.f32 %v5506, %v5504
        %v5508 = vxor.u32 %v5507, 2147483648
        %v5509 = vsel %vm5426, %v5508, %v5507
        %v5510 = vsub.s32 4, %v5486
        %v5511 = vsel %vm5426, %v5510, %v5486
        %v5512 = vsel %vm5425, %v285, %v5509
        %v5513 = vsel %vm5425, 0, %v5511
        %v5514 = vcosq.f32.pop %v5512
        %v5515 = vsinq.f32.pop %v5512
        %vm5516 = vweird.f32 %v285
        %v5517 = vand.u32 %v5513, 3
        %vm5518 = vcmp.lt.s32.totalorder %v5517, 2
        %vm5519 = vcmp.eq.s32.totalorder %v5517, 0
        %v5520 = vxor.u32 %v5515, 2147483648
        %v5521 = vsel %vm5519, %v5514, %v5520
        %vm5522 = vcmp.eq.s32.totalorder %v5517, 2
        %v5523 = vxor.u32 %v5514, 2147483648
        %v5524 = vsel %vm5522, %v5523, %v5515
        %v5525 = vsel %vm5518, %v5521, %v5524
        %v5526 = vsel %vm5516, nan, %v5525
        %v5527 = vand.u32 2147483647, %v286
        %vm5528 = vcmp.le.f32.partialorder %v5527, 0.7853982
        %vm5529 = vcmp.lt.s32.totalorder %v286, 0
        %v5530 = vand.u32 %v286, 2139095040
        %v5531 = vshrl.u32 %v5530, 23
        %v5532 = vsub.s32 %v5531, 127
        %v5533 = vand.u32 2147483647, %v286
        %v5534 = vand.u32 %v5533, 8388607
        %v5535 = vor.u32 %v5534, 8388608
        %v5536 = vsub.s32 0, %v5535
        %v5537 = vadd.s32 %v5532, 1
        %vm5538 = vcmp.gt.s32.totalorder %v5537, 0
        %v5539 = vsel %vm5538, %v5537, 0
        %v5540 = vshrl.u32 %v5539, 5
        %v5541 = vand.u32 %v5539, 31
        %v5542 = vsub.s32 32, %v5541
        %v5543 = vshrl.u32 683565275, %v5542
        %v5544 = vshll.u32 683565275, %v5541
        %v5545 = vshrl.u32 2475754826, %v5542
        %v5546 = vor.u32 %v5544, %v5545
        %v5547 = vshll.u32 2475754826, %v5541
        %v5548 = vshrl.u32 2131351028, %v5542
        %v5549 = vor.u32 %v5547, %v5548
        %v5550 = vshll.u32 2131351028, %v5541
        %v5551 = vshrl.u32 2102212464, %v5542
        %v5552 = vor.u32 %v5550, %v5551
        %v5553 = vshll.u32 2102212464, %v5541
        %v5554 = vshrl.u32 920167782, %v5542
        %v5555 = vor.u32 %v5553, %v5554
        %v5556 = vshll.u32 920167782, %v5541
        %v5557 = vshrl.u32 1326507024, %v5542
        %v5558 = vor.u32 %v5556, %v5557
        %vm5559 = vcmp.lt.s32.totalorder %v5540, 1
        %vm5560 = vcmp.lt.s32.totalorder %v5540, 2
        %vm5561 = vcmp.lt.s32.totalorder %v5540, 3
        %vm5562 = vcmp.lt.s32.totalorder %v5540, 4
        %v5563 = vsel %vm5559, %v5543, %v5546
        %v5564 = vsel %vm5562, %v5552, 2102212464
        %v5565 = vsel %vm5561, %v5549, %v5564
        %v5566 = vsel %vm5560, %v5563, %v5565
        %v5567 = vsel %vm5559, %v5546, %v5549
        %v5568 = vsel %vm5562, %v5555, 920167782
        %v5569 = vsel %vm5561, %v5552, %v5568
        %v5570 = vsel %vm5560, %v5567, %v5569
        %v5571 = vsel %vm5559, %v5549, %v5552
        %v5572 = vsel %vm5562, %v5558, 1326507024
        %v5573 = vsel %vm5561, %v5555, %v5572
        %v5574 = vsel %vm5560, %v5571, %v5573
        %v5575 = vshll.u32 %v5535, 8
        %v5576 = vmul.u32.u64.compose %v5575, %v5574
        %v5577 = vextract.low.u32 %v5576
        %v5578 = vextract.high.u32 %v5576
        %v5579 = vmul.u32.u64.compose %v5575, %v5570
        %v5580 = vextract.low.u32 %v5579
        %v5581 = vextract.high.u32 %v5579
        %v5582 = vmul.u32 %v5575, %v5566
        %v5583 = vadd.s32 %v5578, %v5580
        %vm5584 = vc.u32 %v5578, %v5580
        %v5585 = vadd.s32 %v5581, 1
        %v5586 = vsel %vm5584, %v5585, %v5581
        %v5587 = vadd.s32 %v5582, %v5586
        %v5588 = vadd.s32 %v5587, 536870912
        %v5589 = vshrl.u32 %v5588, 30
        %v5590 = vshll.u32 %v5589, 30
        %v5591 = vsub.s32 %v5587, %v5590
        %vm5592 = vcmp.lt.s32.totalorder %v5591, 0
        %v5593 = vsub.s32 0, %v5591
        %v5594 = vsel %vm5592, %v5593, %v5591
        %v5595 = vclz %v5594
        %v5596 = vsub.s32 %v5595, 2
        %vm5597 = vcmp.gt.s32.totalorder 0, %v5596
        %v5598 = vsel %vm5597, 0, %v5596
        %v5599 = vsub.s32 32, %v5598
        %v5600 = vshll.u32 %v5591, %v5598
        %v5601 = vshrl.u32 %v5583, %v5599
        %v5602 = vor.u32 %v5600, %v5601
        %v5603 = vsub.s32 4294967266, %v5598
        %v5604 = vadd.s32 %v5603, 127
        %v5605 = vshll.u32 %v5604, 23
        %v5606 = vor.u32 4788187, %v5605
        %v5607 = vand.u32 2147483647, %v5606
        %v5609 = vcvt.s32.f32 %v5602
        %v5610 = vmul.f32 %v5609, %v5607
        %v5611 = vxor.u32 %v5610, 2147483648
        %v5612 = vsel %vm5529, %v5611, %v5610
        %v5613 = vsub.s32 4, %v5589
        %v5614 = vsel %vm5529, %v5613, %v5589
        %v5615 = vsel %vm5528, %v286, %v5612
        %v5616 = vsel %vm5528, 0, %v5614
        %v5617 = vcosq.f32.pop %v5615
        %v5618 = vsinq.f32.pop %v5615
        %vm5619 = vweird.f32 %v286
        %v5620 = vand.u32 %v5616, 3
        %vm5621 = vcmp.lt.s32.totalorder %v5620, 2
        %vm5622 = vcmp.eq.s32.totalorder %v5620, 0
        %v5623 = vxor.u32 %v5618, 2147483648
        %v5624 = vsel %vm5622, %v5617, %v5623
        %vm5625 = vcmp.eq.s32.totalorder %v5620, 2
        %v5626 = vxor.u32 %v5617, 2147483648
        %v5627 = vsel %vm5625, %v5626, %v5618
        %v5628 = vsel %vm5621, %v5624, %v5627
        %v5629 = vsel %vm5619, nan, %v5628
        %v5630 = vand.u32 2147483647, %v287
        %vm5631 = vcmp.le.f32.partialorder %v5630, 0.7853982
        %vm5632 = vcmp.lt.s32.totalorder %v287, 0
        %v5633 = vand.u32 %v287, 2139095040
        %v5634 = vshrl.u32 %v5633, 23
        %v5635 = vsub.s32 %v5634, 127
        %v5636 = vand.u32 2147483647, %v287
        %v5637 = vand.u32 %v5636, 8388607
        %v5638 = vor.u32 %v5637, 8388608
        %v5639 = vsub.s32 0, %v5638
        %v5640 = vadd.s32 %v5635, 1
        %vm5641 = vcmp.gt.s32.totalorder %v5640, 0
        %v5642 = vsel %vm5641, %v5640, 0
        %v5643 = vshrl.u32 %v5642, 5
        %v5644 = vand.u32 %v5642, 31
        %v5645 = vsub.s32 32, %v5644
        %v5646 = vshrl.u32 683565275, %v5645
        %v5647 = vshll.u32 683565275, %v5644
        %v5648 = vshrl.u32 2475754826, %v5645
        %v5649 = vor.u32 %v5647, %v5648
        %v5650 = vshll.u32 2475754826, %v5644
        %v5651 = vshrl.u32 2131351028, %v5645
        %v5652 = vor.u32 %v5650, %v5651
        %v5653 = vshll.u32 2131351028, %v5644
        %v5654 = vshrl.u32 2102212464, %v5645
        %v5655 = vor.u32 %v5653, %v5654
        %v5656 = vshll.u32 2102212464, %v5644
        %v5657 = vshrl.u32 920167782, %v5645
        %v5658 = vor.u32 %v5656, %v5657
        %v5659 = vshll.u32 920167782, %v5644
        %v5660 = vshrl.u32 1326507024, %v5645
        %v5661 = vor.u32 %v5659, %v5660
        %vm5662 = vcmp.lt.s32.totalorder %v5643, 1
        %vm5663 = vcmp.lt.s32.totalorder %v5643, 2
        %vm5664 = vcmp.lt.s32.totalorder %v5643, 3
        %vm5665 = vcmp.lt.s32.totalorder %v5643, 4
        %v5666 = vsel %vm5662, %v5646, %v5649
        %v5667 = vsel %vm5665, %v5655, 2102212464
        %v5668 = vsel %vm5664, %v5652, %v5667
        %v5669 = vsel %vm5663, %v5666, %v5668
        %v5670 = vsel %vm5662, %v5649, %v5652
        %v5671 = vsel %vm5665, %v5658, 920167782
        %v5672 = vsel %vm5664, %v5655, %v5671
        %v5673 = vsel %vm5663, %v5670, %v5672
        %v5674 = vsel %vm5662, %v5652, %v5655
        %v5675 = vsel %vm5665, %v5661, 1326507024
        %v5676 = vsel %vm5664, %v5658, %v5675
        %v5677 = vsel %vm5663, %v5674, %v5676
        %v5678 = vshll.u32 %v5638, 8
        %v5679 = vmul.u32.u64.compose %v5678, %v5677
        %v5680 = vextract.low.u32 %v5679
        %v5681 = vextract.high.u32 %v5679
        %v5682 = vmul.u32.u64.compose %v5678, %v5673
        %v5683 = vextract.low.u32 %v5682
        %v5684 = vextract.high.u32 %v5682
        %v5685 = vmul.u32 %v5678, %v5669
        %v5686 = vadd.s32 %v5681, %v5683
        %vm5687 = vc.u32 %v5681, %v5683
        %v5688 = vadd.s32 %v5684, 1
        %v5689 = vsel %vm5687, %v5688, %v5684
        %v5690 = vadd.s32 %v5685, %v5689
        %v5691 = vadd.s32 %v5690, 536870912
        %v5692 = vshrl.u32 %v5691, 30
        %v5693 = vshll.u32 %v5692, 30
        %v5694 = vsub.s32 %v5690, %v5693
        %vm5695 = vcmp.lt.s32.totalorder %v5694, 0
        %v5696 = vsub.s32 0, %v5694
        %v5697 = vsel %vm5695, %v5696, %v5694
        %v5698 = vclz %v5697
        %v5699 = vsub.s32 %v5698, 2
        %vm5700 = vcmp.gt.s32.totalorder 0, %v5699
        %v5701 = vsel %vm5700, 0, %v5699
        %v5702 = vsub.s32 32, %v5701
        %v5703 = vshll.u32 %v5694, %v5701
        %v5704 = vshrl.u32 %v5686, %v5702
        %v5705 = vor.u32 %v5703, %v5704
        %v5706 = vsub.s32 4294967266, %v5701
        %v5707 = vadd.s32 %v5706, 127
        %v5708 = vshll.u32 %v5707, 23
        %v5709 = vor.u32 4788187, %v5708
        %v5710 = vand.u32 2147483647, %v5709
        %v5712 = vcvt.s32.f32 %v5705
        %v5713 = vmul.f32 %v5712, %v5710
        %v5714 = vxor.u32 %v5713, 2147483648
        %v5715 = vsel %vm5632, %v5714, %v5713
        %v5716 = vsub.s32 4, %v5692
        %v5717 = vsel %vm5632, %v5716, %v5692
        %v5718 = vsel %vm5631, %v287, %v5715
        %v5719 = vsel %vm5631, 0, %v5717
        %v5720 = vcosq.f32.pop %v5718
        %v5721 = vsinq.f32.pop %v5718
        %vm5722 = vweird.f32 %v287
        %v5723 = vand.u32 %v5719, 3
        %vm5724 = vcmp.lt.s32.totalorder %v5723, 2
        %vm5725 = vcmp.eq.s32.totalorder %v5723, 0
        %v5726 = vxor.u32 %v5721, 2147483648
        %v5727 = vsel %vm5725, %v5720, %v5726
        %vm5728 = vcmp.eq.s32.totalorder %v5723, 2
        %v5729 = vxor.u32 %v5720, 2147483648
        %v5730 = vsel %vm5728, %v5729, %v5721
        %v5731 = vsel %vm5724, %v5727, %v5730
        %v5732 = vsel %vm5722, nan, %v5731
        %v5733 = vmul.f32 %v2996, %v3157
        %v5734 = vmul.f32 %v3000, %v3260
        %v5735 = vmul.f32 %v2996, %v3363
        %v5736 = vmul.f32 %v3000, %v3466
        %v5737 = vmul.f32 %v2996, %v3569
        %v5738 = vmul.f32 %v3000, %v3672
        %v5739 = vmul.f32 %v2996, %v3775
        %v5740 = vmul.f32 %v3000, %v3878
        %v5741 = vmul.f32 %v2996, %v3981
        %v5742 = vmul.f32 %v3000, %v4084
        %v5743 = vmul.f32 %v2996, %v4187
        %v5744 = vmul.f32 %v3000, %v4290
        %v5745 = vmul.f32 %v2996, %v4393
        %v5746 = vmul.f32 %v3000, %v4496
        %v5747 = vmul.f32 %v2996, %v4599
        %v5748 = vmul.f32 %v3000, %v4702
        %v5749 = vmul.f32 %v2996, %v4805
        %v5750 = vmul.f32 %v3000, %v4908
        %v5751 = vmul.f32 %v2996, %v5011
        %v5752 = vmul.f32 %v3000, %v5114
        %v5753 = vmul.f32 %v2996, %v5217
        %v5754 = vmul.f32 %v3000, %v5320
        %v5755 = vmul.f32 %v2996, %v5423
        %v5756 = vmul.f32 %v3000, %v5526
        %v5757 = vmul.f32 %v2996, %v5629
        %v5758 = vmul.f32 %v3000, %v5732
        %5759 = vst [vmem:[%s149 + $0x10] sm:$0xff] %v5733
        %5760 = vst [vmem:[%s149 + $0x18] sm:$0xff] %v5734
        %5761 = vst [vmem:[%s149 + $0x30] sm:$0xff] %v5735
        %5762 = vst [vmem:[%s149 + $0x38] sm:$0xff] %v5736
        %5763 = vst [vmem:[%s149 + $0x50] sm:$0xff] %v5737
        %5764 = vst [vmem:[%s149 + $0x58] sm:$0xff] %v5738
        %5765 = vst [vmem:[%s149 + $0x70] sm:$0xff] %v5739
        %5766 = vst [vmem:[%s149 + $0x78] sm:$0xff] %v5740
        %5767 = vst [vmem:[%s149 + $0x90] sm:$0xff] %v5741
        %5768 = vst [vmem:[%s149 + $0x98] sm:$0xff] %v5742
        %5769 = vst [vmem:[%s149 + $0xb0] sm:$0xff] %v5743
        %5770 = vst [vmem:[%s149 + $0xb8] sm:$0xff] %v5744
        %5771 = vst [vmem:[%s149 + $0xd0] sm:$0xff] %v5745
        %5772 = vst [vmem:[%s149 + $0xd8] sm:$0xff] %v5746
        %5773 = vst [vmem:[%s149 + $0xf0] sm:$0xff] %v5747
        %5774 = vst [vmem:[%s149 + $0xf8] sm:$0xff] %v5748
        %5775 = vst [vmem:[%s149 + $0x110] sm:$0xff] %v5749
        %5776 = vst [vmem:[%s149 + $0x118] sm:$0xff] %v5750
        %5777 = vst [vmem:[%s149 + $0x130] sm:$0xff] %v5751
        %5778 = vst [vmem:[%s149 + $0x138] sm:$0xff] %v5752
        %5779 = vst [vmem:[%s149 + $0x150] sm:$0xff] %v5753
        %5780 = vst [vmem:[%s149 + $0x158] sm:$0xff] %v5754
        %5781 = vst [vmem:[%s149 + $0x170] sm:$0xff] %v5755
        %5782 = vst [vmem:[%s149 + $0x178] sm:$0xff] %v5756
        %5783 = vst [vmem:[%s149 + $0x190] sm:$0xff] %v5757
        %5784 = vst [vmem:[%s149 + $0x198] sm:$0xff] %v5758
        %s5785 = sand.u32 %s71, 1
        %s5786 = scalar_lea.sflag [#allocation3], %s5785
        %s5787 = sand.u32 %s71, 1
        %s5788 = smul.addr %s5787, 416
        %s5789 = scalar_lea.vmem [#allocation2], %s5788
        // Predicated region
        $region29: #{tpu_custom_call.1} parent=27 // pred_check
          %p5790 = pneg %p81
        $region30: #{tpu_custom_call.1} parent=27 // pred_check_branch
          %5792 = sbr.rel (%p5790) target = $region32
        $region31: #{tpu_custom_call.1} parent=27 // pred_region
          %s5793 = smul.u32 13, %s16
          %s5794 = ssub.s32 25, %s5793
          %p5795 = scmp.lt.s32.totalorder %s5794, 13
          %s5796 = scalar_select %p5795, %s5794, 13
          %s5797 = smul.u32 128, %s5796
          %s5798 = smul.u32 %s5797, 4
          %s5800 = ssub.s32 6656, %s5798
          %5801 = vsyncadd %s5786, %s5800
          %p5802 = scmp.ne.s32.totalorder 0, %s5798
          %s5803 = smul.addr %s5793, 4
          %s5804 = smul.addr %s5803, 128
          %s5805 = scalar_lea.hbm %s2, %s5804
          %s5806 = smul.u32 32, %s5796
          %s5807 = sshll.u32 %s5789, 4
          %s5808 = int_to_ptr.vmem [resolvable:$true] %s5807
          %s5809 = sshll.u32 %s5806, 4
          %5813 = dma.vmem_to_hbm [thread:$0]  (%p5802), %s5808, %s5809, %s5805, %s5786, 512, 512, 32
        $region32: #{tpu_custom_call.1} parent=27 // pred_fallthru
          _
      $region28: #{tpu_custom_call.1} parent=5 // pred_fallthru
        _
      %p5814 = scmp.le.s32.totalorder 2, %s11
      // Predicated region
      $region33: #{tpu_custom_call.1} parent=5 // pred_check
        %p5815 = pneg %p5814
      $region34: #{tpu_custom_call.1} parent=5 // pred_check_branch
        %5817 = sbr.rel (%p5815) target = $region36
      $region35: #{tpu_custom_call.1} parent=5 // pred_region
        %s5818 = ssub.s32 %s11, 2
        // Predicated region
        $region37: #{tpu_custom_call.1} parent=35 // pred_check
          %p5819 = pneg %p87
        $region38: #{tpu_custom_call.1} parent=35 // pred_check_branch
          %5821 = sbr.rel (%p5819) target = $region40
        $region39: #{tpu_custom_call.1} parent=35 // pred_region
          %s5822 = sand.u32 %s72, 1
          %s5823 = scalar_lea.sflag [#allocation3], %s5822
          %s5824 = sand.u32 %s72, 1
          %s5825 = smul.addr %s5824, 416
          %s5826 = scalar_lea.vmem [#allocation2], %s5825
          %5827 = dma.done %s5823, 6656
        $region40: #{tpu_custom_call.1} parent=35 // pred_fallthru
          _
      $region36: #{tpu_custom_call.1} parent=5 // pred_fallthru
        _
    $region6: #{tpu_custom_call.1} parent=1 // loop_footer
      %s15 = sadd.s32 1, %s11
    $region7: #{tpu_custom_call.1} parent=1 // loop_footer_branch
      %10 = sbr.rel target = $region3
    $region8: #{tpu_custom_call.1} parent=1 // loop_exit
      _
    %5828 = vsyncpa [#allocation3], 1
    %s5829 = scalar_lea.sflag [#allocation3], 1
    %5830 = vsyncpa %s5829, 1

</llo_original>
